<compile_context>
chip_gen: v6e
topology: v6e:2x2x1
jax: 0.10.0
libtpu: 0.0.40
codegen_flags: <defaults>
</compile_context>

<pallas_src>
import math
from functools import partial

import jax
import jax.numpy as jnp
from jax import lax
from jax.experimental import pallas as pl
from jax.experimental.pallas import tpu as pltpu

# ---------------- synthetic DistilBERT config (small) ----------------
VOCAB = 100
MAX_POS = 16
DIM = 32          # hidden size
HEADS = 2
HEAD_DIM = DIM // HEADS
FFN = 64          # intermediate size
LAYERS = 2
NUM_LABELS = 1    # num_labels=1 in the reference module
EPS = 1e-12       # DistilBERT LayerNorm eps
NEG_INF = -1e9    # additive mask value


# ---------------------------- fused Pallas kernel ----------------------------

def _fused_forward_kernel(
    ids_ref,      # (B*S, 1)          int32  token ids (column vector)
    mask_ref,     # (B, S)            int32  attention mask
    emb_ref,      # (VOCAB+MAX_POS,D) f32    [word_emb ; pos_emb] table
    w_attn_ref,   # (4*L*H, D, Dh)    f32    [Q(scaled) | K | V | O^T] per (layer, head)
    b_q_ref,      # (L*H, Dh)         f32    scaled Q bias per (layer, head)
    w_ffn_ref,    # (2*L+1, D, FFN)   f32    [W1 | W2^T | pre_classifier (zero-padded)]
    vec_f_ref,    # (L+2, FFN)        f32    [b1 | b_pre(pad) | w_cls*w_fc (pad)]
    vec_d_ref,    # (2+6*L, D)        f32    emb LN + per-layer [bo_eff, ln1_g, ln1_b, b2, ln2_g, ln2_b]
    head_b_ref,   # (1,)              f32    SMEM scalar: b_cls*w_fc + b_fc
    out_ref,      # (B, 1)            f32
    ctx_ref,      # (B*S, Dh)         f32    VMEM scratch (per-head context accumulator)
    *, batch, seq, heads, n_layers, vocab):
    """Whole DistilBERT-style forward + fc + sigmoid, resident in VMEM."""
    f32 = jnp.float32
    n_tok = batch * seq
    n_emb = emb_ref.shape[0]

    def vrow(r):                                  # (1, D) row of the D-wide slab
        return vec_d_ref[r:r + 1, :]

    def layer_norm(x, g, b):
        mu = jnp.mean(x, axis=-1, keepdims=True)
        var = jnp.mean((x - mu) * (x - mu), axis=-1, keepdims=True)
        return (x - mu) * lax.rsqrt(var + EPS) * g + b

    # ---- embeddings: word + position gather as ONE one-hot MXU matmul ----
    ids = ids_ref[...]                                               # (BS, 1)
    col = lax.broadcasted_iota(jnp.int32, (n_tok, n_emb), 1)
    row = lax.broadcasted_iota(jnp.int32, (n_tok, n_emb), 0)
    off = jnp.zeros_like(row)
    for b in range(1, batch):            # (t // S) * S without integer division
        off = off + jnp.where(row >= b * seq, seq, 0)
    pos_col = row - off + vocab                                      # column of pos_emb[t % S]
    onehot = jnp.where((col == ids) | (col == pos_col), 1.0, 0.0).astype(f32)
    h = jnp.dot(onehot, emb_ref[...], preferred_element_type=f32)    # (BS, D) = word + pos
    h = layer_norm(h, vrow(0), vrow(1))

    # additive attention-mask bias (0 keep / -1e9 pad), once for all layers
    bias_rows = [jnp.where(mask_ref[b:b + 1, :] > 0, 0.0, NEG_INF).astype(f32)
                 for b in range(batch)]                              # each (1, S)

    lh = n_layers * heads
    for l in range(n_layers):                     # LAYERS=2, statically unrolled
        base = 2 + 6 * l
        attn = None
        for hd in range(heads):
            i = l * heads + hd
            # per-head projections over ALL B*S rows (1/sqrt(Dh) folded into Q;
            # K bias dropped: per-row score constant, softmax-invariant;
            # V bias folded into the out-projection bias at pack time).
            q = jnp.dot(h, w_attn_ref[i], preferred_element_type=f32) + b_q_ref[i:i + 1, :]
            k = jnp.dot(h, w_attn_ref[lh + i], preferred_element_type=f32)
            v = jnp.dot(h, w_attn_ref[2 * lh + i], preferred_element_type=f32)
            for b in range(batch):
                r0 = b * seq
                s = lax.dot_general(q[r0:r0 + seq, :], k[r0:r0 + seq, :],
                                    (((1,), (1,)), ((), ())),
                                    preferred_element_type=f32)       # (S, S)
                s = s + bias_rows[b]
                s = s - jnp.max(s, axis=-1, keepdims=True)
                p = jnp.exp(s)
                p = p * pl.reciprocal(jnp.sum(p, axis=-1, keepdims=True), approx=True)
                # 8-row-aligned store into the context scratch (no concatenate)
                ctx_ref[r0:r0 + seq, :] = jnp.dot(p, v[r0:r0 + seq, :],
                                                  preferred_element_type=f32)
            # per-head output projection on the FULL (B*S, Dh) context: one MXU push
            part = lax.dot_general(ctx_ref[...], w_attn_ref[3 * lh + i],
                                   (((1,), (1,)), ((), ())),
                                   preferred_element_type=f32)        # (BS, D)
            attn = part if attn is None else attn + part
        attn = attn + vrow(base)                                      # bo (+ folded V bias)
        h = layer_norm(attn + h, vrow(base + 1), vrow(base + 2))

        # ---- feed-forward ----
        ff = jnp.dot(h, w_ffn_ref[l], preferred_element_type=f32) + vec_f_ref[l:l + 1, :]
        # TODO(synk): HF DistilBERT uses exact (erf) GELU; tanh approximation used here.
        ff = jax.nn.gelu(ff, approximate=True)
        ff = lax.dot_general(ff, w_ffn_ref[n_layers + l], (((1,), (1,)), ((), ())),
                             preferred_element_type=f32) + vrow(base + 3)
        h = layer_norm(ff + h, vrow(base + 4), vrow(base + 5))

    # ---- batched classification head (pre_classifier -> relu -> classifier) + fc + sigmoid ----
    # gather the B [CLS] rows (aligned 1-row slices) into one (B, D) block
    cls = jnp.concatenate([h[b * seq:b * seq + 1, :] for b in range(batch)], axis=0)
    # pre_classifier is zero-padded to width FFN: padded columns stay 0 through
    # relu and are multiplied by a zero-padded classifier row -> exact result.
    pre = jnp.dot(cls, w_ffn_ref[2 * n_layers], preferred_element_type=f32) \
        + vec_f_ref[n_layers:n_layers + 1, :]                          # (B, FFN)
    pre = jnp.maximum(pre, 0.0)
    w_cls = vec_f_ref[n_layers + 1:n_layers + 2, :]                    # (1, FFN) = w_cls*w_fc (padded)
    # num_labels == 1: classifier (+ folded fc) as a VPU reduction; bias from SMEM scalar
    logit = jnp.sum(pre * w_cls, axis=-1, keepdims=True) + head_b_ref[0]   # (B, 1)
    out_ref[...] = jax.nn.sigmoid(logit)


# ---------------------------- parameters ----------------------------

def init_params(key):
    def nrm(k, shape, scale=0.02):
        return scale * jax.random.normal(k, shape, dtype=jnp.float32)

    keys = jax.random.split(key, 4 + LAYERS)
    params = {
        "word_emb": nrm(keys[0], (VOCAB, DIM)),
        "pos_emb": nrm(keys[1], (MAX_POS, DIM)),
        "emb_ln_g": jnp.ones((DIM,), jnp.float32),
        "emb_ln_b": jnp.zeros((DIM,), jnp.float32),
        "layers": [],
    }
    for li in range(LAYERS):
        lk = jax.random.split(keys[2 + li], 6)
        params["layers"].append({
            "wq": nrm(lk[0], (DIM, DIM)), "bq": jnp.zeros((DIM,), jnp.float32),
            "wk": nrm(lk[1], (DIM, DIM)), "bk": jnp.zeros((DIM,), jnp.float32),
            "wv": nrm(lk[2], (DIM, DIM)), "bv": jnp.zeros((DIM,), jnp.float32),
            "wo": nrm(lk[3], (DIM, DIM)), "bo": jnp.zeros((DIM,), jnp.float32),
            "ln1_g": jnp.ones((DIM,), jnp.float32),
            "ln1_b": jnp.zeros((DIM,), jnp.float32),
            "w1": nrm(lk[4], (DIM, FFN)), "b1": jnp.zeros((FFN,), jnp.float32),
            "w2": nrm(lk[5], (FFN, DIM)), "b2": jnp.zeros((DIM,), jnp.float32),
            "ln2_g": jnp.ones((DIM,), jnp.float32),
            "ln2_b": jnp.zeros((DIM,), jnp.float32),
        })
    hk = jax.random.split(keys[2 + LAYERS], 3)
    params.update({
        "w_pre": nrm(hk[0], (DIM, DIM)),
        "b_pre": jnp.zeros((DIM,), jnp.float32),
        "w_cls": nrm(hk[1], (DIM, NUM_LABELS)),
        "b_cls": jnp.zeros((NUM_LABELS,), jnp.float32),
        # the extra fc = nn.Linear(1, 1) from FineTunedNeuralNet
        "w_fc": nrm(hk[2], (NUM_LABELS, 1), scale=1.0),
        "b_fc": jnp.zeros((1,), jnp.float32),
    })
    return params


def pack_params(params):
    """One-time host-side repack into a handful of stacked operands:
       * per-(layer, head) attention blocks stacked on one leading axis,
         attention scale folded into Q, K bias dropped (softmax-invariant),
         V bias folded through the output projection;
       * FFN weights + pre_classifier stacked (pre_classifier zero-padded to FFN);
       * all D-wide vectors in one slab, all FFN-wide rows in another;
       * fc Linear(1->1) folded into the classifier (weights + scalar bias)."""
    f32 = jnp.float32
    scale = 1.0 / math.sqrt(HEAD_DIM)
    ls = params["layers"]
    L, H, D, Dh = LAYERS, HEADS, DIM, HEAD_DIM

    def qkv_heads(w):   # (D, D) -> per-head (D, Dh); head h owns output cols [h*Dh, (h+1)*Dh)
        return [w[:, h * Dh:(h + 1) * Dh] for h in range(H)]

    def out_heads(w):   # (D, D) -> per-head (D, Dh) = wo[h*Dh:(h+1)*Dh, :].T
        return [w[h * Dh:(h + 1) * Dh, :].T for h in range(H)]

    w_attn = jnp.stack(
        [blk for l in ls for blk in qkv_heads(l["wq"] * scale)]
        + [blk for l in ls for blk in qkv_heads(l["wk"])]
        + [blk for l in ls for blk in qkv_heads(l["wv"])]
        + [blk for l in ls for blk in out_heads(l["wo"])])            # (4*L*H, D, Dh)

    b_q = jnp.stack([(l["bq"] * scale)[h * Dh:(h + 1) * Dh]
                     for l in ls for h in range(H)])                  # (L*H, Dh)

    w_fc = params["w_fc"][0, 0]
    cpad = jnp.zeros((D, FFN - D), f32)
    vpad = jnp.zeros((FFN - D,), f32)
    w_ffn = jnp.stack([l["w1"] for l in ls] + [l["w2"].T for l in ls]
                      + [jnp.concatenate([params["w_pre"], cpad], axis=1)])   # (2L+1, D, FFN)
    vec_f = jnp.stack([l["b1"] for l in ls]
                      + [jnp.concatenate([params["b_pre"], vpad]),
                         jnp.concatenate([params["w_cls"][:, 0] * w_fc, vpad])])  # (L+2, FFN)

    rows = [params["emb_ln_g"], params["emb_ln_b"]]
    for l in ls:
        # V bias folded through the out-projection (softmax rows sum to 1)
        bo_eff = l["bo"] + l["bv"] @ l["wo"]
        rows += [bo_eff, l["ln1_g"], l["ln1_b"], l["b2"], l["ln2_g"], l["ln2_b"]]
    vec_d = jnp.stack(rows)                                           # (2+6L, D)

    head_b = (params["b_cls"] * w_fc + params["b_fc"]).reshape(1).astype(f32)   # fc folded in

    return {
        "emb_table": jnp.concatenate([params["word_emb"], params["pos_emb"]], axis=0),
        "w_attn": w_attn, "b_q": b_q, "w_ffn": w_ffn,
        "vec_f": vec_f, "vec_d": vec_d, "head_b": head_b,
    }


# ---------------------------- forward ----------------------------

@jax.jit
def finetuned_forward(packed, input_ids, attention_mask, labels):
    del labels  # only used for the (discarded) loss in the reference module
    B, S = input_ids.shape

    kernel = partial(_fused_forward_kernel, batch=B, seq=S, heads=HEADS,
                     n_layers=LAYERS, vocab=VOCAB)

    vmem = pl.BlockSpec(memory_space=pltpu.MemorySpace.VMEM)
    smem = pl.BlockSpec(memory_space=pltpu.MemorySpace.SMEM)

    # token-id column for the in-kernel one-hot embedding gather (tiny int reshape;
    # the gather, position add and mask-bias computation all run inside the kernel)
    ids_col = input_ids.reshape(B * S, 1).astype(jnp.int32)

    # single fused pallas_call: 9 operands, activations + weights (<0.5 MB padded)
    # stay resident in VMEM; no grid needed at this size.
    return pl.pallas_call(
        kernel,
        out_shape=jax.ShapeDtypeStruct((B, NUM_LABELS), jnp.float32),
        in_specs=[vmem] * 8 + [smem],
        out_specs=vmem,
        scratch_shapes=[pltpu.VMEM((B * S, HEAD_DIM), jnp.float32)],
    )(ids_col, attention_mask.astype(jnp.int32),
      packed["emb_table"], packed["w_attn"], packed["b_q"],
      packed["w_ffn"], packed["vec_f"], packed["vec_d"], packed["head_b"])


# ---------------------------- main ----------------------------

if __name__ == "__main__":
    key = jax.random.PRNGKey(0)
    k_param, k_ids, k_lbl = jax.random.split(key, 3)

    B, S = 2, 8
    params = init_params(k_param)
    packed = pack_params(params)     # one-time weight repack (outside the jitted forward)

    input_ids = jax.random.randint(k_ids, (B, S), 0, VOCAB, dtype=jnp.int32)
    attention_mask = jnp.array(
        [[1, 1, 1, 1, 1, 1, 1, 1],
         [1, 1, 1, 1, 1, 0, 0, 0]], dtype=jnp.int32)           # second seq padded
    labels = jax.random.normal(k_lbl, (B, 1), dtype=jnp.float32)

    pred = finetuned_forward(packed, input_ids, attention_mask, labels)
    pred = jax.block_until_ready(pred)

    assert pred.shape == (B, 1)
    assert bool(jnp.all(jnp.isfinite(pred)))
    assert bool(jnp.all((pred > 0.0) & (pred < 1.0)))
    print("KERNEL_OK")
</pallas_src>

<mosaic_0001>
module attributes {stable_mosaic.version = 11 : i64} {
  func.func @_fused_forward_kernel(%arg0: memref<16x1xi32, #tpu.memory_space<vmem>>, %arg1: memref<2x8xi32, #tpu.memory_space<vmem>>, %arg2: memref<116x32xf32, #tpu.memory_space<vmem>>, %arg3: memref<16x32x16xf32, #tpu.memory_space<vmem>>, %arg4: memref<4x16xf32, #tpu.memory_space<vmem>>, %arg5: memref<5x32x64xf32, #tpu.memory_space<vmem>>, %arg6: memref<4x64xf32, #tpu.memory_space<vmem>>, %arg7: memref<14x32xf32, #tpu.memory_space<vmem>>, %arg8: memref<1xf32, #tpu.memory_space<smem>>, %arg9: memref<2x1xf32, #tpu.memory_space<vmem>>, %arg10: memref<16x16xf32, #tpu.memory_space<vmem>>) attributes {dimension_semantics = [], scalar_prefetch = 0 : i64, scratch_operands = 1 : i64, tpu.core_type = #tpu.core_type<tc>} {
    %c0 = arith.constant 0 : index
    %c0_0 = arith.constant 0 : index
    %0 = vector.load %arg0[%c0, %c0_0] : memref<16x1xi32, #tpu.memory_space<vmem>>, vector<16x1xi32>
    %1 = tpu.iota {dimensions = array<i32: 1>} : vector<16x116xi32>
    %2 = tpu.iota {dimensions = array<i32: 0>} : vector<16x116xi32>
    %c0_i32 = arith.constant 0 : i32
    %3 = vector.broadcast %c0_i32 : i32 to vector<16x116xi32>
    %c8_i32 = arith.constant 8 : i32
    %4 = vector.broadcast %c8_i32 : i32 to vector<16x116xi32>
    %5 = arith.cmpi sge, %2, %4 : vector<16x116xi32>
    %c8_i32_1 = arith.constant 8 : i32
    %c0_i32_2 = arith.constant 0 : i32
    %6 = vector.broadcast %c8_i32_1 : i32 to vector<16x116xi32>
    %7 = vector.broadcast %c0_i32_2 : i32 to vector<16x116xi32>
    %8 = arith.select %5, %6, %7 : vector<16x116xi1>, vector<16x116xi32>
    %9 = arith.addi %3, %8 : vector<16x116xi32>
    %10 = arith.subi %2, %9 : vector<16x116xi32>
    %c100_i32 = arith.constant 100 : i32
    %11 = vector.broadcast %c100_i32 : i32 to vector<16x116xi32>
    %12 = arith.addi %10, %11 : vector<16x116xi32>
    %13 = vector.broadcast %0 : vector<16x1xi32> to vector<16x116xi32>
    %14 = arith.cmpi eq, %1, %13 : vector<16x116xi32>
    %15 = arith.cmpi eq, %1, %12 : vector<16x116xi32>
    %16 = arith.ori %14, %15 : vector<16x116xi1>
    %cst = arith.constant 1.000000e+00 : f32
    %cst_3 = arith.constant 0.000000e+00 : f32
    %17 = vector.broadcast %cst : f32 to vector<16x116xf32>
    %18 = vector.broadcast %cst_3 : f32 to vector<16x116xf32>
    %19 = arith.select %16, %17, %18 : vector<16x116xi1>, vector<16x116xf32>
    %c0_4 = arith.constant 0 : index
    %c0_5 = arith.constant 0 : index
    %20 = vector.load %arg2[%c0_4, %c0_5] : memref<116x32xf32, #tpu.memory_space<vmem>>, vector<116x32xf32>
    %cst_6 = arith.constant dense<0.000000e+00> : vector<16x32xf32>
    %21 = tpu.matmul %19, %20, %cst_6 {dimension_numbers = #tpu.dot_dimension_numbers<[1], [0], [0], [1], [0, 0, 1, 1], [], []>} : vector<16x116xf32>, vector<116x32xf32>, vector<16x32xf32> -> vector<16x32xf32>
    %c0_7 = arith.constant 0 : index
    %c0_8 = arith.constant 0 : index
    %22 = vector.load %arg7[%c0_7, %c0_8] : memref<14x32xf32, #tpu.memory_space<vmem>>, vector<1x32xf32>
    %c1 = arith.constant 1 : index
    %c0_9 = arith.constant 0 : index
    %23 = vector.load %arg7[%c1, %c0_9] : memref<14x32xf32, #tpu.memory_space<vmem>>, vector<1x32xf32>
    %cst_10 = arith.constant dense<0.000000e+00> : vector<16xf32>
    %24 = vector.multi_reduction <add>, %21, %cst_10 [1] : vector<16x32xf32> to vector<16xf32>
    %25 = vector.shape_cast %24 : vector<16xf32> to vector<16x1xf32>
    %cst_11 = arith.constant 3.200000e+01 : f32
    %26 = vector.broadcast %cst_11 : f32 to vector<16x1xf32>
    %27 = arith.divf %25, %26 : vector<16x1xf32>
    %28 = vector.broadcast %27 : vector<16x1xf32> to vector<16x32xf32>
    %29 = arith.subf %21, %28 : vector<16x32xf32>
    %30 = vector.broadcast %27 : vector<16x1xf32> to vector<16x32xf32>
    %31 = arith.subf %21, %30 : vector<16x32xf32>
    %32 = arith.mulf %29, %31 : vector<16x32xf32>
    %cst_12 = arith.constant dense<0.000000e+00> : vector<16xf32>
    %33 = vector.multi_reduction <add>, %32, %cst_12 [1] : vector<16x32xf32> to vector<16xf32>
    %34 = vector.shape_cast %33 : vector<16xf32> to vector<16x1xf32>
    %cst_13 = arith.constant 3.200000e+01 : f32
    %35 = vector.broadcast %cst_13 : f32 to vector<16x1xf32>
    %36 = arith.divf %34, %35 : vector<16x1xf32>
    %37 = vector.broadcast %27 : vector<16x1xf32> to vector<16x32xf32>
    %38 = arith.subf %21, %37 : vector<16x32xf32>
    %cst_14 = arith.constant 9.99999996E-13 : f32
    %39 = vector.broadcast %cst_14 : f32 to vector<16x1xf32>
    %40 = arith.addf %36, %39 : vector<16x1xf32>
    %41 = math.rsqrt %40 : vector<16x1xf32>
    %42 = vector.broadcast %41 : vector<16x1xf32> to vector<16x32xf32>
    %43 = arith.mulf %38, %42 : vector<16x32xf32>
    %44 = vector.broadcast %22 : vector<1x32xf32> to vector<16x32xf32>
    %45 = arith.mulf %43, %44 : vector<16x32xf32>
    %46 = vector.broadcast %23 : vector<1x32xf32> to vector<16x32xf32>
    %47 = arith.addf %45, %46 : vector<16x32xf32>
    %c0_15 = arith.constant 0 : index
    %c0_16 = arith.constant 0 : index
    %48 = vector.load %arg1[%c0_15, %c0_16] : memref<2x8xi32, #tpu.memory_space<vmem>>, vector<1x8xi32>
    %c0_i32_17 = arith.constant 0 : i32
    %49 = vector.broadcast %c0_i32_17 : i32 to vector<1x8xi32>
    %50 = arith.cmpi sgt, %48, %49 : vector<1x8xi32>
    %cst_18 = arith.constant 0.000000e+00 : f32
    %cst_19 = arith.constant -1.000000e+09 : f32
    %51 = vector.broadcast %cst_18 : f32 to vector<1x8xf32>
    %52 = vector.broadcast %cst_19 : f32 to vector<1x8xf32>
    %53 = arith.select %50, %51, %52 : vector<1x8xi1>, vector<1x8xf32>
    %c1_20 = arith.constant 1 : index
    %c0_21 = arith.constant 0 : index
    %54 = vector.load %arg1[%c1_20, %c0_21] : memref<2x8xi32, #tpu.memory_space<vmem>>, vector<1x8xi32>
    %c0_i32_22 = arith.constant 0 : i32
    %55 = vector.broadcast %c0_i32_22 : i32 to vector<1x8xi32>
    %56 = arith.cmpi sgt, %54, %55 : vector<1x8xi32>
    %cst_23 = arith.constant 0.000000e+00 : f32
    %cst_24 = arith.constant -1.000000e+09 : f32
    %57 = vector.broadcast %cst_23 : f32 to vector<1x8xf32>
    %58 = vector.broadcast %cst_24 : f32 to vector<1x8xf32>
    %59 = arith.select %56, %57, %58 : vector<1x8xi1>, vector<1x8xf32>
    %c0_25 = arith.constant 0 : index
    %c0_26 = arith.constant 0 : index
    %c0_27 = arith.constant 0 : index
    %60 = vector.load %arg3[%c0_25, %c0_26, %c0_27] : memref<16x32x16xf32, #tpu.memory_space<vmem>>, vector<1x32x16xf32>
    %61 = vector.shape_cast %60 : vector<1x32x16xf32> to vector<32x16xf32>
    %cst_28 = arith.constant dense<0.000000e+00> : vector<16x16xf32>
    %62 = tpu.matmul %47, %61, %cst_28 {dimension_numbers = #tpu.dot_dimension_numbers<[1], [0], [0], [1], [0, 0, 1, 1], [], []>} : vector<16x32xf32>, vector<32x16xf32>, vector<16x16xf32> -> vector<16x16xf32>
    %c0_29 = arith.constant 0 : index
    %c0_30 = arith.constant 0 : index
    %63 = vector.load %arg4[%c0_29, %c0_30] : memref<4x16xf32, #tpu.memory_space<vmem>>, vector<1x16xf32>
    %64 = vector.broadcast %63 : vector<1x16xf32> to vector<16x16xf32>
    %65 = arith.addf %62, %64 : vector<16x16xf32>
    %c4 = arith.constant 4 : index
    %c0_31 = arith.constant 0 : index
    %c0_32 = arith.constant 0 : index
    %66 = vector.load %arg3[%c4, %c0_31, %c0_32] : memref<16x32x16xf32, #tpu.memory_space<vmem>>, vector<1x32x16xf32>
    %67 = vector.shape_cast %66 : vector<1x32x16xf32> to vector<32x16xf32>
    %cst_33 = arith.constant dense<0.000000e+00> : vector<16x16xf32>
    %68 = tpu.matmul %47, %67, %cst_33 {dimension_numbers = #tpu.dot_dimension_numbers<[1], [0], [0], [1], [0, 0, 1, 1], [], []>} : vector<16x32xf32>, vector<32x16xf32>, vector<16x16xf32> -> vector<16x16xf32>
    %c8 = arith.constant 8 : index
    %c0_34 = arith.constant 0 : index
    %c0_35 = arith.constant 0 : index
    %69 = vector.load %arg3[%c8, %c0_34, %c0_35] : memref<16x32x16xf32, #tpu.memory_space<vmem>>, vector<1x32x16xf32>
    %70 = vector.shape_cast %69 : vector<1x32x16xf32> to vector<32x16xf32>
    %cst_36 = arith.constant dense<0.000000e+00> : vector<16x16xf32>
    %71 = tpu.matmul %47, %70, %cst_36 {dimension_numbers = #tpu.dot_dimension_numbers<[1], [0], [0], [1], [0, 0, 1, 1], [], []>} : vector<16x32xf32>, vector<32x16xf32>, vector<16x16xf32> -> vector<16x16xf32>
    %72 = vector.extract_strided_slice %65 {offsets = [0, 0], sizes = [8, 16], strides = [1, 1]} : vector<16x16xf32> to vector<8x16xf32>
    %73 = vector.extract_strided_slice %68 {offsets = [0, 0], sizes = [8, 16], strides = [1, 1]} : vector<16x16xf32> to vector<8x16xf32>
    %cst_37 = arith.constant dense<0.000000e+00> : vector<8x8xf32>
    %74 = tpu.matmul %72, %73, %cst_37 {dimension_numbers = #tpu.dot_dimension_numbers<[1], [1], [0], [0], [0, 0, 1, 0], [], []>} : vector<8x16xf32>, vector<8x16xf32>, vector<8x8xf32> -> vector<8x8xf32>
    %75 = vector.broadcast %53 : vector<1x8xf32> to vector<8x8xf32>
    %76 = arith.addf %74, %75 : vector<8x8xf32>
    %cst_38 = arith.constant dense<0xFF800000> : vector<8xf32>
    %77 = vector.multi_reduction <maximumf>, %76, %cst_38 [1] : vector<8x8xf32> to vector<8xf32>
    %78 = vector.shape_cast %77 : vector<8xf32> to vector<8x1xf32>
    %79 = vector.broadcast %78 : vector<8x1xf32> to vector<8x8xf32>
    %80 = arith.subf %76, %79 : vector<8x8xf32>
    %81 = math.exp %80 : vector<8x8xf32>
    %cst_39 = arith.constant dense<0.000000e+00> : vector<8xf32>
    %82 = vector.multi_reduction <add>, %81, %cst_39 [1] : vector<8x8xf32> to vector<8xf32>
    %83 = vector.shape_cast %82 : vector<8xf32> to vector<8x1xf32>
    %84 = tpu.reciprocal %83 {approx = true} : vector<8x1xf32> -> vector<8x1xf32>
    %85 = vector.broadcast %84 : vector<8x1xf32> to vector<8x8xf32>
    %86 = arith.mulf %81, %85 : vector<8x8xf32>
    %87 = vector.extract_strided_slice %71 {offsets = [0, 0], sizes = [8, 16], strides = [1, 1]} : vector<16x16xf32> to vector<8x16xf32>
    %cst_40 = arith.constant dense<0.000000e+00> : vector<8x16xf32>
    %88 = tpu.matmul %86, %87, %cst_40 {dimension_numbers = #tpu.dot_dimension_numbers<[1], [0], [0], [1], [0, 0, 1, 1], [], []>} : vector<8x8xf32>, vector<8x16xf32>, vector<8x16xf32> -> vector<8x16xf32>
    %c0_41 = arith.constant 0 : index
    %c0_42 = arith.constant 0 : index
    %89 = vector.load %arg10[%c0_41, %c0_42] : memref<16x16xf32, #tpu.memory_space<vmem>>, vector<8x16xf32>
    tpu.vector_store %arg10[%c0_41, %c0_42], %88 {strides = array<i32>} : memref<16x16xf32, #tpu.memory_space<vmem>>, vector<8x16xf32>,
    %90 = vector.extract_strided_slice %65 {offsets = [8, 0], sizes = [8, 16], strides = [1, 1]} : vector<16x16xf32> to vector<8x16xf32>
    %91 = vector.extract_strided_slice %68 {offsets = [8, 0], sizes = [8, 16], strides = [1, 1]} : vector<16x16xf32> to vector<8x16xf32>
    %cst_43 = arith.constant dense<0.000000e+00> : vector<8x8xf32>
    %92 = tpu.matmul %90, %91, %cst_43 {dimension_numbers = #tpu.dot_dimension_numbers<[1], [1], [0], [0], [0, 0, 1, 0], [], []>} : vector<8x16xf32>, vector<8x16xf32>, vector<8x8xf32> -> vector<8x8xf32>
    %93 = vector.broadcast %59 : vector<1x8xf32> to vector<8x8xf32>
    %94 = arith.addf %92, %93 : vector<8x8xf32>
    %cst_44 = arith.constant dense<0xFF800000> : vector<8xf32>
    %95 = vector.multi_reduction <maximumf>, %94, %cst_44 [1] : vector<8x8xf32> to vector<8xf32>
    %96 = vector.shape_cast %95 : vector<8xf32> to vector<8x1xf32>
    %97 = vector.broadcast %96 : vector<8x1xf32> to vector<8x8xf32>
    %98 = arith.subf %94, %97 : vector<8x8xf32>
    %99 = math.exp %98 : vector<8x8xf32>
    %cst_45 = arith.constant dense<0.000000e+00> : vector<8xf32>
    %100 = vector.multi_reduction <add>, %99, %cst_45 [1] : vector<8x8xf32> to vector<8xf32>
    %101 = vector.shape_cast %100 : vector<8xf32> to vector<8x1xf32>
    %102 = tpu.reciprocal %101 {approx = true} : vector<8x1xf32> -> vector<8x1xf32>
    %103 = vector.broadcast %102 : vector<8x1xf32> to vector<8x8xf32>
    %104 = arith.mulf %99, %103 : vector<8x8xf32>
    %105 = vector.extract_strided_slice %71 {offsets = [8, 0], sizes = [8, 16], strides = [1, 1]} : vector<16x16xf32> to vector<8x16xf32>
    %cst_46 = arith.constant dense<0.000000e+00> : vector<8x16xf32>
    %106 = tpu.matmul %104, %105, %cst_46 {dimension_numbers = #tpu.dot_dimension_numbers<[1], [0], [0], [1], [0, 0, 1, 1], [], []>} : vector<8x8xf32>, vector<8x16xf32>, vector<8x16xf32> -> vector<8x16xf32>
    %c8_47 = arith.constant 8 : index
    %c0_48 = arith.constant 0 : index
    %107 = vector.load %arg10[%c8_47, %c0_48] : memref<16x16xf32, #tpu.memory_space<vmem>>, vector<8x16xf32>
    tpu.vector_store %arg10[%c8_47, %c0_48], %106 {strides = array<i32>} : memref<16x16xf32, #tpu.memory_space<vmem>>, vector<8x16xf32>,
    %c0_49 = arith.constant 0 : index
    %c0_50 = arith.constant 0 : index
    %108 = vector.load %arg10[%c0_49, %c0_50] : memref<16x16xf32, #tpu.memory_space<vmem>>, vector<16x16xf32>
    %c12 = arith.constant 12 : index
    %c0_51 = arith.constant 0 : index
    %c0_52 = arith.constant 0 : index
    %109 = vector.load %arg3[%c12, %c0_51, %c0_52] : memref<16x32x16xf32, #tpu.memory_space<vmem>>, vector<1x32x16xf32>
    %110 = vector.shape_cast %109 : vector<1x32x16xf32> to vector<32x16xf32>
    %cst_53 = arith.constant dense<0.000000e+00> : vector<16x32xf32>
    %111 = tpu.matmul %108, %110, %cst_53 {dimension_numbers = #tpu.dot_dimension_numbers<[1], [1], [0], [0], [0, 0, 1, 0], [], []>} : vector<16x16xf32>, vector<32x16xf32>, vector<16x32xf32> -> vector<16x32xf32>
    %c1_54 = arith.constant 1 : index
    %c0_55 = arith.constant 0 : index
    %c0_56 = arith.constant 0 : index
    %112 = vector.load %arg3[%c1_54, %c0_55, %c0_56] : memref<16x32x16xf32, #tpu.memory_space<vmem>>, vector<1x32x16xf32>
    %113 = vector.shape_cast %112 : vector<1x32x16xf32> to vector<32x16xf32>
    %cst_57 = arith.constant dense<0.000000e+00> : vector<16x16xf32>
    %114 = tpu.matmul %47, %113, %cst_57 {dimension_numbers = #tpu.dot_dimension_numbers<[1], [0], [0], [1], [0, 0, 1, 1], [], []>} : vector<16x32xf32>, vector<32x16xf32>, vector<16x16xf32> -> vector<16x16xf32>
    %c1_58 = arith.constant 1 : index
    %c0_59 = arith.constant 0 : index
    %115 = vector.load %arg4[%c1_58, %c0_59] : memref<4x16xf32, #tpu.memory_space<vmem>>, vector<1x16xf32>
    %116 = vector.broadcast %115 : vector<1x16xf32> to vector<16x16xf32>
    %117 = arith.addf %114, %116 : vector<16x16xf32>
    %c5 = arith.constant 5 : index
    %c0_60 = arith.constant 0 : index
    %c0_61 = arith.constant 0 : index
    %118 = vector.load %arg3[%c5, %c0_60, %c0_61] : memref<16x32x16xf32, #tpu.memory_space<vmem>>, vector<1x32x16xf32>
    %119 = vector.shape_cast %118 : vector<1x32x16xf32> to vector<32x16xf32>
    %cst_62 = arith.constant dense<0.000000e+00> : vector<16x16xf32>
    %120 = tpu.matmul %47, %119, %cst_62 {dimension_numbers = #tpu.dot_dimension_numbers<[1], [0], [0], [1], [0, 0, 1, 1], [], []>} : vector<16x32xf32>, vector<32x16xf32>, vector<16x16xf32> -> vector<16x16xf32>
    %c9 = arith.constant 9 : index
    %c0_63 = arith.constant 0 : index
    %c0_64 = arith.constant 0 : index
    %121 = vector.load %arg3[%c9, %c0_63, %c0_64] : memref<16x32x16xf32, #tpu.memory_space<vmem>>, vector<1x32x16xf32>
    %122 = vector.shape_cast %121 : vector<1x32x16xf32> to vector<32x16xf32>
    %cst_65 = arith.constant dense<0.000000e+00> : vector<16x16xf32>
    %123 = tpu.matmul %47, %122, %cst_65 {dimension_numbers = #tpu.dot_dimension_numbers<[1], [0], [0], [1], [0, 0, 1, 1], [], []>} : vector<16x32xf32>, vector<32x16xf32>, vector<16x16xf32> -> vector<16x16xf32>
    %124 = vector.extract_strided_slice %117 {offsets = [0, 0], sizes = [8, 16], strides = [1, 1]} : vector<16x16xf32> to vector<8x16xf32>
    %125 = vector.extract_strided_slice %120 {offsets = [0, 0], sizes = [8, 16], strides = [1, 1]} : vector<16x16xf32> to vector<8x16xf32>
    %cst_66 = arith.constant dense<0.000000e+00> : vector<8x8xf32>
    %126 = tpu.matmul %124, %125, %cst_66 {dimension_numbers = #tpu.dot_dimension_numbers<[1], [1], [0], [0], [0, 0, 1, 0], [], []>} : vector<8x16xf32>, vector<8x16xf32>, vector<8x8xf32> -> vector<8x8xf32>
    %127 = vector.broadcast %53 : vector<1x8xf32> to vector<8x8xf32>
    %128 = arith.addf %126, %127 : vector<8x8xf32>
    %cst_67 = arith.constant dense<0xFF800000> : vector<8xf32>
    %129 = vector.multi_reduction <maximumf>, %128, %cst_67 [1] : vector<8x8xf32> to vector<8xf32>
    %130 = vector.shape_cast %129 : vector<8xf32> to vector<8x1xf32>
    %131 = vector.broadcast %130 : vector<8x1xf32> to vector<8x8xf32>
    %132 = arith.subf %128, %131 : vector<8x8xf32>
    %133 = math.exp %132 : vector<8x8xf32>
    %cst_68 = arith.constant dense<0.000000e+00> : vector<8xf32>
    %134 = vector.multi_reduction <add>, %133, %cst_68 [1] : vector<8x8xf32> to vector<8xf32>
    %135 = vector.shape_cast %134 : vector<8xf32> to vector<8x1xf32>
    %136 = tpu.reciprocal %135 {approx = true} : vector<8x1xf32> -> vector<8x1xf32>
    %137 = vector.broadcast %136 : vector<8x1xf32> to vector<8x8xf32>
    %138 = arith.mulf %133, %137 : vector<8x8xf32>
    %139 = vector.extract_strided_slice %123 {offsets = [0, 0], sizes = [8, 16], strides = [1, 1]} : vector<16x16xf32> to vector<8x16xf32>
    %cst_69 = arith.constant dense<0.000000e+00> : vector<8x16xf32>
    %140 = tpu.matmul %138, %139, %cst_69 {dimension_numbers = #tpu.dot_dimension_numbers<[1], [0], [0], [1], [0, 0, 1, 1], [], []>} : vector<8x8xf32>, vector<8x16xf32>, vector<8x16xf32> -> vector<8x16xf32>
    %c0_70 = arith.constant 0 : index
    %c0_71 = arith.constant 0 : index
    %141 = vector.load %arg10[%c0_70, %c0_71] : memref<16x16xf32, #tpu.memory_space<vmem>>, vector<8x16xf32>
    tpu.vector_store %arg10[%c0_70, %c0_71], %140 {strides = array<i32>} : memref<16x16xf32, #tpu.memory_space<vmem>>, vector<8x16xf32>,
    %142 = vector.extract_strided_slice %117 {offsets = [8, 0], sizes = [8, 16], strides = [1, 1]} : vector<16x16xf32> to vector<8x16xf32>
    %143 = vector.extract_strided_slice %120 {offsets = [8, 0], sizes = [8, 16], strides = [1, 1]} : vector<16x16xf32> to vector<8x16xf32>
    %cst_72 = arith.constant dense<0.000000e+00> : vector<8x8xf32>
    %144 = tpu.matmul %142, %143, %cst_72 {dimension_numbers = #tpu.dot_dimension_numbers<[1], [1], [0], [0], [0, 0, 1, 0], [], []>} : vector<8x16xf32>, vector<8x16xf32>, vector<8x8xf32> -> vector<8x8xf32>
    %145 = vector.broadcast %59 : vector<1x8xf32> to vector<8x8xf32>
    %146 = arith.addf %144, %145 : vector<8x8xf32>
    %cst_73 = arith.constant dense<0xFF800000> : vector<8xf32>
    %147 = vector.multi_reduction <maximumf>, %146, %cst_73 [1] : vector<8x8xf32> to vector<8xf32>
    %148 = vector.shape_cast %147 : vector<8xf32> to vector<8x1xf32>
    %149 = vector.broadcast %148 : vector<8x1xf32> to vector<8x8xf32>
    %150 = arith.subf %146, %149 : vector<8x8xf32>
    %151 = math.exp %150 : vector<8x8xf32>
    %cst_74 = arith.constant dense<0.000000e+00> : vector<8xf32>
    %152 = vector.multi_reduction <add>, %151, %cst_74 [1] : vector<8x8xf32> to vector<8xf32>
    %153 = vector.shape_cast %152 : vector<8xf32> to vector<8x1xf32>
    %154 = tpu.reciprocal %153 {approx = true} : vector<8x1xf32> -> vector<8x1xf32>
    %155 = vector.broadcast %154 : vector<8x1xf32> to vector<8x8xf32>
    %156 = arith.mulf %151, %155 : vector<8x8xf32>
    %157 = vector.extract_strided_slice %123 {offsets = [8, 0], sizes = [8, 16], strides = [1, 1]} : vector<16x16xf32> to vector<8x16xf32>
    %cst_75 = arith.constant dense<0.000000e+00> : vector<8x16xf32>
    %158 = tpu.matmul %156, %157, %cst_75 {dimension_numbers = #tpu.dot_dimension_numbers<[1], [0], [0], [1], [0, 0, 1, 1], [], []>} : vector<8x8xf32>, vector<8x16xf32>, vector<8x16xf32> -> vector<8x16xf32>
    %c8_76 = arith.constant 8 : index
    %c0_77 = arith.constant 0 : index
    %159 = vector.load %arg10[%c8_76, %c0_77] : memref<16x16xf32, #tpu.memory_space<vmem>>, vector<8x16xf32>
    tpu.vector_store %arg10[%c8_76, %c0_77], %158 {strides = array<i32>} : memref<16x16xf32, #tpu.memory_space<vmem>>, vector<8x16xf32>,
    %c0_78 = arith.constant 0 : index
    %c0_79 = arith.constant 0 : index
    %160 = vector.load %arg10[%c0_78, %c0_79] : memref<16x16xf32, #tpu.memory_space<vmem>>, vector<16x16xf32>
    %c13 = arith.constant 13 : index
    %c0_80 = arith.constant 0 : index
    %c0_81 = arith.constant 0 : index
    %161 = vector.load %arg3[%c13, %c0_80, %c0_81] : memref<16x32x16xf32, #tpu.memory_space<vmem>>, vector<1x32x16xf32>
    %162 = vector.shape_cast %161 : vector<1x32x16xf32> to vector<32x16xf32>
    %cst_82 = arith.constant dense<0.000000e+00> : vector<16x32xf32>
    %163 = tpu.matmul %160, %162, %cst_82 {dimension_numbers = #tpu.dot_dimension_numbers<[1], [1], [0], [0], [0, 0, 1, 0], [], []>} : vector<16x16xf32>, vector<32x16xf32>, vector<16x32xf32> -> vector<16x32xf32>
    %164 = arith.addf %111, %163 : vector<16x32xf32>
    %c2 = arith.constant 2 : index
    %c0_83 = arith.constant 0 : index
    %165 = vector.load %arg7[%c2, %c0_83] : memref<14x32xf32, #tpu.memory_space<vmem>>, vector<1x32xf32>
    %166 = vector.broadcast %165 : vector<1x32xf32> to vector<16x32xf32>
    %167 = arith.addf %164, %166 : vector<16x32xf32>
    %168 = arith.addf %167, %47 : vector<16x32xf32>
    %c3 = arith.constant 3 : index
    %c0_84 = arith.constant 0 : index
    %169 = vector.load %arg7[%c3, %c0_84] : memref<14x32xf32, #tpu.memory_space<vmem>>, vector<1x32xf32>
    %c4_85 = arith.constant 4 : index
    %c0_86 = arith.constant 0 : index
    %170 = vector.load %arg7[%c4_85, %c0_86] : memref<14x32xf32, #tpu.memory_space<vmem>>, vector<1x32xf32>
    %cst_87 = arith.constant dense<0.000000e+00> : vector<16xf32>
    %171 = vector.multi_reduction <add>, %168, %cst_87 [1] : vector<16x32xf32> to vector<16xf32>
    %172 = vector.shape_cast %171 : vector<16xf32> to vector<16x1xf32>
    %cst_88 = arith.constant 3.200000e+01 : f32
    %173 = vector.broadcast %cst_88 : f32 to vector<16x1xf32>
    %174 = arith.divf %172, %173 : vector<16x1xf32>
    %175 = vector.broadcast %174 : vector<16x1xf32> to vector<16x32xf32>
    %176 = arith.subf %168, %175 : vector<16x32xf32>
    %177 = vector.broadcast %174 : vector<16x1xf32> to vector<16x32xf32>
    %178 = arith.subf %168, %177 : vector<16x32xf32>
    %179 = arith.mulf %176, %178 : vector<16x32xf32>
    %cst_89 = arith.constant dense<0.000000e+00> : vector<16xf32>
    %180 = vector.multi_reduction <add>, %179, %cst_89 [1] : vector<16x32xf32> to vector<16xf32>
    %181 = vector.shape_cast %180 : vector<16xf32> to vector<16x1xf32>
    %cst_90 = arith.constant 3.200000e+01 : f32
    %182 = vector.broadcast %cst_90 : f32 to vector<16x1xf32>
    %183 = arith.divf %181, %182 : vector<16x1xf32>
    %184 = vector.broadcast %174 : vector<16x1xf32> to vector<16x32xf32>
    %185 = arith.subf %168, %184 : vector<16x32xf32>
    %cst_91 = arith.constant 9.99999996E-13 : f32
    %186 = vector.broadcast %cst_91 : f32 to vector<16x1xf32>
    %187 = arith.addf %183, %186 : vector<16x1xf32>
    %188 = math.rsqrt %187 : vector<16x1xf32>
    %189 = vector.broadcast %188 : vector<16x1xf32> to vector<16x32xf32>
    %190 = arith.mulf %185, %189 : vector<16x32xf32>
    %191 = vector.broadcast %169 : vector<1x32xf32> to vector<16x32xf32>
    %192 = arith.mulf %190, %191 : vector<16x32xf32>
    %193 = vector.broadcast %170 : vector<1x32xf32> to vector<16x32xf32>
    %194 = arith.addf %192, %193 : vector<16x32xf32>
    %c0_92 = arith.constant 0 : index
    %c0_93 = arith.constant 0 : index
    %c0_94 = arith.constant 0 : index
    %195 = vector.load %arg5[%c0_92, %c0_93, %c0_94] : memref<5x32x64xf32, #tpu.memory_space<vmem>>, vector<1x32x64xf32>
    %196 = vector.shape_cast %195 : vector<1x32x64xf32> to vector<32x64xf32>
    %cst_95 = arith.constant dense<0.000000e+00> : vector<16x64xf32>
    %197 = tpu.matmul %194, %196, %cst_95 {dimension_numbers = #tpu.dot_dimension_numbers<[1], [0], [0], [1], [0, 0, 1, 1], [], []>} : vector<16x32xf32>, vector<32x64xf32>, vector<16x64xf32> -> vector<16x64xf32>
    %c0_96 = arith.constant 0 : index
    %c0_97 = arith.constant 0 : index
    %198 = vector.load %arg6[%c0_96, %c0_97] : memref<4x64xf32, #tpu.memory_space<vmem>>, vector<1x64xf32>
    %199 = vector.broadcast %198 : vector<1x64xf32> to vector<16x64xf32>
    %200 = arith.addf %197, %199 : vector<16x64xf32>
    %201 = arith.mulf %200, %200 : vector<16x64xf32>
    %202 = arith.mulf %200, %201 : vector<16x64xf32>
    %cst_98 = arith.constant 4.471500e-02 : f32
    %203 = vector.broadcast %cst_98 : f32 to vector<16x64xf32>
    %204 = arith.mulf %203, %202 : vector<16x64xf32>
    %205 = arith.addf %200, %204 : vector<16x64xf32>
    %cst_99 = arith.constant 0.797884583 : f32
    %206 = vector.broadcast %cst_99 : f32 to vector<16x64xf32>
    %207 = arith.mulf %206, %205 : vector<16x64xf32>
    %208 = math.tanh %207 : vector<16x64xf32>
    %cst_100 = arith.constant 1.000000e+00 : f32
    %209 = vector.broadcast %cst_100 : f32 to vector<16x64xf32>
    %210 = arith.addf %209, %208 : vector<16x64xf32>
    %cst_101 = arith.constant 5.000000e-01 : f32
    %211 = vector.broadcast %cst_101 : f32 to vector<16x64xf32>
    %212 = arith.mulf %211, %210 : vector<16x64xf32>
    %213 = arith.mulf %200, %212 : vector<16x64xf32>
    %c2_102 = arith.constant 2 : index
    %c0_103 = arith.constant 0 : index
    %c0_104 = arith.constant 0 : index
    %214 = vector.load %arg5[%c2_102, %c0_103, %c0_104] : memref<5x32x64xf32, #tpu.memory_space<vmem>>, vector<1x32x64xf32>
    %215 = vector.shape_cast %214 : vector<1x32x64xf32> to vector<32x64xf32>
    %cst_105 = arith.constant dense<0.000000e+00> : vector<16x32xf32>
    %216 = tpu.matmul %213, %215, %cst_105 {dimension_numbers = #tpu.dot_dimension_numbers<[1], [1], [0], [0], [0, 0, 1, 0], [], []>} : vector<16x64xf32>, vector<32x64xf32>, vector<16x32xf32> -> vector<16x32xf32>
    %c5_106 = arith.constant 5 : index
    %c0_107 = arith.constant 0 : index
    %217 = vector.load %arg7[%c5_106, %c0_107] : memref<14x32xf32, #tpu.memory_space<vmem>>, vector<1x32xf32>
    %218 = vector.broadcast %217 : vector<1x32xf32> to vector<16x32xf32>
    %219 = arith.addf %216, %218 : vector<16x32xf32>
    %220 = arith.addf %219, %194 : vector<16x32xf32>
    %c6 = arith.constant 6 : index
    %c0_108 = arith.constant 0 : index
    %221 = vector.load %arg7[%c6, %c0_108] : memref<14x32xf32, #tpu.memory_space<vmem>>, vector<1x32xf32>
    %c7 = arith.constant 7 : index
    %c0_109 = arith.constant 0 : index
    %222 = vector.load %arg7[%c7, %c0_109] : memref<14x32xf32, #tpu.memory_space<vmem>>, vector<1x32xf32>
    %cst_110 = arith.constant dense<0.000000e+00> : vector<16xf32>
    %223 = vector.multi_reduction <add>, %220, %cst_110 [1] : vector<16x32xf32> to vector<16xf32>
    %224 = vector.shape_cast %223 : vector<16xf32> to vector<16x1xf32>
    %cst_111 = arith.constant 3.200000e+01 : f32
    %225 = vector.broadcast %cst_111 : f32 to vector<16x1xf32>
    %226 = arith.divf %224, %225 : vector<16x1xf32>
    %227 = vector.broadcast %226 : vector<16x1xf32> to vector<16x32xf32>
    %228 = arith.subf %220, %227 : vector<16x32xf32>
    %229 = vector.broadcast %226 : vector<16x1xf32> to vector<16x32xf32>
    %230 = arith.subf %220, %229 : vector<16x32xf32>
    %231 = arith.mulf %228, %230 : vector<16x32xf32>
    %cst_112 = arith.constant dense<0.000000e+00> : vector<16xf32>
    %232 = vector.multi_reduction <add>, %231, %cst_112 [1] : vector<16x32xf32> to vector<16xf32>
    %233 = vector.shape_cast %232 : vector<16xf32> to vector<16x1xf32>
    %cst_113 = arith.constant 3.200000e+01 : f32
    %234 = vector.broadcast %cst_113 : f32 to vector<16x1xf32>
    %235 = arith.divf %233, %234 : vector<16x1xf32>
    %236 = vector.broadcast %226 : vector<16x1xf32> to vector<16x32xf32>
    %237 = arith.subf %220, %236 : vector<16x32xf32>
    %cst_114 = arith.constant 9.99999996E-13 : f32
    %238 = vector.broadcast %cst_114 : f32 to vector<16x1xf32>
    %239 = arith.addf %235, %238 : vector<16x1xf32>
    %240 = math.rsqrt %239 : vector<16x1xf32>
    %241 = vector.broadcast %240 : vector<16x1xf32> to vector<16x32xf32>
    %242 = arith.mulf %237, %241 : vector<16x32xf32>
    %243 = vector.broadcast %221 : vector<1x32xf32> to vector<16x32xf32>
    %244 = arith.mulf %242, %243 : vector<16x32xf32>
    %245 = vector.broadcast %222 : vector<1x32xf32> to vector<16x32xf32>
    %246 = arith.addf %244, %245 : vector<16x32xf32>
    %c2_115 = arith.constant 2 : index
    %c0_116 = arith.constant 0 : index
    %c0_117 = arith.constant 0 : index
    %247 = vector.load %arg3[%c2_115, %c0_116, %c0_117] : memref<16x32x16xf32, #tpu.memory_space<vmem>>, vector<1x32x16xf32>
    %248 = vector.shape_cast %247 : vector<1x32x16xf32> to vector<32x16xf32>
    %cst_118 = arith.constant dense<0.000000e+00> : vector<16x16xf32>
    %249 = tpu.matmul %246, %248, %cst_118 {dimension_numbers = #tpu.dot_dimension_numbers<[1], [0], [0], [1], [0, 0, 1, 1], [], []>} : vector<16x32xf32>, vector<32x16xf32>, vector<16x16xf32> -> vector<16x16xf32>
    %c2_119 = arith.constant 2 : index
    %c0_120 = arith.constant 0 : index
    %250 = vector.load %arg4[%c2_119, %c0_120] : memref<4x16xf32, #tpu.memory_space<vmem>>, vector<1x16xf32>
    %251 = vector.broadcast %250 : vector<1x16xf32> to vector<16x16xf32>
    %252 = arith.addf %249, %251 : vector<16x16xf32>
    %c6_121 = arith.constant 6 : index
    %c0_122 = arith.constant 0 : index
    %c0_123 = arith.constant 0 : index
    %253 = vector.load %arg3[%c6_121, %c0_122, %c0_123] : memref<16x32x16xf32, #tpu.memory_space<vmem>>, vector<1x32x16xf32>
    %254 = vector.shape_cast %253 : vector<1x32x16xf32> to vector<32x16xf32>
    %cst_124 = arith.constant dense<0.000000e+00> : vector<16x16xf32>
    %255 = tpu.matmul %246, %254, %cst_124 {dimension_numbers = #tpu.dot_dimension_numbers<[1], [0], [0], [1], [0, 0, 1, 1], [], []>} : vector<16x32xf32>, vector<32x16xf32>, vector<16x16xf32> -> vector<16x16xf32>
    %c10 = arith.constant 10 : index
    %c0_125 = arith.constant 0 : index
    %c0_126 = arith.constant 0 : index
    %256 = vector.load %arg3[%c10, %c0_125, %c0_126] : memref<16x32x16xf32, #tpu.memory_space<vmem>>, vector<1x32x16xf32>
    %257 = vector.shape_cast %256 : vector<1x32x16xf32> to vector<32x16xf32>
    %cst_127 = arith.constant dense<0.000000e+00> : vector<16x16xf32>
    %258 = tpu.matmul %246, %257, %cst_127 {dimension_numbers = #tpu.dot_dimension_numbers<[1], [0], [0], [1], [0, 0, 1, 1], [], []>} : vector<16x32xf32>, vector<32x16xf32>, vector<16x16xf32> -> vector<16x16xf32>
    %259 = vector.extract_strided_slice %252 {offsets = [0, 0], sizes = [8, 16], strides = [1, 1]} : vector<16x16xf32> to vector<8x16xf32>
    %260 = vector.extract_strided_slice %255 {offsets = [0, 0], sizes = [8, 16], strides = [1, 1]} : vector<16x16xf32> to vector<8x16xf32>
    %cst_128 = arith.constant dense<0.000000e+00> : vector<8x8xf32>
    %261 = tpu.matmul %259, %260, %cst_128 {dimension_numbers = #tpu.dot_dimension_numbers<[1], [1], [0], [0], [0, 0, 1, 0], [], []>} : vector<8x16xf32>, vector<8x16xf32>, vector<8x8xf32> -> vector<8x8xf32>
    %262 = vector.broadcast %53 : vector<1x8xf32> to vector<8x8xf32>
    %263 = arith.addf %261, %262 : vector<8x8xf32>
    %cst_129 = arith.constant dense<0xFF800000> : vector<8xf32>
    %264 = vector.multi_reduction <maximumf>, %263, %cst_129 [1] : vector<8x8xf32> to vector<8xf32>
    %265 = vector.shape_cast %264 : vector<8xf32> to vector<8x1xf32>
    %266 = vector.broadcast %265 : vector<8x1xf32> to vector<8x8xf32>
    %267 = arith.subf %263, %266 : vector<8x8xf32>
    %268 = math.exp %267 : vector<8x8xf32>
    %cst_130 = arith.constant dense<0.000000e+00> : vector<8xf32>
    %269 = vector.multi_reduction <add>, %268, %cst_130 [1] : vector<8x8xf32> to vector<8xf32>
    %270 = vector.shape_cast %269 : vector<8xf32> to vector<8x1xf32>
    %271 = tpu.reciprocal %270 {approx = true} : vector<8x1xf32> -> vector<8x1xf32>
    %272 = vector.broadcast %271 : vector<8x1xf32> to vector<8x8xf32>
    %273 = arith.mulf %268, %272 : vector<8x8xf32>
    %274 = vector.extract_strided_slice %258 {offsets = [0, 0], sizes = [8, 16], strides = [1, 1]} : vector<16x16xf32> to vector<8x16xf32>
    %cst_131 = arith.constant dense<0.000000e+00> : vector<8x16xf32>
    %275 = tpu.matmul %273, %274, %cst_131 {dimension_numbers = #tpu.dot_dimension_numbers<[1], [0], [0], [1], [0, 0, 1, 1], [], []>} : vector<8x8xf32>, vector<8x16xf32>, vector<8x16xf32> -> vector<8x16xf32>
    %c0_132 = arith.constant 0 : index
    %c0_133 = arith.constant 0 : index
    %276 = vector.load %arg10[%c0_132, %c0_133] : memref<16x16xf32, #tpu.memory_space<vmem>>, vector<8x16xf32>
    tpu.vector_store %arg10[%c0_132, %c0_133], %275 {strides = array<i32>} : memref<16x16xf32, #tpu.memory_space<vmem>>, vector<8x16xf32>,
    %277 = vector.extract_strided_slice %252 {offsets = [8, 0], sizes = [8, 16], strides = [1, 1]} : vector<16x16xf32> to vector<8x16xf32>
    %278 = vector.extract_strided_slice %255 {offsets = [8, 0], sizes = [8, 16], strides = [1, 1]} : vector<16x16xf32> to vector<8x16xf32>
    %cst_134 = arith.constant dense<0.000000e+00> : vector<8x8xf32>
    %279 = tpu.matmul %277, %278, %cst_134 {dimension_numbers = #tpu.dot_dimension_numbers<[1], [1], [0], [0], [0, 0, 1, 0], [], []>} : vector<8x16xf32>, vector<8x16xf32>, vector<8x8xf32> -> vector<8x8xf32>
    %280 = vector.broadcast %59 : vector<1x8xf32> to vector<8x8xf32>
    %281 = arith.addf %279, %280 : vector<8x8xf32>
    %cst_135 = arith.constant dense<0xFF800000> : vector<8xf32>
    %282 = vector.multi_reduction <maximumf>, %281, %cst_135 [1] : vector<8x8xf32> to vector<8xf32>
    %283 = vector.shape_cast %282 : vector<8xf32> to vector<8x1xf32>
    %284 = vector.broadcast %283 : vector<8x1xf32> to vector<8x8xf32>
    %285 = arith.subf %281, %284 : vector<8x8xf32>
    %286 = math.exp %285 : vector<8x8xf32>
    %cst_136 = arith.constant dense<0.000000e+00> : vector<8xf32>
    %287 = vector.multi_reduction <add>, %286, %cst_136 [1] : vector<8x8xf32> to vector<8xf32>
    %288 = vector.shape_cast %287 : vector<8xf32> to vector<8x1xf32>
    %289 = tpu.reciprocal %288 {approx = true} : vector<8x1xf32> -> vector<8x1xf32>
    %290 = vector.broadcast %289 : vector<8x1xf32> to vector<8x8xf32>
    %291 = arith.mulf %286, %290 : vector<8x8xf32>
    %292 = vector.extract_strided_slice %258 {offsets = [8, 0], sizes = [8, 16], strides = [1, 1]} : vector<16x16xf32> to vector<8x16xf32>
    %cst_137 = arith.constant dense<0.000000e+00> : vector<8x16xf32>
    %293 = tpu.matmul %291, %292, %cst_137 {dimension_numbers = #tpu.dot_dimension_numbers<[1], [0], [0], [1], [0, 0, 1, 1], [], []>} : vector<8x8xf32>, vector<8x16xf32>, vector<8x16xf32> -> vector<8x16xf32>
    %c8_138 = arith.constant 8 : index
    %c0_139 = arith.constant 0 : index
    %294 = vector.load %arg10[%c8_138, %c0_139] : memref<16x16xf32, #tpu.memory_space<vmem>>, vector<8x16xf32>
    tpu.vector_store %arg10[%c8_138, %c0_139], %293 {strides = array<i32>} : memref<16x16xf32, #tpu.memory_space<vmem>>, vector<8x16xf32>,
    %c0_140 = arith.constant 0 : index
    %c0_141 = arith.constant 0 : index
    %295 = vector.load %arg10[%c0_140, %c0_141] : memref<16x16xf32, #tpu.memory_space<vmem>>, vector<16x16xf32>
    %c14 = arith.constant 14 : index
    %c0_142 = arith.constant 0 : index
    %c0_143 = arith.constant 0 : index
    %296 = vector.load %arg3[%c14, %c0_142, %c0_143] : memref<16x32x16xf32, #tpu.memory_space<vmem>>, vector<1x32x16xf32>
    %297 = vector.shape_cast %296 : vector<1x32x16xf32> to vector<32x16xf32>
    %cst_144 = arith.constant dense<0.000000e+00> : vector<16x32xf32>
    %298 = tpu.matmul %295, %297, %cst_144 {dimension_numbers = #tpu.dot_dimension_numbers<[1], [1], [0], [0], [0, 0, 1, 0], [], []>} : vector<16x16xf32>, vector<32x16xf32>, vector<16x32xf32> -> vector<16x32xf32>
    %c3_145 = arith.constant 3 : index
    %c0_146 = arith.constant 0 : index
    %c0_147 = arith.constant 0 : index
    %299 = vector.load %arg3[%c3_145, %c0_146, %c0_147] : memref<16x32x16xf32, #tpu.memory_space<vmem>>, vector<1x32x16xf32>
    %300 = vector.shape_cast %299 : vector<1x32x16xf32> to vector<32x16xf32>
    %cst_148 = arith.constant dense<0.000000e+00> : vector<16x16xf32>
    %301 = tpu.matmul %246, %300, %cst_148 {dimension_numbers = #tpu.dot_dimension_numbers<[1], [0], [0], [1], [0, 0, 1, 1], [], []>} : vector<16x32xf32>, vector<32x16xf32>, vector<16x16xf32> -> vector<16x16xf32>
    %c3_149 = arith.constant 3 : index
    %c0_150 = arith.constant 0 : index
    %302 = vector.load %arg4[%c3_149, %c0_150] : memref<4x16xf32, #tpu.memory_space<vmem>>, vector<1x16xf32>
    %303 = vector.broadcast %302 : vector<1x16xf32> to vector<16x16xf32>
    %304 = arith.addf %301, %303 : vector<16x16xf32>
    %c7_151 = arith.constant 7 : index
    %c0_152 = arith.constant 0 : index
    %c0_153 = arith.constant 0 : index
    %305 = vector.load %arg3[%c7_151, %c0_152, %c0_153] : memref<16x32x16xf32, #tpu.memory_space<vmem>>, vector<1x32x16xf32>
    %306 = vector.shape_cast %305 : vector<1x32x16xf32> to vector<32x16xf32>
    %cst_154 = arith.constant dense<0.000000e+00> : vector<16x16xf32>
    %307 = tpu.matmul %246, %306, %cst_154 {dimension_numbers = #tpu.dot_dimension_numbers<[1], [0], [0], [1], [0, 0, 1, 1], [], []>} : vector<16x32xf32>, vector<32x16xf32>, vector<16x16xf32> -> vector<16x16xf32>
    %c11 = arith.constant 11 : index
    %c0_155 = arith.constant 0 : index
    %c0_156 = arith.constant 0 : index
    %308 = vector.load %arg3[%c11, %c0_155, %c0_156] : memref<16x32x16xf32, #tpu.memory_space<vmem>>, vector<1x32x16xf32>
    %309 = vector.shape_cast %308 : vector<1x32x16xf32> to vector<32x16xf32>
    %cst_157 = arith.constant dense<0.000000e+00> : vector<16x16xf32>
    %310 = tpu.matmul %246, %309, %cst_157 {dimension_numbers = #tpu.dot_dimension_numbers<[1], [0], [0], [1], [0, 0, 1, 1], [], []>} : vector<16x32xf32>, vector<32x16xf32>, vector<16x16xf32> -> vector<16x16xf32>
    %311 = vector.extract_strided_slice %304 {offsets = [0, 0], sizes = [8, 16], strides = [1, 1]} : vector<16x16xf32> to vector<8x16xf32>
    %312 = vector.extract_strided_slice %307 {offsets = [0, 0], sizes = [8, 16], strides = [1, 1]} : vector<16x16xf32> to vector<8x16xf32>
    %cst_158 = arith.constant dense<0.000000e+00> : vector<8x8xf32>
    %313 = tpu.matmul %311, %312, %cst_158 {dimension_numbers = #tpu.dot_dimension_numbers<[1], [1], [0], [0], [0, 0, 1, 0], [], []>} : vector<8x16xf32>, vector<8x16xf32>, vector<8x8xf32> -> vector<8x8xf32>
    %314 = vector.broadcast %53 : vector<1x8xf32> to vector<8x8xf32>
    %315 = arith.addf %313, %314 : vector<8x8xf32>
    %cst_159 = arith.constant dense<0xFF800000> : vector<8xf32>
    %316 = vector.multi_reduction <maximumf>, %315, %cst_159 [1] : vector<8x8xf32> to vector<8xf32>
    %317 = vector.shape_cast %316 : vector<8xf32> to vector<8x1xf32>
    %318 = vector.broadcast %317 : vector<8x1xf32> to vector<8x8xf32>
    %319 = arith.subf %315, %318 : vector<8x8xf32>
    %320 = math.exp %319 : vector<8x8xf32>
    %cst_160 = arith.constant dense<0.000000e+00> : vector<8xf32>
    %321 = vector.multi_reduction <add>, %320, %cst_160 [1] : vector<8x8xf32> to vector<8xf32>
    %322 = vector.shape_cast %321 : vector<8xf32> to vector<8x1xf32>
    %323 = tpu.reciprocal %322 {approx = true} : vector<8x1xf32> -> vector<8x1xf32>
    %324 = vector.broadcast %323 : vector<8x1xf32> to vector<8x8xf32>
    %325 = arith.mulf %320, %324 : vector<8x8xf32>
    %326 = vector.extract_strided_slice %310 {offsets = [0, 0], sizes = [8, 16], strides = [1, 1]} : vector<16x16xf32> to vector<8x16xf32>
    %cst_161 = arith.constant dense<0.000000e+00> : vector<8x16xf32>
    %327 = tpu.matmul %325, %326, %cst_161 {dimension_numbers = #tpu.dot_dimension_numbers<[1], [0], [0], [1], [0, 0, 1, 1], [], []>} : vector<8x8xf32>, vector<8x16xf32>, vector<8x16xf32> -> vector<8x16xf32>
    %c0_162 = arith.constant 0 : index
    %c0_163 = arith.constant 0 : index
    %328 = vector.load %arg10[%c0_162, %c0_163] : memref<16x16xf32, #tpu.memory_space<vmem>>, vector<8x16xf32>
    tpu.vector_store %arg10[%c0_162, %c0_163], %327 {strides = array<i32>} : memref<16x16xf32, #tpu.memory_space<vmem>>, vector<8x16xf32>,
    %329 = vector.extract_strided_slice %304 {offsets = [8, 0], sizes = [8, 16], strides = [1, 1]} : vector<16x16xf32> to vector<8x16xf32>
    %330 = vector.extract_strided_slice %307 {offsets = [8, 0], sizes = [8, 16], strides = [1, 1]} : vector<16x16xf32> to vector<8x16xf32>
    %cst_164 = arith.constant dense<0.000000e+00> : vector<8x8xf32>
    %331 = tpu.matmul %329, %330, %cst_164 {dimension_numbers = #tpu.dot_dimension_numbers<[1], [1], [0], [0], [0, 0, 1, 0], [], []>} : vector<8x16xf32>, vector<8x16xf32>, vector<8x8xf32> -> vector<8x8xf32>
    %332 = vector.broadcast %59 : vector<1x8xf32> to vector<8x8xf32>
    %333 = arith.addf %331, %332 : vector<8x8xf32>
    %cst_165 = arith.constant dense<0xFF800000> : vector<8xf32>
    %334 = vector.multi_reduction <maximumf>, %333, %cst_165 [1] : vector<8x8xf32> to vector<8xf32>
    %335 = vector.shape_cast %334 : vector<8xf32> to vector<8x1xf32>
    %336 = vector.broadcast %335 : vector<8x1xf32> to vector<8x8xf32>
    %337 = arith.subf %333, %336 : vector<8x8xf32>
    %338 = math.exp %337 : vector<8x8xf32>
    %cst_166 = arith.constant dense<0.000000e+00> : vector<8xf32>
    %339 = vector.multi_reduction <add>, %338, %cst_166 [1] : vector<8x8xf32> to vector<8xf32>
    %340 = vector.shape_cast %339 : vector<8xf32> to vector<8x1xf32>
    %341 = tpu.reciprocal %340 {approx = true} : vector<8x1xf32> -> vector<8x1xf32>
    %342 = vector.broadcast %341 : vector<8x1xf32> to vector<8x8xf32>
    %343 = arith.mulf %338, %342 : vector<8x8xf32>
    %344 = vector.extract_strided_slice %310 {offsets = [8, 0], sizes = [8, 16], strides = [1, 1]} : vector<16x16xf32> to vector<8x16xf32>
    %cst_167 = arith.constant dense<0.000000e+00> : vector<8x16xf32>
    %345 = tpu.matmul %343, %344, %cst_167 {dimension_numbers = #tpu.dot_dimension_numbers<[1], [0], [0], [1], [0, 0, 1, 1], [], []>} : vector<8x8xf32>, vector<8x16xf32>, vector<8x16xf32> -> vector<8x16xf32>
    %c8_168 = arith.constant 8 : index
    %c0_169 = arith.constant 0 : index
    %346 = vector.load %arg10[%c8_168, %c0_169] : memref<16x16xf32, #tpu.memory_space<vmem>>, vector<8x16xf32>
    tpu.vector_store %arg10[%c8_168, %c0_169], %345 {strides = array<i32>} : memref<16x16xf32, #tpu.memory_space<vmem>>, vector<8x16xf32>,
    %c0_170 = arith.constant 0 : index
    %c0_171 = arith.constant 0 : index
    %347 = vector.load %arg10[%c0_170, %c0_171] : memref<16x16xf32, #tpu.memory_space<vmem>>, vector<16x16xf32>
    %c15 = arith.constant 15 : index
    %c0_172 = arith.constant 0 : index
    %c0_173 = arith.constant 0 : index
    %348 = vector.load %arg3[%c15, %c0_172, %c0_173] : memref<16x32x16xf32, #tpu.memory_space<vmem>>, vector<1x32x16xf32>
    %349 = vector.shape_cast %348 : vector<1x32x16xf32> to vector<32x16xf32>
    %cst_174 = arith.constant dense<0.000000e+00> : vector<16x32xf32>
    %350 = tpu.matmul %347, %349, %cst_174 {dimension_numbers = #tpu.dot_dimension_numbers<[1], [1], [0], [0], [0, 0, 1, 0], [], []>} : vector<16x16xf32>, vector<32x16xf32>, vector<16x32xf32> -> vector<16x32xf32>
    %351 = arith.addf %298, %350 : vector<16x32xf32>
    %c8_175 = arith.constant 8 : index
    %c0_176 = arith.constant 0 : index
    %352 = vector.load %arg7[%c8_175, %c0_176] : memref<14x32xf32, #tpu.memory_space<vmem>>, vector<1x32xf32>
    %353 = vector.broadcast %352 : vector<1x32xf32> to vector<16x32xf32>
    %354 = arith.addf %351, %353 : vector<16x32xf32>
    %355 = arith.addf %354, %246 : vector<16x32xf32>
    %c9_177 = arith.constant 9 : index
    %c0_178 = arith.constant 0 : index
    %356 = vector.load %arg7[%c9_177, %c0_178] : memref<14x32xf32, #tpu.memory_space<vmem>>, vector<1x32xf32>
    %c10_179 = arith.constant 10 : index
    %c0_180 = arith.constant 0 : index
    %357 = vector.load %arg7[%c10_179, %c0_180] : memref<14x32xf32, #tpu.memory_space<vmem>>, vector<1x32xf32>
    %cst_181 = arith.constant dense<0.000000e+00> : vector<16xf32>
    %358 = vector.multi_reduction <add>, %355, %cst_181 [1] : vector<16x32xf32> to vector<16xf32>
    %359 = vector.shape_cast %358 : vector<16xf32> to vector<16x1xf32>
    %cst_182 = arith.constant 3.200000e+01 : f32
    %360 = vector.broadcast %cst_182 : f32 to vector<16x1xf32>
    %361 = arith.divf %359, %360 : vector<16x1xf32>
    %362 = vector.broadcast %361 : vector<16x1xf32> to vector<16x32xf32>
    %363 = arith.subf %355, %362 : vector<16x32xf32>
    %364 = vector.broadcast %361 : vector<16x1xf32> to vector<16x32xf32>
    %365 = arith.subf %355, %364 : vector<16x32xf32>
    %366 = arith.mulf %363, %365 : vector<16x32xf32>
    %cst_183 = arith.constant dense<0.000000e+00> : vector<16xf32>
    %367 = vector.multi_reduction <add>, %366, %cst_183 [1] : vector<16x32xf32> to vector<16xf32>
    %368 = vector.shape_cast %367 : vector<16xf32> to vector<16x1xf32>
    %cst_184 = arith.constant 3.200000e+01 : f32
    %369 = vector.broadcast %cst_184 : f32 to vector<16x1xf32>
    %370 = arith.divf %368, %369 : vector<16x1xf32>
    %371 = vector.broadcast %361 : vector<16x1xf32> to vector<16x32xf32>
    %372 = arith.subf %355, %371 : vector<16x32xf32>
    %cst_185 = arith.constant 9.99999996E-13 : f32
    %373 = vector.broadcast %cst_185 : f32 to vector<16x1xf32>
    %374 = arith.addf %370, %373 : vector<16x1xf32>
    %375 = math.rsqrt %374 : vector<16x1xf32>
    %376 = vector.broadcast %375 : vector<16x1xf32> to vector<16x32xf32>
    %377 = arith.mulf %372, %376 : vector<16x32xf32>
    %378 = vector.broadcast %356 : vector<1x32xf32> to vector<16x32xf32>
    %379 = arith.mulf %377, %378 : vector<16x32xf32>
    %380 = vector.broadcast %357 : vector<1x32xf32> to vector<16x32xf32>
    %381 = arith.addf %379, %380 : vector<16x32xf32>
    %c1_186 = arith.constant 1 : index
    %c0_187 = arith.constant 0 : index
    %c0_188 = arith.constant 0 : index
    %382 = vector.load %arg5[%c1_186, %c0_187, %c0_188] : memref<5x32x64xf32, #tpu.memory_space<vmem>>, vector<1x32x64xf32>
    %383 = vector.shape_cast %382 : vector<1x32x64xf32> to vector<32x64xf32>
    %cst_189 = arith.constant dense<0.000000e+00> : vector<16x64xf32>
    %384 = tpu.matmul %381, %383, %cst_189 {dimension_numbers = #tpu.dot_dimension_numbers<[1], [0], [0], [1], [0, 0, 1, 1], [], []>} : vector<16x32xf32>, vector<32x64xf32>, vector<16x64xf32> -> vector<16x64xf32>
    %c1_190 = arith.constant 1 : index
    %c0_191 = arith.constant 0 : index
    %385 = vector.load %arg6[%c1_190, %c0_191] : memref<4x64xf32, #tpu.memory_space<vmem>>, vector<1x64xf32>
    %386 = vector.broadcast %385 : vector<1x64xf32> to vector<16x64xf32>
    %387 = arith.addf %384, %386 : vector<16x64xf32>
    %388 = arith.mulf %387, %387 : vector<16x64xf32>
    %389 = arith.mulf %387, %388 : vector<16x64xf32>
    %cst_192 = arith.constant 4.471500e-02 : f32
    %390 = vector.broadcast %cst_192 : f32 to vector<16x64xf32>
    %391 = arith.mulf %390, %389 : vector<16x64xf32>
    %392 = arith.addf %387, %391 : vector<16x64xf32>
    %cst_193 = arith.constant 0.797884583 : f32
    %393 = vector.broadcast %cst_193 : f32 to vector<16x64xf32>
    %394 = arith.mulf %393, %392 : vector<16x64xf32>
    %395 = math.tanh %394 : vector<16x64xf32>
    %cst_194 = arith.constant 1.000000e+00 : f32
    %396 = vector.broadcast %cst_194 : f32 to vector<16x64xf32>
    %397 = arith.addf %396, %395 : vector<16x64xf32>
    %cst_195 = arith.constant 5.000000e-01 : f32
    %398 = vector.broadcast %cst_195 : f32 to vector<16x64xf32>
    %399 = arith.mulf %398, %397 : vector<16x64xf32>
    %400 = arith.mulf %387, %399 : vector<16x64xf32>
    %c3_196 = arith.constant 3 : index
    %c0_197 = arith.constant 0 : index
    %c0_198 = arith.constant 0 : index
    %401 = vector.load %arg5[%c3_196, %c0_197, %c0_198] : memref<5x32x64xf32, #tpu.memory_space<vmem>>, vector<1x32x64xf32>
    %402 = vector.shape_cast %401 : vector<1x32x64xf32> to vector<32x64xf32>
    %cst_199 = arith.constant dense<0.000000e+00> : vector<16x32xf32>
    %403 = tpu.matmul %400, %402, %cst_199 {dimension_numbers = #tpu.dot_dimension_numbers<[1], [1], [0], [0], [0, 0, 1, 0], [], []>} : vector<16x64xf32>, vector<32x64xf32>, vector<16x32xf32> -> vector<16x32xf32>
    %c11_200 = arith.constant 11 : index
    %c0_201 = arith.constant 0 : index
    %404 = vector.load %arg7[%c11_200, %c0_201] : memref<14x32xf32, #tpu.memory_space<vmem>>, vector<1x32xf32>
    %405 = vector.broadcast %404 : vector<1x32xf32> to vector<16x32xf32>
    %406 = arith.addf %403, %405 : vector<16x32xf32>
    %407 = arith.addf %406, %381 : vector<16x32xf32>
    %c12_202 = arith.constant 12 : index
    %c0_203 = arith.constant 0 : index
    %408 = vector.load %arg7[%c12_202, %c0_203] : memref<14x32xf32, #tpu.memory_space<vmem>>, vector<1x32xf32>
    %c13_204 = arith.constant 13 : index
    %c0_205 = arith.constant 0 : index
    %409 = vector.load %arg7[%c13_204, %c0_205] : memref<14x32xf32, #tpu.memory_space<vmem>>, vector<1x32xf32>
    %cst_206 = arith.constant dense<0.000000e+00> : vector<16xf32>
    %410 = vector.multi_reduction <add>, %407, %cst_206 [1] : vector<16x32xf32> to vector<16xf32>
    %411 = vector.shape_cast %410 : vector<16xf32> to vector<16x1xf32>
    %cst_207 = arith.constant 3.200000e+01 : f32
    %412 = vector.broadcast %cst_207 : f32 to vector<16x1xf32>
    %413 = arith.divf %411, %412 : vector<16x1xf32>
    %414 = vector.broadcast %413 : vector<16x1xf32> to vector<16x32xf32>
    %415 = arith.subf %407, %414 : vector<16x32xf32>
    %416 = vector.broadcast %413 : vector<16x1xf32> to vector<16x32xf32>
    %417 = arith.subf %407, %416 : vector<16x32xf32>
    %418 = arith.mulf %415, %417 : vector<16x32xf32>
    %cst_208 = arith.constant dense<0.000000e+00> : vector<16xf32>
    %419 = vector.multi_reduction <add>, %418, %cst_208 [1] : vector<16x32xf32> to vector<16xf32>
    %420 = vector.shape_cast %419 : vector<16xf32> to vector<16x1xf32>
    %cst_209 = arith.constant 3.200000e+01 : f32
    %421 = vector.broadcast %cst_209 : f32 to vector<16x1xf32>
    %422 = arith.divf %420, %421 : vector<16x1xf32>
    %423 = vector.broadcast %413 : vector<16x1xf32> to vector<16x32xf32>
    %424 = arith.subf %407, %423 : vector<16x32xf32>
    %cst_210 = arith.constant 9.99999996E-13 : f32
    %425 = vector.broadcast %cst_210 : f32 to vector<16x1xf32>
    %426 = arith.addf %422, %425 : vector<16x1xf32>
    %427 = math.rsqrt %426 : vector<16x1xf32>
    %428 = vector.broadcast %427 : vector<16x1xf32> to vector<16x32xf32>
    %429 = arith.mulf %424, %428 : vector<16x32xf32>
    %430 = vector.broadcast %408 : vector<1x32xf32> to vector<16x32xf32>
    %431 = arith.mulf %429, %430 : vector<16x32xf32>
    %432 = vector.broadcast %409 : vector<1x32xf32> to vector<16x32xf32>
    %433 = arith.addf %431, %432 : vector<16x32xf32>
    %434 = vector.extract_strided_slice %433 {offsets = [0, 0], sizes = [1, 32], strides = [1, 1]} : vector<16x32xf32> to vector<1x32xf32>
    %435 = vector.extract_strided_slice %433 {offsets = [8, 0], sizes = [1, 32], strides = [1, 1]} : vector<16x32xf32> to vector<1x32xf32>
    %436 = tpu.concatenate %434, %435 in 0 : vector<1x32xf32>, vector<1x32xf32> -> vector<2x32xf32>
    %c4_211 = arith.constant 4 : index
    %c0_212 = arith.constant 0 : index
    %c0_213 = arith.constant 0 : index
    %437 = vector.load %arg5[%c4_211, %c0_212, %c0_213] : memref<5x32x64xf32, #tpu.memory_space<vmem>>, vector<1x32x64xf32>
    %438 = vector.shape_cast %437 : vector<1x32x64xf32> to vector<32x64xf32>
    %cst_214 = arith.constant dense<0.000000e+00> : vector<2x64xf32>
    %439 = tpu.matmul %436, %438, %cst_214 {dimension_numbers = #tpu.dot_dimension_numbers<[1], [0], [0], [1], [0, 0, 1, 1], [], []>} : vector<2x32xf32>, vector<32x64xf32>, vector<2x64xf32> -> vector<2x64xf32>
    %c2_215 = arith.constant 2 : index
    %c0_216 = arith.constant 0 : index
    %440 = vector.load %arg6[%c2_215, %c0_216] : memref<4x64xf32, #tpu.memory_space<vmem>>, vector<1x64xf32>
    %441 = vector.broadcast %440 : vector<1x64xf32> to vector<2x64xf32>
    %442 = arith.addf %439, %441 : vector<2x64xf32>
    %cst_217 = arith.constant 0.000000e+00 : f32
    %443 = vector.broadcast %cst_217 : f32 to vector<2x64xf32>
    %444 = arith.maximumf %442, %443 : vector<2x64xf32>
    %c3_218 = arith.constant 3 : index
    %c0_219 = arith.constant 0 : index
    %445 = vector.load %arg6[%c3_218, %c0_219] : memref<4x64xf32, #tpu.memory_space<vmem>>, vector<1x64xf32>
    %446 = vector.broadcast %445 : vector<1x64xf32> to vector<2x64xf32>
    %447 = arith.mulf %444, %446 : vector<2x64xf32>
    %cst_220 = arith.constant dense<0.000000e+00> : vector<2xf32>
    %448 = vector.multi_reduction <add>, %447, %cst_220 [1] : vector<2x64xf32> to vector<2xf32>
    %449 = vector.shape_cast %448 : vector<2xf32> to vector<2x1xf32>
    %c0_221 = arith.constant 0 : index
    %450 = memref.load %arg8[%c0_221] : memref<1xf32, #tpu.memory_space<smem>>
    %451 = vector.broadcast %450 : f32 to vector<2x1xf32>
    %452 = arith.addf %449, %451 : vector<2x1xf32>
    %453 = arith.negf %452 : vector<2x1xf32>
    %454 = math.exp %453 : vector<2x1xf32>
    %cst_222 = arith.constant 1.000000e+00 : f32
    %455 = vector.broadcast %cst_222 : f32 to vector<2x1xf32>
    %456 = arith.addf %455, %454 : vector<2x1xf32>
    %457 = arith.divf %455, %456 : vector<2x1xf32>
    %c0_223 = arith.constant 0 : index
    %c0_224 = arith.constant 0 : index
    %458 = vector.load %arg9[%c0_223, %c0_224] : memref<2x1xf32, #tpu.memory_space<vmem>>, vector<2x1xf32>
    tpu.vector_store %arg9[%c0_223, %c0_224], %457 {strides = array<i32>} : memref<2x1xf32, #tpu.memory_space<vmem>>, vector<2x1xf32>,
    return
  }
}

</mosaic_0001>

<llo_original>
// kernel: finetuned_forward.1
$region0: #{finetuned_forward.1}
  #allocation0 [shape = 'u32[]', space=smem, size = 0x4, offset = 0x4, fixed_abs, tag = 'smem constant byte address 0x4 - core index']
  #allocation1 [shape = 'u32[144,128]{1,0:T(1,128)}', space=vmem, size = 0x12000, scoped, tag = 'internal scratch']
  #allocation2 [shape = 'f32[16,16]{1,0:T(8,128)}', space=vmem, size = 0x2000, scoped, tag = 'scratch operand']
  #allocation3 [shape = 'f32[1]{0:T(128)S(6)}', space=smem, size = 0x200, scoped, tag = 'scoped memory for finetuned_forward.1']
  %s0 = inlined_call_operand.vmem [shape: s32[16,1], index: 0, kind: input, shape index: {}]
  %s1 = inlined_call_operand.vmem [shape: s32[2,8], index: 1, kind: input, shape index: {}]
  %s2 = inlined_call_operand.vmem [shape: f32[116,32], index: 2, kind: input, shape index: {}]
  %s3 = inlined_call_operand.vmem [shape: f32[16,32,16], index: 3, kind: input, shape index: {}]
  %s4 = inlined_call_operand.vmem [shape: f32[4,16], index: 4, kind: input, shape index: {}]
  %s5 = inlined_call_operand.vmem [shape: f32[5,32,64], index: 5, kind: input, shape index: {}]
  %s6 = inlined_call_operand.vmem [shape: f32[4,64], index: 6, kind: input, shape index: {}]
  %s7 = inlined_call_operand.vmem [shape: f32[14,32], index: 7, kind: input, shape index: {}]
  %s8 = inlined_call_operand.<no memory space> [shape: f32[1], index: 8, kind: input, shape index: {}]
  %s9 = inlined_call_operand.vmem [shape: f32[2,1], index: 9, kind: output, shape index: {}]
  %s10 = sld [smem:[#allocation0]]
  $region46: #{finetuned_forward.1} parent=0
    _
  %s12 = ssub.s32 1, %s10
  %s13 = scalar_select 0, %s12, %s10
  %14 = sst [smem:[#allocation3]] %s8
  // Predicated region
  $region2: #{finetuned_forward.1} parent=0 // pred_check
    _
  $region3: #{finetuned_forward.1} parent=0 // pred_check_branch
    %16 = sbr.rel (0) target = $region5
  $region4: #{finetuned_forward.1} parent=0 // pred_region
    _
  $region5: #{finetuned_forward.1} parent=0 // pred_fallthru
    _
  // Predicated region
  $region6: #{finetuned_forward.1} parent=0 // pred_check
    _
  $region7: #{finetuned_forward.1} parent=0 // pred_check_branch
    %18 = sbr.rel (0) target = $region9
  $region8: #{finetuned_forward.1} parent=0 // pred_region
    _
  $region9: #{finetuned_forward.1} parent=0 // pred_fallthru
    _
  // Predicated region
  $region10: #{finetuned_forward.1} parent=0 // pred_check
    _
  $region11: #{finetuned_forward.1} parent=0 // pred_check_branch
    %20 = sbr.rel (0) target = $region13
  $region12: #{finetuned_forward.1} parent=0 // pred_region
    _
  $region13: #{finetuned_forward.1} parent=0 // pred_fallthru
    _
  // Predicated region
  $region14: #{finetuned_forward.1} parent=0 // pred_check
    _
  $region15: #{finetuned_forward.1} parent=0 // pred_check_branch
    %22 = sbr.rel (0) target = $region17
  $region16: #{finetuned_forward.1} parent=0 // pred_region
    _
  $region17: #{finetuned_forward.1} parent=0 // pred_fallthru
    _
  // Predicated region
  $region18: #{finetuned_forward.1} parent=0 // pred_check
    _
  $region19: #{finetuned_forward.1} parent=0 // pred_check_branch
    %24 = sbr.rel (0) target = $region21
  $region20: #{finetuned_forward.1} parent=0 // pred_region
    _
  $region21: #{finetuned_forward.1} parent=0 // pred_fallthru
    _
  // Predicated region
  $region22: #{finetuned_forward.1} parent=0 // pred_check
    _
  $region23: #{finetuned_forward.1} parent=0 // pred_check_branch
    %26 = sbr.rel (0) target = $region25
  $region24: #{finetuned_forward.1} parent=0 // pred_region
    _
  $region25: #{finetuned_forward.1} parent=0 // pred_fallthru
    _
  // Predicated region
  $region26: #{finetuned_forward.1} parent=0 // pred_check
    _
  $region27: #{finetuned_forward.1} parent=0 // pred_check_branch
    %28 = sbr.rel (0) target = $region29
  $region28: #{finetuned_forward.1} parent=0 // pred_region
    _
  $region29: #{finetuned_forward.1} parent=0 // pred_fallthru
    _
  // Predicated region
  $region30: #{finetuned_forward.1} parent=0 // pred_check
    _
  $region31: #{finetuned_forward.1} parent=0 // pred_check_branch
    %30 = sbr.rel (0) target = $region33
  $region32: #{finetuned_forward.1} parent=0 // pred_region
    _
  $region33: #{finetuned_forward.1} parent=0 // pred_fallthru
    _
  // Predicated region
  $region34: #{finetuned_forward.1} parent=0 // pred_check
    _
  $region35: #{finetuned_forward.1} parent=0 // pred_check_branch
    %32 = sbr.rel (0) target = $region37
  $region36: #{finetuned_forward.1} parent=0 // pred_region
    _
  $region37: #{finetuned_forward.1} parent=0 // pred_fallthru
    _
  %v33 = vld [vmem:[%s0] sm:$0xff]
  %v34 = vld [vmem:[%s0 + $0x8] sm:$0xff]
  %v35 = vlaneseq
  %v36 = vand.u32 %v35, 127
  %v37 = vlaneseq
  %v38 = vshrl.u32 %v37, 7
  %v39 = vadd.s32 %v38, 8
  %vm40 = vcmp.ge.s32.totalorder %v38, 8
  %vm41 = vcmp.ge.s32.totalorder %v39, 8
  %v42 = vsel %vm40, 8, 0
  %v43 = vsel %vm41, 8, 0
  %v44 = vsub.s32 %v38, %v42
  %v45 = vsub.s32 %v39, %v43
  %v46 = vadd.s32 %v44, 100
  %v47 = vadd.s32 %v45, 100
  %48 = vset.pattern.permute.xlu0 0
  %49 = vperm.xlu0 %48, %v33
  %v50 = vpop.permute.xlu0 %49
  %51 = vset.pattern.permute.xlu0 0
  %52 = vperm.xlu0 %51, %v34
  %v53 = vpop.permute.xlu0 %52
  %vm54 = vcmp.eq.s32.totalorder %v36, %v50
  %vm55 = vcmp.eq.s32.totalorder %v36, %v53
  %vm56 = vcmp.eq.s32.totalorder %v36, %v46
  %vm57 = vcmp.eq.s32.totalorder %v36, %v47
  %vm58 = vmor %vm54, %vm56
  %vm59 = vmor %vm55, %vm57
  %v60 = vsel %vm58, 1.0, 0.0
  %v61 = vsel %vm59, 1.0, 0.0
  %v62 = vld [vmem:[%s2] sm:$0xff]
  %v63 = vld [vmem:[%s2 + $0x8] sm:$0xff]
  %v64 = vld [vmem:[%s2 + $0x10] sm:$0xff]
  %v65 = vld [vmem:[%s2 + $0x18] sm:$0xff]
  %v66 = vld [vmem:[%s2 + $0x20] sm:$0xff]
  %v67 = vld [vmem:[%s2 + $0x28] sm:$0xff]
  %v68 = vld [vmem:[%s2 + $0x30] sm:$0xff]
  %v69 = vld [vmem:[%s2 + $0x38] sm:$0xff]
  %v70 = vld [vmem:[%s2 + $0x40] sm:$0xff]
  %v71 = vld [vmem:[%s2 + $0x48] sm:$0xff]
  %v72 = vld [vmem:[%s2 + $0x50] sm:$0xff]
  %v73 = vld [vmem:[%s2 + $0x58] sm:$0xff]
  %v74 = vld [vmem:[%s2 + $0x60] sm:$0xff]
  %v75 = vld [vmem:[%s2 + $0x68] sm:$0xff]
  %v76 = vld [vmem:[%s2 + $0x70] sm:$0xf]
  %vm77 = vcmask 949248
  %v79 = vsel %vm77, %v60, 0
  %v82 = vsel %vm77, %v61, 0
  %vm84 = vcmask 1043456
  %v86 = vsel %vm84, %v76, 0
  %88 = vmatprep.subr.mxu0 0.0
  %89 = vmatpush1.msra.mxu0 0.0
  %90 = vmatprep.subr.mxu0 0.0
  %91 = vmatpush1.msra.mxu0 %v86
  %92 = vmatprep.subr.mxu0 0.0
  %93 = vmatpush1.msra.mxu0 %v75
  %94 = vmatprep.subr.mxu0 0.0
  %95 = vmatpush1.msra.mxu0 %v74
  %96 = vmatprep.subr.mxu0 0.0
  %97 = vmatpush1.msra.mxu0 %v73
  %98 = vmatprep.subr.mxu0 0.0
  %99 = vmatpush1.msra.mxu0 %v72
  %100 = vmatprep.subr.mxu0 0.0
  %101 = vmatpush1.msra.mxu0 %v71
  %102 = vmatprep.subr.mxu0 0.0
  %103 = vmatpush1.msra.mxu0 %v70
  %104 = vmatprep.subr.mxu0 0.0
  %105 = vmatpush1.msra.mxu0 %v69
  %106 = vmatprep.subr.mxu0 0.0
  %107 = vmatpush1.msra.mxu0 %v68
  %108 = vmatprep.subr.mxu0 0.0
  %109 = vmatpush1.msra.mxu0 %v67
  %110 = vmatprep.subr.mxu0 0.0
  %111 = vmatpush1.msra.mxu0 %v66
  %112 = vmatprep.subr.mxu0 0.0
  %113 = vmatpush1.msra.mxu0 %v65
  %114 = vmatprep.subr.mxu0 0.0
  %115 = vmatpush1.msra.mxu0 %v64
  %116 = vmatprep.subr.mxu0 0.0
  %117 = vmatpush1.msra.mxu0 %v63
  %118 = vmatprep.subr.mxu0 0.0
  %119 = vmatpush1.msra.mxu0 %v62
  %120 = vmatprep.subr.mxu0 0.0
  %121 = vmatpush2.msra.mxu0 0.0
  %122 = vmatprep.subr.mxu0 0.0
  %123 = vmatpush2.msra.mxu0 0.0
  %124 = vmatprep.subr.mxu0 0.0
  %125 = vmatpush2.msra.mxu0 0.0
  %126 = vmatprep.subr.mxu0 0.0
  %127 = vmatpush2.msra.mxu0 0.0
  %128 = vmatprep.subr.mxu0 0.0
  %129 = vmatpush2.msra.mxu0 0.0
  %130 = vmatprep.subr.mxu0 0.0
  %131 = vmatpush2.msra.mxu0 0.0
  %132 = vmatprep.subr.mxu0 0.0
  %133 = vmatpush2.msra.mxu0 0.0
  %134 = vmatprep.subr.mxu0 0.0
  %135 = vmatpush2.msra.mxu0 0.0
  %136 = vmatprep.subr.mxu0 0.0
  %137 = vmatpush2.msra.mxu0 0.0
  %138 = vmatprep.subr.mxu0 0.0
  %139 = vmatpush2.msra.mxu0 0.0
  %140 = vmatprep.subr.mxu0 0.0
  %141 = vmatpush2.msra.mxu0 0.0
  %142 = vmatprep.subr.mxu0 0.0
  %143 = vmatpush2.msra.mxu0 0.0
  %144 = vmatprep.subr.mxu0 0.0
  %145 = vmatpush2.msra.mxu0 0.0
  %146 = vmatprep.subr.mxu0 0.0
  %147 = vmatpush2.msra.mxu0 0.0
  %148 = vmatprep.subr.mxu0 0.0
  %149 = vmatpush2.msra.mxu0 0.0
  %150 = vmatprep.subr.mxu0 0.0
  %151 = vmatpush2.msra.mxu0 0.0
  %152 = vmatprep.mubr.f32.mxu0 0.0
  %153 = vmatmul.mubr.f32.gmra.mxu0 %v79
  %v154 = vpop.f32.mrf.mxu0
  %v155 = vadd.f32 0.0, %v154
  %v156 = vpop.f32.mrf.mxu0
  %157 = vmatprep.mubr.f32.mxu0 0.0
  %158 = vmatmul.mubr.f32.gmra.mxu0 %v82
  %v159 = vpop.f32.mrf.mxu0
  %v160 = vadd.f32 0.0, %v159
  %v161 = vpop.f32.mrf.mxu0
  %162 = vdwg.mxu0
  %v163 = vld [vmem:[%s7] sm:$0x1]
  %v164 = vld [vmem:[%s7 + $0x1] sm:$0x1]
  %vm165 = vcmask 261120
  %v166 = vsel %vm165, %v155, 0.0
  %167 = vadd.xlane.f32.xlu0 %v166
  %v168 = vpop.xlane.xlu0 %167
  %v169 = vsel %vm165, %v160, 0.0
  %170 = vadd.xlane.f32.xlu0 %v169
  %v171 = vpop.xlane.xlu0 %170
  %v172 = vrcp.pop 32.0
  %v173 = vmul.f32 %v168, %v172
  %v174 = vmul.f32 %v171, %v172
  %v175 = vsub.f32 %v155, %v173
  %v176 = vsub.f32 %v160, %v174
  %v177 = vmul.f32 %v175, %v175
  %v178 = vmul.f32 %v176, %v176
  %v179 = vsel %vm165, %v177, 0.0
  %180 = vadd.xlane.f32.xlu0 %v179
  %v181 = vpop.xlane.xlu0 %180
  %v182 = vsel %vm165, %v178, 0.0
  %183 = vadd.xlane.f32.xlu0 %v182
  %v184 = vpop.xlane.xlu0 %183
  %v185 = vmul.f32 %v181, %v172
  %v186 = vmul.f32 %v184, %v172
  %v187 = vadd.f32 %v185, 1e-12
  %v188 = vadd.f32 %v186, 1e-12
  %v189 = vrsqrt.pop %v187
  %v190 = vrsqrt.pop %v188
  %v191 = vmul.f32 %v175, %v189
  %v192 = vmul.f32 %v176, %v190
  %v193 = vlaneseq
  %v194 = vshrl.u32 %v193, 7
  %v195 = vsub.s32 0, %v194
  %v196 = vrot.slane %v163, %v195
  %v197 = vmul.f32 %v191, %v196
  %v198 = vmul.f32 %v192, %v196
  %v199 = vlaneseq
  %v200 = vshrl.u32 %v199, 7
  %v201 = vsub.s32 0, %v200
  %v202 = vrot.slane %v164, %v201
  %v203 = vadd.f32 %v197, %v202
  %v204 = vadd.f32 %v198, %v202
  %v205 = vld [vmem:[%s1] sm:$0x1]
  %vm206 = vcmp.gt.s32.totalorder %v205, 0
  %v207 = vsel %vm206, 0.0, -1e+09
  %v208 = vld [vmem:[%s1 + $0x1] sm:$0x1]
  %vm209 = vcmp.gt.s32.totalorder %v208, 0
  %v210 = vsel %vm209, 0.0, -1e+09
  %v211 = vld [vmem:[%s3] sm:$0xff]
  %v212 = vld [vmem:[%s3 + $0x8] sm:$0xff]
  %v213 = vld [vmem:[%s3 + $0x10] sm:$0xff]
  %v214 = vld [vmem:[%s3 + $0x18] sm:$0xff]
  %v215 = vld [vmem:[%s4] sm:$0x1]
  %v216 = vlaneseq
  %v217 = vshrl.u32 %v216, 7
  %v218 = vsub.s32 0, %v217
  %v219 = vrot.slane %v215, %v218
  %v221 = vsel %vm165, %v203, 0
  %v224 = vsel %vm165, %v204, 0
  %226 = vmatprep.subr.mxu0 0.0
  %227 = vmatpush1.msra.mxu0 0.0
  %228 = vmatprep.subr.mxu0 0.0
  %229 = vmatpush1.msra.mxu0 0.0
  %230 = vmatprep.subr.mxu0 0.0
  %231 = vmatpush1.msra.mxu0 0.0
  %232 = vmatprep.subr.mxu0 0.0
  %233 = vmatpush1.msra.mxu0 0.0
  %234 = vmatprep.subr.mxu0 0.0
  %235 = vmatpush1.msra.mxu0 0.0
  %236 = vmatprep.subr.mxu0 0.0
  %237 = vmatpush1.msra.mxu0 0.0
  %238 = vmatprep.subr.mxu0 0.0
  %239 = vmatpush1.msra.mxu0 0.0
  %240 = vmatprep.subr.mxu0 0.0
  %241 = vmatpush1.msra.mxu0 0.0
  %242 = vmatprep.subr.mxu0 0.0
  %243 = vmatpush1.msra.mxu0 0.0
  %244 = vmatprep.subr.mxu0 0.0
  %245 = vmatpush1.msra.mxu0 0.0
  %246 = vmatprep.subr.mxu0 0.0
  %247 = vmatpush1.msra.mxu0 0.0
  %248 = vmatprep.subr.mxu0 0.0
  %249 = vmatpush1.msra.mxu0 0.0
  %250 = vmatprep.subr.mxu0 0.0
  %251 = vmatpush1.msra.mxu0 %v214
  %252 = vmatprep.subr.mxu0 0.0
  %253 = vmatpush1.msra.mxu0 %v213
  %254 = vmatprep.subr.mxu0 0.0
  %255 = vmatpush1.msra.mxu0 %v212
  %256 = vmatprep.subr.mxu0 0.0
  %257 = vmatpush1.msra.mxu0 %v211
  %258 = vmatprep.subr.mxu0 0.0
  %259 = vmatpush2.msra.mxu0 0.0
  %260 = vmatprep.subr.mxu0 0.0
  %261 = vmatpush2.msra.mxu0 0.0
  %262 = vmatprep.subr.mxu0 0.0
  %263 = vmatpush2.msra.mxu0 0.0
  %264 = vmatprep.subr.mxu0 0.0
  %265 = vmatpush2.msra.mxu0 0.0
  %266 = vmatprep.subr.mxu0 0.0
  %267 = vmatpush2.msra.mxu0 0.0
  %268 = vmatprep.subr.mxu0 0.0
  %269 = vmatpush2.msra.mxu0 0.0
  %270 = vmatprep.subr.mxu0 0.0
  %271 = vmatpush2.msra.mxu0 0.0
  %272 = vmatprep.subr.mxu0 0.0
  %273 = vmatpush2.msra.mxu0 0.0
  %274 = vmatprep.subr.mxu0 0.0
  %275 = vmatpush2.msra.mxu0 0.0
  %276 = vmatprep.subr.mxu0 0.0
  %277 = vmatpush2.msra.mxu0 0.0
  %278 = vmatprep.subr.mxu0 0.0
  %279 = vmatpush2.msra.mxu0 0.0
  %280 = vmatprep.subr.mxu0 0.0
  %281 = vmatpush2.msra.mxu0 0.0
  %282 = vmatprep.subr.mxu0 0.0
  %283 = vmatpush2.msra.mxu0 0.0
  %284 = vmatprep.subr.mxu0 0.0
  %285 = vmatpush2.msra.mxu0 0.0
  %286 = vmatprep.subr.mxu0 0.0
  %287 = vmatpush2.msra.mxu0 0.0
  %288 = vmatprep.subr.mxu0 0.0
  %289 = vmatpush2.msra.mxu0 0.0
  %290 = vmatprep.mubr.f32.mxu0 0.0
  %291 = vmatmul.mubr.f32.gmra.mxu0 %v221
  %v292 = vpop.f32.mrf.mxu0
  %v293 = vadd.f32 %v219, %v292
  %v294 = vpop.f32.mrf.mxu0
  %295 = vmatprep.mubr.f32.mxu0 0.0
  %296 = vmatmul.mubr.f32.gmra.mxu0 %v224
  %v297 = vpop.f32.mrf.mxu0
  %v298 = vadd.f32 %v219, %v297
  %v299 = vpop.f32.mrf.mxu0
  %300 = vdwg.mxu0
  %s301 = scalar_lea.vmem %s3, 128
  %v302 = vld [vmem:[%s301] sm:$0xff]
  %v303 = vld [vmem:[%s301 + $0x8] sm:$0xff]
  %v304 = vld [vmem:[%s301 + $0x10] sm:$0xff]
  %v305 = vld [vmem:[%s301 + $0x18] sm:$0xff]
  %306 = vmatprep.subr.mxu0 0.0
  %307 = vmatpush1.msra.mxu0 0.0
  %308 = vmatprep.subr.mxu0 0.0
  %309 = vmatpush1.msra.mxu0 0.0
  %310 = vmatprep.subr.mxu0 0.0
  %311 = vmatpush1.msra.mxu0 0.0
  %312 = vmatprep.subr.mxu0 0.0
  %313 = vmatpush1.msra.mxu0 0.0
  %314 = vmatprep.subr.mxu0 0.0
  %315 = vmatpush1.msra.mxu0 0.0
  %316 = vmatprep.subr.mxu0 0.0
  %317 = vmatpush1.msra.mxu0 0.0
  %318 = vmatprep.subr.mxu0 0.0
  %319 = vmatpush1.msra.mxu0 0.0
  %320 = vmatprep.subr.mxu0 0.0
  %321 = vmatpush1.msra.mxu0 0.0
  %322 = vmatprep.subr.mxu0 0.0
  %323 = vmatpush1.msra.mxu0 0.0
  %324 = vmatprep.subr.mxu0 0.0
  %325 = vmatpush1.msra.mxu0 0.0
  %326 = vmatprep.subr.mxu0 0.0
  %327 = vmatpush1.msra.mxu0 0.0
  %328 = vmatprep.subr.mxu0 0.0
  %329 = vmatpush1.msra.mxu0 0.0
  %330 = vmatprep.subr.mxu0 0.0
  %331 = vmatpush1.msra.mxu0 %v305
  %332 = vmatprep.subr.mxu0 0.0
  %333 = vmatpush1.msra.mxu0 %v304
  %334 = vmatprep.subr.mxu0 0.0
  %335 = vmatpush1.msra.mxu0 %v303
  %336 = vmatprep.subr.mxu0 0.0
  %337 = vmatpush1.msra.mxu0 %v302
  %338 = vmatprep.subr.mxu0 0.0
  %339 = vmatpush2.msra.mxu0 0.0
  %340 = vmatprep.subr.mxu0 0.0
  %341 = vmatpush2.msra.mxu0 0.0
  %342 = vmatprep.subr.mxu0 0.0
  %343 = vmatpush2.msra.mxu0 0.0
  %344 = vmatprep.subr.mxu0 0.0
  %345 = vmatpush2.msra.mxu0 0.0
  %346 = vmatprep.subr.mxu0 0.0
  %347 = vmatpush2.msra.mxu0 0.0
  %348 = vmatprep.subr.mxu0 0.0
  %349 = vmatpush2.msra.mxu0 0.0
  %350 = vmatprep.subr.mxu0 0.0
  %351 = vmatpush2.msra.mxu0 0.0
  %352 = vmatprep.subr.mxu0 0.0
  %353 = vmatpush2.msra.mxu0 0.0
  %354 = vmatprep.subr.mxu0 0.0
  %355 = vmatpush2.msra.mxu0 0.0
  %356 = vmatprep.subr.mxu0 0.0
  %357 = vmatpush2.msra.mxu0 0.0
  %358 = vmatprep.subr.mxu0 0.0
  %359 = vmatpush2.msra.mxu0 0.0
  %360 = vmatprep.subr.mxu0 0.0
  %361 = vmatpush2.msra.mxu0 0.0
  %362 = vmatprep.subr.mxu0 0.0
  %363 = vmatpush2.msra.mxu0 0.0
  %364 = vmatprep.subr.mxu0 0.0
  %365 = vmatpush2.msra.mxu0 0.0
  %366 = vmatprep.subr.mxu0 0.0
  %367 = vmatpush2.msra.mxu0 0.0
  %368 = vmatprep.subr.mxu0 0.0
  %369 = vmatpush2.msra.mxu0 0.0
  %370 = vmatprep.mubr.f32.mxu0 0.0
  %371 = vmatmul.mubr.f32.gmra.mxu0 %v221
  %v372 = vpop.f32.mrf.mxu0
  %v373 = vadd.f32 0.0, %v372
  %v374 = vpop.f32.mrf.mxu0
  %375 = vmatprep.mubr.f32.mxu0 0.0
  %376 = vmatmul.mubr.f32.gmra.mxu0 %v224
  %v377 = vpop.f32.mrf.mxu0
  %v378 = vadd.f32 0.0, %v377
  %v379 = vpop.f32.mrf.mxu0
  %380 = vdwg.mxu0
  %s381 = scalar_lea.vmem %s3, 256
  %v382 = vld [vmem:[%s381] sm:$0xff]
  %v383 = vld [vmem:[%s381 + $0x8] sm:$0xff]
  %v384 = vld [vmem:[%s381 + $0x10] sm:$0xff]
  %v385 = vld [vmem:[%s381 + $0x18] sm:$0xff]
  %386 = vmatprep.subr.mxu0 0.0
  %387 = vmatpush1.msra.mxu0 0.0
  %388 = vmatprep.subr.mxu0 0.0
  %389 = vmatpush1.msra.mxu0 0.0
  %390 = vmatprep.subr.mxu0 0.0
  %391 = vmatpush1.msra.mxu0 0.0
  %392 = vmatprep.subr.mxu0 0.0
  %393 = vmatpush1.msra.mxu0 0.0
  %394 = vmatprep.subr.mxu0 0.0
  %395 = vmatpush1.msra.mxu0 0.0
  %396 = vmatprep.subr.mxu0 0.0
  %397 = vmatpush1.msra.mxu0 0.0
  %398 = vmatprep.subr.mxu0 0.0
  %399 = vmatpush1.msra.mxu0 0.0
  %400 = vmatprep.subr.mxu0 0.0
  %401 = vmatpush1.msra.mxu0 0.0
  %402 = vmatprep.subr.mxu0 0.0
  %403 = vmatpush1.msra.mxu0 0.0
  %404 = vmatprep.subr.mxu0 0.0
  %405 = vmatpush1.msra.mxu0 0.0
  %406 = vmatprep.subr.mxu0 0.0
  %407 = vmatpush1.msra.mxu0 0.0
  %408 = vmatprep.subr.mxu0 0.0
  %409 = vmatpush1.msra.mxu0 0.0
  %410 = vmatprep.subr.mxu0 0.0
  %411 = vmatpush1.msra.mxu0 %v385
  %412 = vmatprep.subr.mxu0 0.0
  %413 = vmatpush1.msra.mxu0 %v384
  %414 = vmatprep.subr.mxu0 0.0
  %415 = vmatpush1.msra.mxu0 %v383
  %416 = vmatprep.subr.mxu0 0.0
  %417 = vmatpush1.msra.mxu0 %v382
  %418 = vmatprep.subr.mxu0 0.0
  %419 = vmatpush2.msra.mxu0 0.0
  %420 = vmatprep.subr.mxu0 0.0
  %421 = vmatpush2.msra.mxu0 0.0
  %422 = vmatprep.subr.mxu0 0.0
  %423 = vmatpush2.msra.mxu0 0.0
  %424 = vmatprep.subr.mxu0 0.0
  %425 = vmatpush2.msra.mxu0 0.0
  %426 = vmatprep.subr.mxu0 0.0
  %427 = vmatpush2.msra.mxu0 0.0
  %428 = vmatprep.subr.mxu0 0.0
  %429 = vmatpush2.msra.mxu0 0.0
  %430 = vmatprep.subr.mxu0 0.0
  %431 = vmatpush2.msra.mxu0 0.0
  %432 = vmatprep.subr.mxu0 0.0
  %433 = vmatpush2.msra.mxu0 0.0
  %434 = vmatprep.subr.mxu0 0.0
  %435 = vmatpush2.msra.mxu0 0.0
  %436 = vmatprep.subr.mxu0 0.0
  %437 = vmatpush2.msra.mxu0 0.0
  %438 = vmatprep.subr.mxu0 0.0
  %439 = vmatpush2.msra.mxu0 0.0
  %440 = vmatprep.subr.mxu0 0.0
  %441 = vmatpush2.msra.mxu0 0.0
  %442 = vmatprep.subr.mxu0 0.0
  %443 = vmatpush2.msra.mxu0 0.0
  %444 = vmatprep.subr.mxu0 0.0
  %445 = vmatpush2.msra.mxu0 0.0
  %446 = vmatprep.subr.mxu0 0.0
  %447 = vmatpush2.msra.mxu0 0.0
  %448 = vmatprep.subr.mxu0 0.0
  %449 = vmatpush2.msra.mxu0 0.0
  %450 = vmatprep.mubr.f32.mxu0 0.0
  %451 = vmatmul.mubr.f32.gmra.mxu0 %v221
  %v452 = vpop.f32.mrf.mxu0
  %v453 = vadd.f32 0.0, %v452
  %v454 = vpop.f32.mrf.mxu0
  %455 = vmatprep.mubr.f32.mxu0 0.0
  %456 = vmatmul.mubr.f32.gmra.mxu0 %v224
  %v457 = vpop.f32.mrf.mxu0
  %v458 = vadd.f32 0.0, %v457
  %v459 = vpop.f32.mrf.mxu0
  %460 = vdwg.mxu0
  %v461 = vlaneseq
  %v462 = vshrl.u32 %v461, 7
  %v463 = vsub.s32 0, %v462
  %v464 = vrot.slane %v207, %v463
  %vm465 = vcmask 130048
  %v467 = vsel %vm465, %v293, 0
  %v470 = vsel %vm465, %v373, 0
  %472 = vmatprep.subr.mxu0 0.0
  %473 = vmatpush1.xpose.msra.mxu0 0.0
  %474 = vmatprep.subr.mxu0 0.0
  %475 = vmatpush1.xpose.msra.mxu0 0.0
  %476 = vmatprep.subr.mxu0 0.0
  %477 = vmatpush1.xpose.msra.mxu0 0.0
  %478 = vmatprep.subr.mxu0 0.0
  %479 = vmatpush1.xpose.msra.mxu0 0.0
  %480 = vmatprep.subr.mxu0 0.0
  %481 = vmatpush1.xpose.msra.mxu0 0.0
  %482 = vmatprep.subr.mxu0 0.0
  %483 = vmatpush1.xpose.msra.mxu0 0.0
  %484 = vmatprep.subr.mxu0 0.0
  %485 = vmatpush1.xpose.msra.mxu0 0.0
  %486 = vmatprep.subr.mxu0 0.0
  %487 = vmatpush1.xpose.msra.mxu0 0.0
  %488 = vmatprep.subr.mxu0 0.0
  %489 = vmatpush1.xpose.msra.mxu0 0.0
  %490 = vmatprep.subr.mxu0 0.0
  %491 = vmatpush1.xpose.msra.mxu0 0.0
  %492 = vmatprep.subr.mxu0 0.0
  %493 = vmatpush1.xpose.msra.mxu0 0.0
  %494 = vmatprep.subr.mxu0 0.0
  %495 = vmatpush1.xpose.msra.mxu0 0.0
  %496 = vmatprep.subr.mxu0 0.0
  %497 = vmatpush1.xpose.msra.mxu0 0.0
  %498 = vmatprep.subr.mxu0 0.0
  %499 = vmatpush1.xpose.msra.mxu0 0.0
  %500 = vmatprep.subr.mxu0 0.0
  %501 = vmatpush1.xpose.msra.mxu0 0.0
  %502 = vmatprep.subr.mxu0 0.0
  %503 = vmatpush1.xpose.msra.mxu0 %v470
  %504 = vmatprep.subr.mxu0 0.0
  %505 = vmatpush2.xpose.msra.mxu0 0.0
  %506 = vmatprep.subr.mxu0 0.0
  %507 = vmatpush2.xpose.msra.mxu0 0.0
  %508 = vmatprep.subr.mxu0 0.0
  %509 = vmatpush2.xpose.msra.mxu0 0.0
  %510 = vmatprep.subr.mxu0 0.0
  %511 = vmatpush2.xpose.msra.mxu0 0.0
  %512 = vmatprep.subr.mxu0 0.0
  %513 = vmatpush2.xpose.msra.mxu0 0.0
  %514 = vmatprep.subr.mxu0 0.0
  %515 = vmatpush2.xpose.msra.mxu0 0.0
  %516 = vmatprep.subr.mxu0 0.0
  %517 = vmatpush2.xpose.msra.mxu0 0.0
  %518 = vmatprep.subr.mxu0 0.0
  %519 = vmatpush2.xpose.msra.mxu0 0.0
  %520 = vmatprep.subr.mxu0 0.0
  %521 = vmatpush2.xpose.msra.mxu0 0.0
  %522 = vmatprep.subr.mxu0 0.0
  %523 = vmatpush2.xpose.msra.mxu0 0.0
  %524 = vmatprep.subr.mxu0 0.0
  %525 = vmatpush2.xpose.msra.mxu0 0.0
  %526 = vmatprep.subr.mxu0 0.0
  %527 = vmatpush2.xpose.msra.mxu0 0.0
  %528 = vmatprep.subr.mxu0 0.0
  %529 = vmatpush2.xpose.msra.mxu0 0.0
  %530 = vmatprep.subr.mxu0 0.0
  %531 = vmatpush2.xpose.msra.mxu0 0.0
  %532 = vmatprep.subr.mxu0 0.0
  %533 = vmatpush2.xpose.msra.mxu0 0.0
  %534 = vmatprep.subr.mxu0 0.0
  %535 = vmatpush2.xpose.msra.mxu0 0.0
  %536 = vmatprep.mubr.f32.mxu0 0.0
  %537 = vmatmul.mubr.f32.gmra.mxu0 %v467
  %v538 = vpop.f32.mrf.mxu0
  %v539 = vadd.f32 %v464, %v538
  %v540 = vpop.f32.mrf.mxu0
  %541 = vdwg.mxu0
  %vm542 = vcmask 64512
  %v543 = vsel %vm542, %v539, -inf
  %544 = vmax.xlane.f32.xlu0 %v543
  %v545 = vpop.xlane.xlu0 %544
  %v546 = vsub.f32 %v539, %v545
  %v547 = vmul.f32 %v546, 1.442695
  %v548 = vpow.pop %v547
  %v549 = vsel %vm542, %v548, 0.0
  %550 = vadd.xlane.f32.xlu0 %v549
  %v551 = vpop.xlane.xlu0 %550
  %v552 = vrcp.pop %v551
  %v553 = vmul.f32 %v548, %v552
  %v555 = vsel %vm542, %v553, 0
  %557 = vmatprep.subr.mxu0 0.0
  %558 = vmatpush1.msra.mxu0 0.0
  %559 = vmatprep.subr.mxu0 0.0
  %560 = vmatpush1.msra.mxu0 0.0
  %561 = vmatprep.subr.mxu0 0.0
  %562 = vmatpush1.msra.mxu0 0.0
  %563 = vmatprep.subr.mxu0 0.0
  %564 = vmatpush1.msra.mxu0 0.0
  %565 = vmatprep.subr.mxu0 0.0
  %566 = vmatpush1.msra.mxu0 0.0
  %567 = vmatprep.subr.mxu0 0.0
  %568 = vmatpush1.msra.mxu0 0.0
  %569 = vmatprep.subr.mxu0 0.0
  %570 = vmatpush1.msra.mxu0 0.0
  %571 = vmatprep.subr.mxu0 0.0
  %572 = vmatpush1.msra.mxu0 0.0
  %573 = vmatprep.subr.mxu0 0.0
  %574 = vmatpush1.msra.mxu0 0.0
  %575 = vmatprep.subr.mxu0 0.0
  %576 = vmatpush1.msra.mxu0 0.0
  %577 = vmatprep.subr.mxu0 0.0
  %578 = vmatpush1.msra.mxu0 0.0
  %579 = vmatprep.subr.mxu0 0.0
  %580 = vmatpush1.msra.mxu0 0.0
  %581 = vmatprep.subr.mxu0 0.0
  %582 = vmatpush1.msra.mxu0 0.0
  %583 = vmatprep.subr.mxu0 0.0
  %584 = vmatpush1.msra.mxu0 0.0
  %585 = vmatprep.subr.mxu0 0.0
  %586 = vmatpush1.msra.mxu0 0.0
  %587 = vmatprep.subr.mxu0 0.0
  %588 = vmatpush1.msra.mxu0 %v453
  %589 = vmatprep.subr.mxu0 0.0
  %590 = vmatpush2.msra.mxu0 0.0
  %591 = vmatprep.subr.mxu0 0.0
  %592 = vmatpush2.msra.mxu0 0.0
  %593 = vmatprep.subr.mxu0 0.0
  %594 = vmatpush2.msra.mxu0 0.0
  %595 = vmatprep.subr.mxu0 0.0
  %596 = vmatpush2.msra.mxu0 0.0
  %597 = vmatprep.subr.mxu0 0.0
  %598 = vmatpush2.msra.mxu0 0.0
  %599 = vmatprep.subr.mxu0 0.0
  %600 = vmatpush2.msra.mxu0 0.0
  %601 = vmatprep.subr.mxu0 0.0
  %602 = vmatpush2.msra.mxu0 0.0
  %603 = vmatprep.subr.mxu0 0.0
  %604 = vmatpush2.msra.mxu0 0.0
  %605 = vmatprep.subr.mxu0 0.0
  %606 = vmatpush2.msra.mxu0 0.0
  %607 = vmatprep.subr.mxu0 0.0
  %608 = vmatpush2.msra.mxu0 0.0
  %609 = vmatprep.subr.mxu0 0.0
  %610 = vmatpush2.msra.mxu0 0.0
  %611 = vmatprep.subr.mxu0 0.0
  %612 = vmatpush2.msra.mxu0 0.0
  %613 = vmatprep.subr.mxu0 0.0
  %614 = vmatpush2.msra.mxu0 0.0
  %615 = vmatprep.subr.mxu0 0.0
  %616 = vmatpush2.msra.mxu0 0.0
  %617 = vmatprep.subr.mxu0 0.0
  %618 = vmatpush2.msra.mxu0 0.0
  %619 = vmatprep.subr.mxu0 0.0
  %620 = vmatpush2.msra.mxu0 0.0
  %621 = vmatprep.mubr.f32.mxu0 0.0
  %622 = vmatmul.mubr.f32.gmra.mxu0 %v555
  %v623 = vpop.f32.mrf.mxu0
  %v624 = vadd.f32 0.0, %v623
  %v625 = vpop.f32.mrf.mxu0
  %626 = vdwg.mxu0
  %627 = vst.msk [vmem:[#allocation2] sm:$0xff] %vm465, %v624
  %v628 = vlaneseq
  %v629 = vshrl.u32 %v628, 7
  %v630 = vsub.s32 0, %v629
  %v631 = vrot.slane %v210, %v630
  %v633 = vsel %vm465, %v298, 0
  %v636 = vsel %vm465, %v378, 0
  %638 = vmatprep.subr.mxu0 0.0
  %639 = vmatpush1.xpose.msra.mxu0 0.0
  %640 = vmatprep.subr.mxu0 0.0
  %641 = vmatpush1.xpose.msra.mxu0 0.0
  %642 = vmatprep.subr.mxu0 0.0
  %643 = vmatpush1.xpose.msra.mxu0 0.0
  %644 = vmatprep.subr.mxu0 0.0
  %645 = vmatpush1.xpose.msra.mxu0 0.0
  %646 = vmatprep.subr.mxu0 0.0
  %647 = vmatpush1.xpose.msra.mxu0 0.0
  %648 = vmatprep.subr.mxu0 0.0
  %649 = vmatpush1.xpose.msra.mxu0 0.0
  %650 = vmatprep.subr.mxu0 0.0
  %651 = vmatpush1.xpose.msra.mxu0 0.0
  %652 = vmatprep.subr.mxu0 0.0
  %653 = vmatpush1.xpose.msra.mxu0 0.0
  %654 = vmatprep.subr.mxu0 0.0
  %655 = vmatpush1.xpose.msra.mxu0 0.0
  %656 = vmatprep.subr.mxu0 0.0
  %657 = vmatpush1.xpose.msra.mxu0 0.0
  %658 = vmatprep.subr.mxu0 0.0
  %659 = vmatpush1.xpose.msra.mxu0 0.0
  %660 = vmatprep.subr.mxu0 0.0
  %661 = vmatpush1.xpose.msra.mxu0 0.0
  %662 = vmatprep.subr.mxu0 0.0
  %663 = vmatpush1.xpose.msra.mxu0 0.0
  %664 = vmatprep.subr.mxu0 0.0
  %665 = vmatpush1.xpose.msra.mxu0 0.0
  %666 = vmatprep.subr.mxu0 0.0
  %667 = vmatpush1.xpose.msra.mxu0 0.0
  %668 = vmatprep.subr.mxu0 0.0
  %669 = vmatpush1.xpose.msra.mxu0 %v636
  %670 = vmatprep.subr.mxu0 0.0
  %671 = vmatpush2.xpose.msra.mxu0 0.0
  %672 = vmatprep.subr.mxu0 0.0
  %673 = vmatpush2.xpose.msra.mxu0 0.0
  %674 = vmatprep.subr.mxu0 0.0
  %675 = vmatpush2.xpose.msra.mxu0 0.0
  %676 = vmatprep.subr.mxu0 0.0
  %677 = vmatpush2.xpose.msra.mxu0 0.0
  %678 = vmatprep.subr.mxu0 0.0
  %679 = vmatpush2.xpose.msra.mxu0 0.0
  %680 = vmatprep.subr.mxu0 0.0
  %681 = vmatpush2.xpose.msra.mxu0 0.0
  %682 = vmatprep.subr.mxu0 0.0
  %683 = vmatpush2.xpose.msra.mxu0 0.0
  %684 = vmatprep.subr.mxu0 0.0
  %685 = vmatpush2.xpose.msra.mxu0 0.0
  %686 = vmatprep.subr.mxu0 0.0
  %687 = vmatpush2.xpose.msra.mxu0 0.0
  %688 = vmatprep.subr.mxu0 0.0
  %689 = vmatpush2.xpose.msra.mxu0 0.0
  %690 = vmatprep.subr.mxu0 0.0
  %691 = vmatpush2.xpose.msra.mxu0 0.0
  %692 = vmatprep.subr.mxu0 0.0
  %693 = vmatpush2.xpose.msra.mxu0 0.0
  %694 = vmatprep.subr.mxu0 0.0
  %695 = vmatpush2.xpose.msra.mxu0 0.0
  %696 = vmatprep.subr.mxu0 0.0
  %697 = vmatpush2.xpose.msra.mxu0 0.0
  %698 = vmatprep.subr.mxu0 0.0
  %699 = vmatpush2.xpose.msra.mxu0 0.0
  %700 = vmatprep.subr.mxu0 0.0
  %701 = vmatpush2.xpose.msra.mxu0 0.0
  %702 = vmatprep.mubr.f32.mxu0 0.0
  %703 = vmatmul.mubr.f32.gmra.mxu0 %v633
  %v704 = vpop.f32.mrf.mxu0
  %v705 = vadd.f32 %v631, %v704
  %v706 = vpop.f32.mrf.mxu0
  %707 = vdwg.mxu0
  %v708 = vsel %vm542, %v705, -inf
  %709 = vmax.xlane.f32.xlu0 %v708
  %v710 = vpop.xlane.xlu0 %709
  %v711 = vsub.f32 %v705, %v710
  %v712 = vmul.f32 %v711, 1.442695
  %v713 = vpow.pop %v712
  %v714 = vsel %vm542, %v713, 0.0
  %715 = vadd.xlane.f32.xlu0 %v714
  %v716 = vpop.xlane.xlu0 %715
  %v717 = vrcp.pop %v716
  %v718 = vmul.f32 %v713, %v717
  %v720 = vsel %vm542, %v718, 0
  %722 = vmatprep.subr.mxu0 0.0
  %723 = vmatpush1.msra.mxu0 0.0
  %724 = vmatprep.subr.mxu0 0.0
  %725 = vmatpush1.msra.mxu0 0.0
  %726 = vmatprep.subr.mxu0 0.0
  %727 = vmatpush1.msra.mxu0 0.0
  %728 = vmatprep.subr.mxu0 0.0
  %729 = vmatpush1.msra.mxu0 0.0
  %730 = vmatprep.subr.mxu0 0.0
  %731 = vmatpush1.msra.mxu0 0.0
  %732 = vmatprep.subr.mxu0 0.0
  %733 = vmatpush1.msra.mxu0 0.0
  %734 = vmatprep.subr.mxu0 0.0
  %735 = vmatpush1.msra.mxu0 0.0
  %736 = vmatprep.subr.mxu0 0.0
  %737 = vmatpush1.msra.mxu0 0.0
  %738 = vmatprep.subr.mxu0 0.0
  %739 = vmatpush1.msra.mxu0 0.0
  %740 = vmatprep.subr.mxu0 0.0
  %741 = vmatpush1.msra.mxu0 0.0
  %742 = vmatprep.subr.mxu0 0.0
  %743 = vmatpush1.msra.mxu0 0.0
  %744 = vmatprep.subr.mxu0 0.0
  %745 = vmatpush1.msra.mxu0 0.0
  %746 = vmatprep.subr.mxu0 0.0
  %747 = vmatpush1.msra.mxu0 0.0
  %748 = vmatprep.subr.mxu0 0.0
  %749 = vmatpush1.msra.mxu0 0.0
  %750 = vmatprep.subr.mxu0 0.0
  %751 = vmatpush1.msra.mxu0 0.0
  %752 = vmatprep.subr.mxu0 0.0
  %753 = vmatpush1.msra.mxu0 %v458
  %754 = vmatprep.subr.mxu0 0.0
  %755 = vmatpush2.msra.mxu0 0.0
  %756 = vmatprep.subr.mxu0 0.0
  %757 = vmatpush2.msra.mxu0 0.0
  %758 = vmatprep.subr.mxu0 0.0
  %759 = vmatpush2.msra.mxu0 0.0
  %760 = vmatprep.subr.mxu0 0.0
  %761 = vmatpush2.msra.mxu0 0.0
  %762 = vmatprep.subr.mxu0 0.0
  %763 = vmatpush2.msra.mxu0 0.0
  %764 = vmatprep.subr.mxu0 0.0
  %765 = vmatpush2.msra.mxu0 0.0
  %766 = vmatprep.subr.mxu0 0.0
  %767 = vmatpush2.msra.mxu0 0.0
  %768 = vmatprep.subr.mxu0 0.0
  %769 = vmatpush2.msra.mxu0 0.0
  %770 = vmatprep.subr.mxu0 0.0
  %771 = vmatpush2.msra.mxu0 0.0
  %772 = vmatprep.subr.mxu0 0.0
  %773 = vmatpush2.msra.mxu0 0.0
  %774 = vmatprep.subr.mxu0 0.0
  %775 = vmatpush2.msra.mxu0 0.0
  %776 = vmatprep.subr.mxu0 0.0
  %777 = vmatpush2.msra.mxu0 0.0
  %778 = vmatprep.subr.mxu0 0.0
  %779 = vmatpush2.msra.mxu0 0.0
  %780 = vmatprep.subr.mxu0 0.0
  %781 = vmatpush2.msra.mxu0 0.0
  %782 = vmatprep.subr.mxu0 0.0
  %783 = vmatpush2.msra.mxu0 0.0
  %784 = vmatprep.subr.mxu0 0.0
  %785 = vmatpush2.msra.mxu0 0.0
  %786 = vmatprep.mubr.f32.mxu0 0.0
  %787 = vmatmul.mubr.f32.gmra.mxu0 %v720
  %v788 = vpop.f32.mrf.mxu0
  %v789 = vadd.f32 0.0, %v788
  %v790 = vpop.f32.mrf.mxu0
  %791 = vdwg.mxu0
  %792 = vst.msk [vmem:[#allocation2 + $0x8] sm:$0xff] %vm465, %v789
  %v793 = vld [vmem:[#allocation2] sm:$0xff]
  %v794 = vld [vmem:[#allocation2 + $0x8] sm:$0xff]
  %s795 = scalar_lea.vmem %s3, 384
  %v796 = vld [vmem:[%s795] sm:$0xff]
  %v797 = vld [vmem:[%s795 + $0x8] sm:$0xff]
  %v798 = vld [vmem:[%s795 + $0x10] sm:$0xff]
  %v799 = vld [vmem:[%s795 + $0x18] sm:$0xff]
  %s800 = scalar_lea.vmem %s3, 32
  %v801 = vld [vmem:[%s800] sm:$0xff]
  %v802 = vld [vmem:[%s800 + $0x8] sm:$0xff]
  %v803 = vld [vmem:[%s800 + $0x10] sm:$0xff]
  %v804 = vld [vmem:[%s800 + $0x18] sm:$0xff]
  %v805 = vld [vmem:[%s4 + $0x1] sm:$0x1]
  %v806 = vlaneseq
  %v807 = vshrl.u32 %v806, 7
  %v808 = vsub.s32 0, %v807
  %v809 = vrot.slane %v805, %v808
  %810 = vmatprep.subr.mxu0 0.0
  %811 = vmatpush1.msra.mxu0 0.0
  %812 = vmatprep.subr.mxu0 0.0
  %813 = vmatpush1.msra.mxu0 0.0
  %814 = vmatprep.subr.mxu0 0.0
  %815 = vmatpush1.msra.mxu0 0.0
  %816 = vmatprep.subr.mxu0 0.0
  %817 = vmatpush1.msra.mxu0 0.0
  %818 = vmatprep.subr.mxu0 0.0
  %819 = vmatpush1.msra.mxu0 0.0
  %820 = vmatprep.subr.mxu0 0.0
  %821 = vmatpush1.msra.mxu0 0.0
  %822 = vmatprep.subr.mxu0 0.0
  %823 = vmatpush1.msra.mxu0 0.0
  %824 = vmatprep.subr.mxu0 0.0
  %825 = vmatpush1.msra.mxu0 0.0
  %826 = vmatprep.subr.mxu0 0.0
  %827 = vmatpush1.msra.mxu0 0.0
  %828 = vmatprep.subr.mxu0 0.0
  %829 = vmatpush1.msra.mxu0 0.0
  %830 = vmatprep.subr.mxu0 0.0
  %831 = vmatpush1.msra.mxu0 0.0
  %832 = vmatprep.subr.mxu0 0.0
  %833 = vmatpush1.msra.mxu0 0.0
  %834 = vmatprep.subr.mxu0 0.0
  %835 = vmatpush1.msra.mxu0 %v804
  %836 = vmatprep.subr.mxu0 0.0
  %837 = vmatpush1.msra.mxu0 %v803
  %838 = vmatprep.subr.mxu0 0.0
  %839 = vmatpush1.msra.mxu0 %v802
  %840 = vmatprep.subr.mxu0 0.0
  %841 = vmatpush1.msra.mxu0 %v801
  %842 = vmatprep.subr.mxu0 0.0
  %843 = vmatpush2.msra.mxu0 0.0
  %844 = vmatprep.subr.mxu0 0.0
  %845 = vmatpush2.msra.mxu0 0.0
  %846 = vmatprep.subr.mxu0 0.0
  %847 = vmatpush2.msra.mxu0 0.0
  %848 = vmatprep.subr.mxu0 0.0
  %849 = vmatpush2.msra.mxu0 0.0
  %850 = vmatprep.subr.mxu0 0.0
  %851 = vmatpush2.msra.mxu0 0.0
  %852 = vmatprep.subr.mxu0 0.0
  %853 = vmatpush2.msra.mxu0 0.0
  %854 = vmatprep.subr.mxu0 0.0
  %855 = vmatpush2.msra.mxu0 0.0
  %856 = vmatprep.subr.mxu0 0.0
  %857 = vmatpush2.msra.mxu0 0.0
  %858 = vmatprep.subr.mxu0 0.0
  %859 = vmatpush2.msra.mxu0 0.0
  %860 = vmatprep.subr.mxu0 0.0
  %861 = vmatpush2.msra.mxu0 0.0
  %862 = vmatprep.subr.mxu0 0.0
  %863 = vmatpush2.msra.mxu0 0.0
  %864 = vmatprep.subr.mxu0 0.0
  %865 = vmatpush2.msra.mxu0 0.0
  %866 = vmatprep.subr.mxu0 0.0
  %867 = vmatpush2.msra.mxu0 0.0
  %868 = vmatprep.subr.mxu0 0.0
  %869 = vmatpush2.msra.mxu0 0.0
  %870 = vmatprep.subr.mxu0 0.0
  %871 = vmatpush2.msra.mxu0 0.0
  %872 = vmatprep.subr.mxu0 0.0
  %873 = vmatpush2.msra.mxu0 0.0
  %874 = vmatprep.mubr.f32.mxu0 0.0
  %875 = vmatmul.mubr.f32.gmra.mxu0 %v221
  %v876 = vpop.f32.mrf.mxu0
  %v877 = vadd.f32 %v809, %v876
  %v878 = vpop.f32.mrf.mxu0
  %879 = vmatprep.mubr.f32.mxu0 0.0
  %880 = vmatmul.mubr.f32.gmra.mxu0 %v224
  %v881 = vpop.f32.mrf.mxu0
  %v882 = vadd.f32 %v809, %v881
  %v883 = vpop.f32.mrf.mxu0
  %884 = vdwg.mxu0
  %s885 = scalar_lea.vmem %s3, 160
  %v886 = vld [vmem:[%s885] sm:$0xff]
  %v887 = vld [vmem:[%s885 + $0x8] sm:$0xff]
  %v888 = vld [vmem:[%s885 + $0x10] sm:$0xff]
  %v889 = vld [vmem:[%s885 + $0x18] sm:$0xff]
  %890 = vmatprep.subr.mxu0 0.0
  %891 = vmatpush1.msra.mxu0 0.0
  %892 = vmatprep.subr.mxu0 0.0
  %893 = vmatpush1.msra.mxu0 0.0
  %894 = vmatprep.subr.mxu0 0.0
  %895 = vmatpush1.msra.mxu0 0.0
  %896 = vmatprep.subr.mxu0 0.0
  %897 = vmatpush1.msra.mxu0 0.0
  %898 = vmatprep.subr.mxu0 0.0
  %899 = vmatpush1.msra.mxu0 0.0
  %900 = vmatprep.subr.mxu0 0.0
  %901 = vmatpush1.msra.mxu0 0.0
  %902 = vmatprep.subr.mxu0 0.0
  %903 = vmatpush1.msra.mxu0 0.0
  %904 = vmatprep.subr.mxu0 0.0
  %905 = vmatpush1.msra.mxu0 0.0
  %906 = vmatprep.subr.mxu0 0.0
  %907 = vmatpush1.msra.mxu0 0.0
  %908 = vmatprep.subr.mxu0 0.0
  %909 = vmatpush1.msra.mxu0 0.0
  %910 = vmatprep.subr.mxu0 0.0
  %911 = vmatpush1.msra.mxu0 0.0
  %912 = vmatprep.subr.mxu0 0.0
  %913 = vmatpush1.msra.mxu0 0.0
  %914 = vmatprep.subr.mxu0 0.0
  %915 = vmatpush1.msra.mxu0 %v889
  %916 = vmatprep.subr.mxu0 0.0
  %917 = vmatpush1.msra.mxu0 %v888
  %918 = vmatprep.subr.mxu0 0.0
  %919 = vmatpush1.msra.mxu0 %v887
  %920 = vmatprep.subr.mxu0 0.0
  %921 = vmatpush1.msra.mxu0 %v886
  %922 = vmatprep.subr.mxu0 0.0
  %923 = vmatpush2.msra.mxu0 0.0
  %924 = vmatprep.subr.mxu0 0.0
  %925 = vmatpush2.msra.mxu0 0.0
  %926 = vmatprep.subr.mxu0 0.0
  %927 = vmatpush2.msra.mxu0 0.0
  %928 = vmatprep.subr.mxu0 0.0
  %929 = vmatpush2.msra.mxu0 0.0
  %930 = vmatprep.subr.mxu0 0.0
  %931 = vmatpush2.msra.mxu0 0.0
  %932 = vmatprep.subr.mxu0 0.0
  %933 = vmatpush2.msra.mxu0 0.0
  %934 = vmatprep.subr.mxu0 0.0
  %935 = vmatpush2.msra.mxu0 0.0
  %936 = vmatprep.subr.mxu0 0.0
  %937 = vmatpush2.msra.mxu0 0.0
  %938 = vmatprep.subr.mxu0 0.0
  %939 = vmatpush2.msra.mxu0 0.0
  %940 = vmatprep.subr.mxu0 0.0
  %941 = vmatpush2.msra.mxu0 0.0
  %942 = vmatprep.subr.mxu0 0.0
  %943 = vmatpush2.msra.mxu0 0.0
  %944 = vmatprep.subr.mxu0 0.0
  %945 = vmatpush2.msra.mxu0 0.0
  %946 = vmatprep.subr.mxu0 0.0
  %947 = vmatpush2.msra.mxu0 0.0
  %948 = vmatprep.subr.mxu0 0.0
  %949 = vmatpush2.msra.mxu0 0.0
  %950 = vmatprep.subr.mxu0 0.0
  %951 = vmatpush2.msra.mxu0 0.0
  %952 = vmatprep.subr.mxu0 0.0
  %953 = vmatpush2.msra.mxu0 0.0
  %954 = vmatprep.mubr.f32.mxu0 0.0
  %955 = vmatmul.mubr.f32.gmra.mxu0 %v221
  %v956 = vpop.f32.mrf.mxu0
  %v957 = vadd.f32 0.0, %v956
  %v958 = vpop.f32.mrf.mxu0
  %959 = vmatprep.mubr.f32.mxu0 0.0
  %960 = vmatmul.mubr.f32.gmra.mxu0 %v224
  %v961 = vpop.f32.mrf.mxu0
  %v962 = vadd.f32 0.0, %v961
  %v963 = vpop.f32.mrf.mxu0
  %964 = vdwg.mxu0
  %s965 = scalar_lea.vmem %s3, 288
  %v966 = vld [vmem:[%s965] sm:$0xff]
  %v967 = vld [vmem:[%s965 + $0x8] sm:$0xff]
  %v968 = vld [vmem:[%s965 + $0x10] sm:$0xff]
  %v969 = vld [vmem:[%s965 + $0x18] sm:$0xff]
  %970 = vmatprep.subr.mxu0 0.0
  %971 = vmatpush1.msra.mxu0 0.0
  %972 = vmatprep.subr.mxu0 0.0
  %973 = vmatpush1.msra.mxu0 0.0
  %974 = vmatprep.subr.mxu0 0.0
  %975 = vmatpush1.msra.mxu0 0.0
  %976 = vmatprep.subr.mxu0 0.0
  %977 = vmatpush1.msra.mxu0 0.0
  %978 = vmatprep.subr.mxu0 0.0
  %979 = vmatpush1.msra.mxu0 0.0
  %980 = vmatprep.subr.mxu0 0.0
  %981 = vmatpush1.msra.mxu0 0.0
  %982 = vmatprep.subr.mxu0 0.0
  %983 = vmatpush1.msra.mxu0 0.0
  %984 = vmatprep.subr.mxu0 0.0
  %985 = vmatpush1.msra.mxu0 0.0
  %986 = vmatprep.subr.mxu0 0.0
  %987 = vmatpush1.msra.mxu0 0.0
  %988 = vmatprep.subr.mxu0 0.0
  %989 = vmatpush1.msra.mxu0 0.0
  %990 = vmatprep.subr.mxu0 0.0
  %991 = vmatpush1.msra.mxu0 0.0
  %992 = vmatprep.subr.mxu0 0.0
  %993 = vmatpush1.msra.mxu0 0.0
  %994 = vmatprep.subr.mxu0 0.0
  %995 = vmatpush1.msra.mxu0 %v969
  %996 = vmatprep.subr.mxu0 0.0
  %997 = vmatpush1.msra.mxu0 %v968
  %998 = vmatprep.subr.mxu0 0.0
  %999 = vmatpush1.msra.mxu0 %v967
  %1000 = vmatprep.subr.mxu0 0.0
  %1001 = vmatpush1.msra.mxu0 %v966
  %1002 = vmatprep.subr.mxu0 0.0
  %1003 = vmatpush2.msra.mxu0 0.0
  %1004 = vmatprep.subr.mxu0 0.0
  %1005 = vmatpush2.msra.mxu0 0.0
  %1006 = vmatprep.subr.mxu0 0.0
  %1007 = vmatpush2.msra.mxu0 0.0
  %1008 = vmatprep.subr.mxu0 0.0
  %1009 = vmatpush2.msra.mxu0 0.0
  %1010 = vmatprep.subr.mxu0 0.0
  %1011 = vmatpush2.msra.mxu0 0.0
  %1012 = vmatprep.subr.mxu0 0.0
  %1013 = vmatpush2.msra.mxu0 0.0
  %1014 = vmatprep.subr.mxu0 0.0
  %1015 = vmatpush2.msra.mxu0 0.0
  %1016 = vmatprep.subr.mxu0 0.0
  %1017 = vmatpush2.msra.mxu0 0.0
  %1018 = vmatprep.subr.mxu0 0.0
  %1019 = vmatpush2.msra.mxu0 0.0
  %1020 = vmatprep.subr.mxu0 0.0
  %1021 = vmatpush2.msra.mxu0 0.0
  %1022 = vmatprep.subr.mxu0 0.0
  %1023 = vmatpush2.msra.mxu0 0.0
  %1024 = vmatprep.subr.mxu0 0.0
  %1025 = vmatpush2.msra.mxu0 0.0
  %1026 = vmatprep.subr.mxu0 0.0
  %1027 = vmatpush2.msra.mxu0 0.0
  %1028 = vmatprep.subr.mxu0 0.0
  %1029 = vmatpush2.msra.mxu0 0.0
  %1030 = vmatprep.subr.mxu0 0.0
  %1031 = vmatpush2.msra.mxu0 0.0
  %1032 = vmatprep.subr.mxu0 0.0
  %1033 = vmatpush2.msra.mxu0 0.0
  %1034 = vmatprep.mubr.f32.mxu0 0.0
  %1035 = vmatmul.mubr.f32.gmra.mxu0 %v221
  %v1036 = vpop.f32.mrf.mxu0
  %v1037 = vadd.f32 0.0, %v1036
  %v1038 = vpop.f32.mrf.mxu0
  %1039 = vmatprep.mubr.f32.mxu0 0.0
  %1040 = vmatmul.mubr.f32.gmra.mxu0 %v224
  %v1041 = vpop.f32.mrf.mxu0
  %v1042 = vadd.f32 0.0, %v1041
  %v1043 = vpop.f32.mrf.mxu0
  %1044 = vdwg.mxu0
  %v1046 = vsel %vm465, %v877, 0
  %v1049 = vsel %vm465, %v957, 0
  %1051 = vmatprep.subr.mxu0 0.0
  %1052 = vmatpush1.xpose.msra.mxu0 0.0
  %1053 = vmatprep.subr.mxu0 0.0
  %1054 = vmatpush1.xpose.msra.mxu0 0.0
  %1055 = vmatprep.subr.mxu0 0.0
  %1056 = vmatpush1.xpose.msra.mxu0 0.0
  %1057 = vmatprep.subr.mxu0 0.0
  %1058 = vmatpush1.xpose.msra.mxu0 0.0
  %1059 = vmatprep.subr.mxu0 0.0
  %1060 = vmatpush1.xpose.msra.mxu0 0.0
  %1061 = vmatprep.subr.mxu0 0.0
  %1062 = vmatpush1.xpose.msra.mxu0 0.0
  %1063 = vmatprep.subr.mxu0 0.0
  %1064 = vmatpush1.xpose.msra.mxu0 0.0
  %1065 = vmatprep.subr.mxu0 0.0
  %1066 = vmatpush1.xpose.msra.mxu0 0.0
  %1067 = vmatprep.subr.mxu0 0.0
  %1068 = vmatpush1.xpose.msra.mxu0 0.0
  %1069 = vmatprep.subr.mxu0 0.0
  %1070 = vmatpush1.xpose.msra.mxu0 0.0
  %1071 = vmatprep.subr.mxu0 0.0
  %1072 = vmatpush1.xpose.msra.mxu0 0.0
  %1073 = vmatprep.subr.mxu0 0.0
  %1074 = vmatpush1.xpose.msra.mxu0 0.0
  %1075 = vmatprep.subr.mxu0 0.0
  %1076 = vmatpush1.xpose.msra.mxu0 0.0
  %1077 = vmatprep.subr.mxu0 0.0
  %1078 = vmatpush1.xpose.msra.mxu0 0.0
  %1079 = vmatprep.subr.mxu0 0.0
  %1080 = vmatpush1.xpose.msra.mxu0 0.0
  %1081 = vmatprep.subr.mxu0 0.0
  %1082 = vmatpush1.xpose.msra.mxu0 %v1049
  %1083 = vmatprep.subr.mxu0 0.0
  %1084 = vmatpush2.xpose.msra.mxu0 0.0
  %1085 = vmatprep.subr.mxu0 0.0
  %1086 = vmatpush2.xpose.msra.mxu0 0.0
  %1087 = vmatprep.subr.mxu0 0.0
  %1088 = vmatpush2.xpose.msra.mxu0 0.0
  %1089 = vmatprep.subr.mxu0 0.0
  %1090 = vmatpush2.xpose.msra.mxu0 0.0
  %1091 = vmatprep.subr.mxu0 0.0
  %1092 = vmatpush2.xpose.msra.mxu0 0.0
  %1093 = vmatprep.subr.mxu0 0.0
  %1094 = vmatpush2.xpose.msra.mxu0 0.0
  %1095 = vmatprep.subr.mxu0 0.0
  %1096 = vmatpush2.xpose.msra.mxu0 0.0
  %1097 = vmatprep.subr.mxu0 0.0
  %1098 = vmatpush2.xpose.msra.mxu0 0.0
  %1099 = vmatprep.subr.mxu0 0.0
  %1100 = vmatpush2.xpose.msra.mxu0 0.0
  %1101 = vmatprep.subr.mxu0 0.0
  %1102 = vmatpush2.xpose.msra.mxu0 0.0
  %1103 = vmatprep.subr.mxu0 0.0
  %1104 = vmatpush2.xpose.msra.mxu0 0.0
  %1105 = vmatprep.subr.mxu0 0.0
  %1106 = vmatpush2.xpose.msra.mxu0 0.0
  %1107 = vmatprep.subr.mxu0 0.0
  %1108 = vmatpush2.xpose.msra.mxu0 0.0
  %1109 = vmatprep.subr.mxu0 0.0
  %1110 = vmatpush2.xpose.msra.mxu0 0.0
  %1111 = vmatprep.subr.mxu0 0.0
  %1112 = vmatpush2.xpose.msra.mxu0 0.0
  %1113 = vmatprep.subr.mxu0 0.0
  %1114 = vmatpush2.xpose.msra.mxu0 0.0
  %1115 = vmatprep.mubr.f32.mxu0 0.0
  %1116 = vmatmul.mubr.f32.gmra.mxu0 %v1046
  %v1117 = vpop.f32.mrf.mxu0
  %v1118 = vadd.f32 %v464, %v1117
  %v1119 = vpop.f32.mrf.mxu0
  %1120 = vdwg.mxu0
  %v1121 = vsel %vm542, %v1118, -inf
  %1122 = vmax.xlane.f32.xlu0 %v1121
  %v1123 = vpop.xlane.xlu0 %1122
  %v1124 = vsub.f32 %v1118, %v1123
  %v1125 = vmul.f32 %v1124, 1.442695
  %v1126 = vpow.pop %v1125
  %v1127 = vsel %vm542, %v1126, 0.0
  %1128 = vadd.xlane.f32.xlu0 %v1127
  %v1129 = vpop.xlane.xlu0 %1128
  %v1130 = vrcp.pop %v1129
  %v1131 = vmul.f32 %v1126, %v1130
  %v1133 = vsel %vm542, %v1131, 0
  %1135 = vmatprep.subr.mxu0 0.0
  %1136 = vmatpush1.msra.mxu0 0.0
  %1137 = vmatprep.subr.mxu0 0.0
  %1138 = vmatpush1.msra.mxu0 0.0
  %1139 = vmatprep.subr.mxu0 0.0
  %1140 = vmatpush1.msra.mxu0 0.0
  %1141 = vmatprep.subr.mxu0 0.0
  %1142 = vmatpush1.msra.mxu0 0.0
  %1143 = vmatprep.subr.mxu0 0.0
  %1144 = vmatpush1.msra.mxu0 0.0
  %1145 = vmatprep.subr.mxu0 0.0
  %1146 = vmatpush1.msra.mxu0 0.0
  %1147 = vmatprep.subr.mxu0 0.0
  %1148 = vmatpush1.msra.mxu0 0.0
  %1149 = vmatprep.subr.mxu0 0.0
  %1150 = vmatpush1.msra.mxu0 0.0
  %1151 = vmatprep.subr.mxu0 0.0
  %1152 = vmatpush1.msra.mxu0 0.0
  %1153 = vmatprep.subr.mxu0 0.0
  %1154 = vmatpush1.msra.mxu0 0.0
  %1155 = vmatprep.subr.mxu0 0.0
  %1156 = vmatpush1.msra.mxu0 0.0
  %1157 = vmatprep.subr.mxu0 0.0
  %1158 = vmatpush1.msra.mxu0 0.0
  %1159 = vmatprep.subr.mxu0 0.0
  %1160 = vmatpush1.msra.mxu0 0.0
  %1161 = vmatprep.subr.mxu0 0.0
  %1162 = vmatpush1.msra.mxu0 0.0
  %1163 = vmatprep.subr.mxu0 0.0
  %1164 = vmatpush1.msra.mxu0 0.0
  %1165 = vmatprep.subr.mxu0 0.0
  %1166 = vmatpush1.msra.mxu0 %v1037
  %1167 = vmatprep.subr.mxu0 0.0
  %1168 = vmatpush2.msra.mxu0 0.0
  %1169 = vmatprep.subr.mxu0 0.0
  %1170 = vmatpush2.msra.mxu0 0.0
  %1171 = vmatprep.subr.mxu0 0.0
  %1172 = vmatpush2.msra.mxu0 0.0
  %1173 = vmatprep.subr.mxu0 0.0
  %1174 = vmatpush2.msra.mxu0 0.0
  %1175 = vmatprep.subr.mxu0 0.0
  %1176 = vmatpush2.msra.mxu0 0.0
  %1177 = vmatprep.subr.mxu0 0.0
  %1178 = vmatpush2.msra.mxu0 0.0
  %1179 = vmatprep.subr.mxu0 0.0
  %1180 = vmatpush2.msra.mxu0 0.0
  %1181 = vmatprep.subr.mxu0 0.0
  %1182 = vmatpush2.msra.mxu0 0.0
  %1183 = vmatprep.subr.mxu0 0.0
  %1184 = vmatpush2.msra.mxu0 0.0
  %1185 = vmatprep.subr.mxu0 0.0
  %1186 = vmatpush2.msra.mxu0 0.0
  %1187 = vmatprep.subr.mxu0 0.0
  %1188 = vmatpush2.msra.mxu0 0.0
  %1189 = vmatprep.subr.mxu0 0.0
  %1190 = vmatpush2.msra.mxu0 0.0
  %1191 = vmatprep.subr.mxu0 0.0
  %1192 = vmatpush2.msra.mxu0 0.0
  %1193 = vmatprep.subr.mxu0 0.0
  %1194 = vmatpush2.msra.mxu0 0.0
  %1195 = vmatprep.subr.mxu0 0.0
  %1196 = vmatpush2.msra.mxu0 0.0
  %1197 = vmatprep.subr.mxu0 0.0
  %1198 = vmatpush2.msra.mxu0 0.0
  %1199 = vmatprep.mubr.f32.mxu0 0.0
  %1200 = vmatmul.mubr.f32.gmra.mxu0 %v1133
  %v1201 = vpop.f32.mrf.mxu0
  %v1202 = vadd.f32 0.0, %v1201
  %v1203 = vpop.f32.mrf.mxu0
  %1204 = vdwg.mxu0
  %1205 = vst.msk [vmem:[#allocation2] sm:$0xff] %vm465, %v1202
  %v1207 = vsel %vm465, %v882, 0
  %v1210 = vsel %vm465, %v962, 0
  %1212 = vmatprep.subr.mxu0 0.0
  %1213 = vmatpush1.xpose.msra.mxu0 0.0
  %1214 = vmatprep.subr.mxu0 0.0
  %1215 = vmatpush1.xpose.msra.mxu0 0.0
  %1216 = vmatprep.subr.mxu0 0.0
  %1217 = vmatpush1.xpose.msra.mxu0 0.0
  %1218 = vmatprep.subr.mxu0 0.0
  %1219 = vmatpush1.xpose.msra.mxu0 0.0
  %1220 = vmatprep.subr.mxu0 0.0
  %1221 = vmatpush1.xpose.msra.mxu0 0.0
  %1222 = vmatprep.subr.mxu0 0.0
  %1223 = vmatpush1.xpose.msra.mxu0 0.0
  %1224 = vmatprep.subr.mxu0 0.0
  %1225 = vmatpush1.xpose.msra.mxu0 0.0
  %1226 = vmatprep.subr.mxu0 0.0
  %1227 = vmatpush1.xpose.msra.mxu0 0.0
  %1228 = vmatprep.subr.mxu0 0.0
  %1229 = vmatpush1.xpose.msra.mxu0 0.0
  %1230 = vmatprep.subr.mxu0 0.0
  %1231 = vmatpush1.xpose.msra.mxu0 0.0
  %1232 = vmatprep.subr.mxu0 0.0
  %1233 = vmatpush1.xpose.msra.mxu0 0.0
  %1234 = vmatprep.subr.mxu0 0.0
  %1235 = vmatpush1.xpose.msra.mxu0 0.0
  %1236 = vmatprep.subr.mxu0 0.0
  %1237 = vmatpush1.xpose.msra.mxu0 0.0
  %1238 = vmatprep.subr.mxu0 0.0
  %1239 = vmatpush1.xpose.msra.mxu0 0.0
  %1240 = vmatprep.subr.mxu0 0.0
  %1241 = vmatpush1.xpose.msra.mxu0 0.0
  %1242 = vmatprep.subr.mxu0 0.0
  %1243 = vmatpush1.xpose.msra.mxu0 %v1210
  %1244 = vmatprep.subr.mxu0 0.0
  %1245 = vmatpush2.xpose.msra.mxu0 0.0
  %1246 = vmatprep.subr.mxu0 0.0
  %1247 = vmatpush2.xpose.msra.mxu0 0.0
  %1248 = vmatprep.subr.mxu0 0.0
  %1249 = vmatpush2.xpose.msra.mxu0 0.0
  %1250 = vmatprep.subr.mxu0 0.0
  %1251 = vmatpush2.xpose.msra.mxu0 0.0
  %1252 = vmatprep.subr.mxu0 0.0
  %1253 = vmatpush2.xpose.msra.mxu0 0.0
  %1254 = vmatprep.subr.mxu0 0.0
  %1255 = vmatpush2.xpose.msra.mxu0 0.0
  %1256 = vmatprep.subr.mxu0 0.0
  %1257 = vmatpush2.xpose.msra.mxu0 0.0
  %1258 = vmatprep.subr.mxu0 0.0
  %1259 = vmatpush2.xpose.msra.mxu0 0.0
  %1260 = vmatprep.subr.mxu0 0.0
  %1261 = vmatpush2.xpose.msra.mxu0 0.0
  %1262 = vmatprep.subr.mxu0 0.0
  %1263 = vmatpush2.xpose.msra.mxu0 0.0
  %1264 = vmatprep.subr.mxu0 0.0
  %1265 = vmatpush2.xpose.msra.mxu0 0.0
  %1266 = vmatprep.subr.mxu0 0.0
  %1267 = vmatpush2.xpose.msra.mxu0 0.0
  %1268 = vmatprep.subr.mxu0 0.0
  %1269 = vmatpush2.xpose.msra.mxu0 0.0
  %1270 = vmatprep.subr.mxu0 0.0
  %1271 = vmatpush2.xpose.msra.mxu0 0.0
  %1272 = vmatprep.subr.mxu0 0.0
  %1273 = vmatpush2.xpose.msra.mxu0 0.0
  %1274 = vmatprep.subr.mxu0 0.0
  %1275 = vmatpush2.xpose.msra.mxu0 0.0
  %1276 = vmatprep.mubr.f32.mxu0 0.0
  %1277 = vmatmul.mubr.f32.gmra.mxu0 %v1207
  %v1278 = vpop.f32.mrf.mxu0
  %v1279 = vadd.f32 %v631, %v1278
  %v1280 = vpop.f32.mrf.mxu0
  %1281 = vdwg.mxu0
  %v1282 = vsel %vm542, %v1279, -inf
  %1283 = vmax.xlane.f32.xlu0 %v1282
  %v1284 = vpop.xlane.xlu0 %1283
  %v1285 = vsub.f32 %v1279, %v1284
  %v1286 = vmul.f32 %v1285, 1.442695
  %v1287 = vpow.pop %v1286
  %v1288 = vsel %vm542, %v1287, 0.0
  %1289 = vadd.xlane.f32.xlu0 %v1288
  %v1290 = vpop.xlane.xlu0 %1289
  %v1291 = vrcp.pop %v1290
  %v1292 = vmul.f32 %v1287, %v1291
  %v1294 = vsel %vm542, %v1292, 0
  %1296 = vmatprep.subr.mxu0 0.0
  %1297 = vmatpush1.msra.mxu0 0.0
  %1298 = vmatprep.subr.mxu0 0.0
  %1299 = vmatpush1.msra.mxu0 0.0
  %1300 = vmatprep.subr.mxu0 0.0
  %1301 = vmatpush1.msra.mxu0 0.0
  %1302 = vmatprep.subr.mxu0 0.0
  %1303 = vmatpush1.msra.mxu0 0.0
  %1304 = vmatprep.subr.mxu0 0.0
  %1305 = vmatpush1.msra.mxu0 0.0
  %1306 = vmatprep.subr.mxu0 0.0
  %1307 = vmatpush1.msra.mxu0 0.0
  %1308 = vmatprep.subr.mxu0 0.0
  %1309 = vmatpush1.msra.mxu0 0.0
  %1310 = vmatprep.subr.mxu0 0.0
  %1311 = vmatpush1.msra.mxu0 0.0
  %1312 = vmatprep.subr.mxu0 0.0
  %1313 = vmatpush1.msra.mxu0 0.0
  %1314 = vmatprep.subr.mxu0 0.0
  %1315 = vmatpush1.msra.mxu0 0.0
  %1316 = vmatprep.subr.mxu0 0.0
  %1317 = vmatpush1.msra.mxu0 0.0
  %1318 = vmatprep.subr.mxu0 0.0
  %1319 = vmatpush1.msra.mxu0 0.0
  %1320 = vmatprep.subr.mxu0 0.0
  %1321 = vmatpush1.msra.mxu0 0.0
  %1322 = vmatprep.subr.mxu0 0.0
  %1323 = vmatpush1.msra.mxu0 0.0
  %1324 = vmatprep.subr.mxu0 0.0
  %1325 = vmatpush1.msra.mxu0 0.0
  %1326 = vmatprep.subr.mxu0 0.0
  %1327 = vmatpush1.msra.mxu0 %v1042
  %1328 = vmatprep.subr.mxu0 0.0
  %1329 = vmatpush2.msra.mxu0 0.0
  %1330 = vmatprep.subr.mxu0 0.0
  %1331 = vmatpush2.msra.mxu0 0.0
  %1332 = vmatprep.subr.mxu0 0.0
  %1333 = vmatpush2.msra.mxu0 0.0
  %1334 = vmatprep.subr.mxu0 0.0
  %1335 = vmatpush2.msra.mxu0 0.0
  %1336 = vmatprep.subr.mxu0 0.0
  %1337 = vmatpush2.msra.mxu0 0.0
  %1338 = vmatprep.subr.mxu0 0.0
  %1339 = vmatpush2.msra.mxu0 0.0
  %1340 = vmatprep.subr.mxu0 0.0
  %1341 = vmatpush2.msra.mxu0 0.0
  %1342 = vmatprep.subr.mxu0 0.0
  %1343 = vmatpush2.msra.mxu0 0.0
  %1344 = vmatprep.subr.mxu0 0.0
  %1345 = vmatpush2.msra.mxu0 0.0
  %1346 = vmatprep.subr.mxu0 0.0
  %1347 = vmatpush2.msra.mxu0 0.0
  %1348 = vmatprep.subr.mxu0 0.0
  %1349 = vmatpush2.msra.mxu0 0.0
  %1350 = vmatprep.subr.mxu0 0.0
  %1351 = vmatpush2.msra.mxu0 0.0
  %1352 = vmatprep.subr.mxu0 0.0
  %1353 = vmatpush2.msra.mxu0 0.0
  %1354 = vmatprep.subr.mxu0 0.0
  %1355 = vmatpush2.msra.mxu0 0.0
  %1356 = vmatprep.subr.mxu0 0.0
  %1357 = vmatpush2.msra.mxu0 0.0
  %1358 = vmatprep.subr.mxu0 0.0
  %1359 = vmatpush2.msra.mxu0 0.0
  %1360 = vmatprep.mubr.f32.mxu0 0.0
  %1361 = vmatmul.mubr.f32.gmra.mxu0 %v1294
  %v1362 = vpop.f32.mrf.mxu0
  %v1363 = vadd.f32 0.0, %v1362
  %v1364 = vpop.f32.mrf.mxu0
  %1365 = vdwg.mxu0
  %1366 = vst.msk [vmem:[#allocation2 + $0x8] sm:$0xff] %vm465, %v1363
  %v1367 = vld [vmem:[#allocation2] sm:$0xff]
  %v1368 = vld [vmem:[#allocation2 + $0x8] sm:$0xff]
  %s1369 = scalar_lea.vmem %s3, 416
  %v1370 = vld [vmem:[%s1369] sm:$0xff]
  %v1371 = vld [vmem:[%s1369 + $0x8] sm:$0xff]
  %v1372 = vld [vmem:[%s1369 + $0x10] sm:$0xff]
  %v1373 = vld [vmem:[%s1369 + $0x18] sm:$0xff]
  %v1375 = vsel %vm465, %v1367, 0
  %v1378 = vsel %vm465, %v1368, 0
  %v1381 = vsel %vm465, %v1370, 0
  %v1384 = vsel %vm465, %v1371, 0
  %v1387 = vsel %vm465, %v1372, 0
  %v1390 = vsel %vm465, %v1373, 0
  %1392 = vmatprep.subr.mxu0 0.0
  %1393 = vmatpush1.xpose.msra.mxu0 0.0
  %1394 = vmatprep.subr.mxu0 0.0
  %1395 = vmatpush1.xpose.msra.mxu0 0.0
  %1396 = vmatprep.subr.mxu0 0.0
  %1397 = vmatpush1.xpose.msra.mxu0 0.0
  %1398 = vmatprep.subr.mxu0 0.0
  %1399 = vmatpush1.xpose.msra.mxu0 0.0
  %1400 = vmatprep.subr.mxu0 0.0
  %1401 = vmatpush1.xpose.msra.mxu0 0.0
  %1402 = vmatprep.subr.mxu0 0.0
  %1403 = vmatpush1.xpose.msra.mxu0 0.0
  %1404 = vmatprep.subr.mxu0 0.0
  %1405 = vmatpush1.xpose.msra.mxu0 0.0
  %1406 = vmatprep.subr.mxu0 0.0
  %1407 = vmatpush1.xpose.msra.mxu0 0.0
  %1408 = vmatprep.subr.mxu0 0.0
  %1409 = vmatpush1.xpose.msra.mxu0 0.0
  %1410 = vmatprep.subr.mxu0 0.0
  %1411 = vmatpush1.xpose.msra.mxu0 0.0
  %1412 = vmatprep.subr.mxu0 0.0
  %1413 = vmatpush1.xpose.msra.mxu0 0.0
  %1414 = vmatprep.subr.mxu0 0.0
  %1415 = vmatpush1.xpose.msra.mxu0 0.0
  %1416 = vmatprep.subr.mxu0 0.0
  %1417 = vmatpush1.xpose.msra.mxu0 %v1390
  %1418 = vmatprep.subr.mxu0 0.0
  %1419 = vmatpush1.xpose.msra.mxu0 %v1387
  %1420 = vmatprep.subr.mxu0 0.0
  %1421 = vmatpush1.xpose.msra.mxu0 %v1384
  %1422 = vmatprep.subr.mxu0 0.0
  %1423 = vmatpush1.xpose.msra.mxu0 %v1381
  %1424 = vmatprep.subr.mxu0 0.0
  %1425 = vmatpush2.xpose.msra.mxu0 0.0
  %1426 = vmatprep.subr.mxu0 0.0
  %1427 = vmatpush2.xpose.msra.mxu0 0.0
  %1428 = vmatprep.subr.mxu0 0.0
  %1429 = vmatpush2.xpose.msra.mxu0 0.0
  %1430 = vmatprep.subr.mxu0 0.0
  %1431 = vmatpush2.xpose.msra.mxu0 0.0
  %1432 = vmatprep.subr.mxu0 0.0
  %1433 = vmatpush2.xpose.msra.mxu0 0.0
  %1434 = vmatprep.subr.mxu0 0.0
  %1435 = vmatpush2.xpose.msra.mxu0 0.0
  %1436 = vmatprep.subr.mxu0 0.0
  %1437 = vmatpush2.xpose.msra.mxu0 0.0
  %1438 = vmatprep.subr.mxu0 0.0
  %1439 = vmatpush2.xpose.msra.mxu0 0.0
  %1440 = vmatprep.subr.mxu0 0.0
  %1441 = vmatpush2.xpose.msra.mxu0 0.0
  %1442 = vmatprep.subr.mxu0 0.0
  %1443 = vmatpush2.xpose.msra.mxu0 0.0
  %1444 = vmatprep.subr.mxu0 0.0
  %1445 = vmatpush2.xpose.msra.mxu0 0.0
  %1446 = vmatprep.subr.mxu0 0.0
  %1447 = vmatpush2.xpose.msra.mxu0 0.0
  %1448 = vmatprep.subr.mxu0 0.0
  %1449 = vmatpush2.xpose.msra.mxu0 0.0
  %1450 = vmatprep.subr.mxu0 0.0
  %1451 = vmatpush2.xpose.msra.mxu0 0.0
  %1452 = vmatprep.subr.mxu0 0.0
  %1453 = vmatpush2.xpose.msra.mxu0 0.0
  %1454 = vmatprep.subr.mxu0 0.0
  %1455 = vmatpush2.xpose.msra.mxu0 0.0
  %1456 = vmatprep.mubr.f32.mxu0 0.0
  %1457 = vmatmul.mubr.f32.gmra.mxu0 %v1375
  %v1458 = vpop.f32.mrf.mxu0
  %v1459 = vadd.f32 0.0, %v1458
  %v1460 = vpop.f32.mrf.mxu0
  %1461 = vmatprep.mubr.f32.mxu0 0.0
  %1462 = vmatmul.mubr.f32.gmra.mxu0 %v1378
  %v1463 = vpop.f32.mrf.mxu0
  %v1464 = vadd.f32 0.0, %v1463
  %v1465 = vpop.f32.mrf.mxu0
  %1466 = vdwg.mxu0
  %v1468 = vsel %vm465, %v793, 0
  %v1471 = vsel %vm465, %v794, 0
  %v1474 = vsel %vm465, %v796, 0
  %v1477 = vsel %vm465, %v797, 0
  %v1480 = vsel %vm465, %v798, 0
  %v1483 = vsel %vm465, %v799, 0
  %1485 = vmatprep.subr.mxu0 0.0
  %1486 = vmatpush1.xpose.msra.mxu0 0.0
  %1487 = vmatprep.subr.mxu0 0.0
  %1488 = vmatpush1.xpose.msra.mxu0 0.0
  %1489 = vmatprep.subr.mxu0 0.0
  %1490 = vmatpush1.xpose.msra.mxu0 0.0
  %1491 = vmatprep.subr.mxu0 0.0
  %1492 = vmatpush1.xpose.msra.mxu0 0.0
  %1493 = vmatprep.subr.mxu0 0.0
  %1494 = vmatpush1.xpose.msra.mxu0 0.0
  %1495 = vmatprep.subr.mxu0 0.0
  %1496 = vmatpush1.xpose.msra.mxu0 0.0
  %1497 = vmatprep.subr.mxu0 0.0
  %1498 = vmatpush1.xpose.msra.mxu0 0.0
  %1499 = vmatprep.subr.mxu0 0.0
  %1500 = vmatpush1.xpose.msra.mxu0 0.0
  %1501 = vmatprep.subr.mxu0 0.0
  %1502 = vmatpush1.xpose.msra.mxu0 0.0
  %1503 = vmatprep.subr.mxu0 0.0
  %1504 = vmatpush1.xpose.msra.mxu0 0.0
  %1505 = vmatprep.subr.mxu0 0.0
  %1506 = vmatpush1.xpose.msra.mxu0 0.0
  %1507 = vmatprep.subr.mxu0 0.0
  %1508 = vmatpush1.xpose.msra.mxu0 0.0
  %1509 = vmatprep.subr.mxu0 0.0
  %1510 = vmatpush1.xpose.msra.mxu0 %v1483
  %1511 = vmatprep.subr.mxu0 0.0
  %1512 = vmatpush1.xpose.msra.mxu0 %v1480
  %1513 = vmatprep.subr.mxu0 0.0
  %1514 = vmatpush1.xpose.msra.mxu0 %v1477
  %1515 = vmatprep.subr.mxu0 0.0
  %1516 = vmatpush1.xpose.msra.mxu0 %v1474
  %1517 = vmatprep.subr.mxu0 0.0
  %1518 = vmatpush2.xpose.msra.mxu0 0.0
  %1519 = vmatprep.subr.mxu0 0.0
  %1520 = vmatpush2.xpose.msra.mxu0 0.0
  %1521 = vmatprep.subr.mxu0 0.0
  %1522 = vmatpush2.xpose.msra.mxu0 0.0
  %1523 = vmatprep.subr.mxu0 0.0
  %1524 = vmatpush2.xpose.msra.mxu0 0.0
  %1525 = vmatprep.subr.mxu0 0.0
  %1526 = vmatpush2.xpose.msra.mxu0 0.0
  %1527 = vmatprep.subr.mxu0 0.0
  %1528 = vmatpush2.xpose.msra.mxu0 0.0
  %1529 = vmatprep.subr.mxu0 0.0
  %1530 = vmatpush2.xpose.msra.mxu0 0.0
  %1531 = vmatprep.subr.mxu0 0.0
  %1532 = vmatpush2.xpose.msra.mxu0 0.0
  %1533 = vmatprep.subr.mxu0 0.0
  %1534 = vmatpush2.xpose.msra.mxu0 0.0
  %1535 = vmatprep.subr.mxu0 0.0
  %1536 = vmatpush2.xpose.msra.mxu0 0.0
  %1537 = vmatprep.subr.mxu0 0.0
  %1538 = vmatpush2.xpose.msra.mxu0 0.0
  %1539 = vmatprep.subr.mxu0 0.0
  %1540 = vmatpush2.xpose.msra.mxu0 0.0
  %1541 = vmatprep.subr.mxu0 0.0
  %1542 = vmatpush2.xpose.msra.mxu0 0.0
  %1543 = vmatprep.subr.mxu0 0.0
  %1544 = vmatpush2.xpose.msra.mxu0 0.0
  %1545 = vmatprep.subr.mxu0 0.0
  %1546 = vmatpush2.xpose.msra.mxu0 0.0
  %1547 = vmatprep.subr.mxu0 0.0
  %1548 = vmatpush2.xpose.msra.mxu0 0.0
  %1549 = vmatprep.mubr.f32.mxu0 0.0
  %1550 = vmatmul.mubr.f32.gmra.mxu0 %v1468
  %v1551 = vpop.f32.mrf.mxu0
  %v1552 = vadd.f32 %v1459, %v1551
  %v1553 = vpop.f32.mrf.mxu0
  %1554 = vmatprep.mubr.f32.mxu0 0.0
  %1555 = vmatmul.mubr.f32.gmra.mxu0 %v1471
  %v1556 = vpop.f32.mrf.mxu0
  %v1557 = vadd.f32 %v1464, %v1556
  %v1558 = vpop.f32.mrf.mxu0
  %1559 = vdwg.mxu0
  %v1560 = vld [vmem:[%s7 + $0x2] sm:$0x1]
  %v1561 = vlaneseq
  %v1562 = vshrl.u32 %v1561, 7
  %v1563 = vsub.s32 0, %v1562
  %v1564 = vrot.slane %v1560, %v1563
  %v1565 = vadd.f32 %v1552, %v1564
  %v1566 = vadd.f32 %v1557, %v1564
  %v1567 = vadd.f32 %v1565, %v203
  %v1568 = vadd.f32 %v1566, %v204
  %v1569 = vld [vmem:[%s7 + $0x3] sm:$0x1]
  %v1570 = vld [vmem:[%s7 + $0x4] sm:$0x1]
  %v1571 = vsel %vm165, %v1567, 0.0
  %1572 = vadd.xlane.f32.xlu0 %v1571
  %v1573 = vpop.xlane.xlu0 %1572
  %v1574 = vsel %vm165, %v1568, 0.0
  %1575 = vadd.xlane.f32.xlu0 %v1574
  %v1576 = vpop.xlane.xlu0 %1575
  %v1577 = vmul.f32 %v1573, %v172
  %v1578 = vmul.f32 %v1576, %v172
  %v1579 = vsub.f32 %v1567, %v1577
  %v1580 = vsub.f32 %v1568, %v1578
  %v1581 = vmul.f32 %v1579, %v1579
  %v1582 = vmul.f32 %v1580, %v1580
  %v1583 = vsel %vm165, %v1581, 0.0
  %1584 = vadd.xlane.f32.xlu0 %v1583
  %v1585 = vpop.xlane.xlu0 %1584
  %v1586 = vsel %vm165, %v1582, 0.0
  %1587 = vadd.xlane.f32.xlu0 %v1586
  %v1588 = vpop.xlane.xlu0 %1587
  %v1589 = vmul.f32 %v1585, %v172
  %v1590 = vmul.f32 %v1588, %v172
  %v1591 = vadd.f32 %v1589, 1e-12
  %v1592 = vadd.f32 %v1590, 1e-12
  %v1593 = vrsqrt.pop %v1591
  %v1594 = vrsqrt.pop %v1592
  %v1595 = vmul.f32 %v1579, %v1593
  %v1596 = vmul.f32 %v1580, %v1594
  %v1597 = vlaneseq
  %v1598 = vshrl.u32 %v1597, 7
  %v1599 = vsub.s32 0, %v1598
  %v1600 = vrot.slane %v1569, %v1599
  %v1601 = vmul.f32 %v1595, %v1600
  %v1602 = vmul.f32 %v1596, %v1600
  %v1603 = vlaneseq
  %v1604 = vshrl.u32 %v1603, 7
  %v1605 = vsub.s32 0, %v1604
  %v1606 = vrot.slane %v1570, %v1605
  %v1607 = vadd.f32 %v1601, %v1606
  %v1608 = vadd.f32 %v1602, %v1606
  %v1609 = vld [vmem:[%s5] sm:$0xff]
  %v1610 = vld [vmem:[%s5 + $0x8] sm:$0xff]
  %v1611 = vld [vmem:[%s5 + $0x10] sm:$0xff]
  %v1612 = vld [vmem:[%s5 + $0x18] sm:$0xff]
  %v1613 = vld [vmem:[%s6] sm:$0x1]
  %v1614 = vlaneseq
  %v1615 = vshrl.u32 %v1614, 7
  %v1616 = vsub.s32 0, %v1615
  %v1617 = vrot.slane %v1613, %v1616
  %v1619 = vsel %vm165, %v1607, 0
  %v1622 = vsel %vm165, %v1608, 0
  %1624 = vmatprep.subr.mxu0 0.0
  %1625 = vmatpush1.msra.mxu0 0.0
  %1626 = vmatprep.subr.mxu0 0.0
  %1627 = vmatpush1.msra.mxu0 0.0
  %1628 = vmatprep.subr.mxu0 0.0
  %1629 = vmatpush1.msra.mxu0 0.0
  %1630 = vmatprep.subr.mxu0 0.0
  %1631 = vmatpush1.msra.mxu0 0.0
  %1632 = vmatprep.subr.mxu0 0.0
  %1633 = vmatpush1.msra.mxu0 0.0
  %1634 = vmatprep.subr.mxu0 0.0
  %1635 = vmatpush1.msra.mxu0 0.0
  %1636 = vmatprep.subr.mxu0 0.0
  %1637 = vmatpush1.msra.mxu0 0.0
  %1638 = vmatprep.subr.mxu0 0.0
  %1639 = vmatpush1.msra.mxu0 0.0
  %1640 = vmatprep.subr.mxu0 0.0
  %1641 = vmatpush1.msra.mxu0 0.0
  %1642 = vmatprep.subr.mxu0 0.0
  %1643 = vmatpush1.msra.mxu0 0.0
  %1644 = vmatprep.subr.mxu0 0.0
  %1645 = vmatpush1.msra.mxu0 0.0
  %1646 = vmatprep.subr.mxu0 0.0
  %1647 = vmatpush1.msra.mxu0 0.0
  %1648 = vmatprep.subr.mxu0 0.0
  %1649 = vmatpush1.msra.mxu0 %v1612
  %1650 = vmatprep.subr.mxu0 0.0
  %1651 = vmatpush1.msra.mxu0 %v1611
  %1652 = vmatprep.subr.mxu0 0.0
  %1653 = vmatpush1.msra.mxu0 %v1610
  %1654 = vmatprep.subr.mxu0 0.0
  %1655 = vmatpush1.msra.mxu0 %v1609
  %1656 = vmatprep.subr.mxu0 0.0
  %1657 = vmatpush2.msra.mxu0 0.0
  %1658 = vmatprep.subr.mxu0 0.0
  %1659 = vmatpush2.msra.mxu0 0.0
  %1660 = vmatprep.subr.mxu0 0.0
  %1661 = vmatpush2.msra.mxu0 0.0
  %1662 = vmatprep.subr.mxu0 0.0
  %1663 = vmatpush2.msra.mxu0 0.0
  %1664 = vmatprep.subr.mxu0 0.0
  %1665 = vmatpush2.msra.mxu0 0.0
  %1666 = vmatprep.subr.mxu0 0.0
  %1667 = vmatpush2.msra.mxu0 0.0
  %1668 = vmatprep.subr.mxu0 0.0
  %1669 = vmatpush2.msra.mxu0 0.0
  %1670 = vmatprep.subr.mxu0 0.0
  %1671 = vmatpush2.msra.mxu0 0.0
  %1672 = vmatprep.subr.mxu0 0.0
  %1673 = vmatpush2.msra.mxu0 0.0
  %1674 = vmatprep.subr.mxu0 0.0
  %1675 = vmatpush2.msra.mxu0 0.0
  %1676 = vmatprep.subr.mxu0 0.0
  %1677 = vmatpush2.msra.mxu0 0.0
  %1678 = vmatprep.subr.mxu0 0.0
  %1679 = vmatpush2.msra.mxu0 0.0
  %1680 = vmatprep.subr.mxu0 0.0
  %1681 = vmatpush2.msra.mxu0 0.0
  %1682 = vmatprep.subr.mxu0 0.0
  %1683 = vmatpush2.msra.mxu0 0.0
  %1684 = vmatprep.subr.mxu0 0.0
  %1685 = vmatpush2.msra.mxu0 0.0
  %1686 = vmatprep.subr.mxu0 0.0
  %1687 = vmatpush2.msra.mxu0 0.0
  %1688 = vmatprep.mubr.f32.mxu0 0.0
  %1689 = vmatmul.mubr.f32.gmra.mxu0 %v1619
  %v1690 = vpop.f32.mrf.mxu0
  %v1691 = vadd.f32 %v1617, %v1690
  %v1692 = vpop.f32.mrf.mxu0
  %1693 = vmatprep.mubr.f32.mxu0 0.0
  %1694 = vmatmul.mubr.f32.gmra.mxu0 %v1622
  %v1695 = vpop.f32.mrf.mxu0
  %v1696 = vadd.f32 %v1617, %v1695
  %v1697 = vpop.f32.mrf.mxu0
  %1698 = vdwg.mxu0
  %v1699 = vmul.f32 %v1691, %v1691
  %v1700 = vmul.f32 %v1696, %v1696
  %v1701 = vmul.f32 %v1691, %v1699
  %v1702 = vmul.f32 %v1696, %v1700
  %v1703 = vmul.f32 %v1701, 0.044715
  %v1704 = vmul.f32 %v1702, 0.044715
  %v1705 = vadd.f32 %v1691, %v1703
  %v1706 = vadd.f32 %v1696, %v1704
  %v1707 = vmul.f32 %v1705, 0.7978846
  %v1708 = vmul.f32 %v1706, 0.7978846
  %v1709 = vtanh.pop %v1707
  %v1710 = vtanh.pop %v1708
  %v1711 = vadd.f32 %v1709, 1.0
  %v1712 = vadd.f32 %v1710, 1.0
  %v1713 = vmul.f32 %v1711, 0.5
  %v1714 = vmul.f32 %v1712, 0.5
  %v1715 = vmul.f32 %v1691, %v1713
  %v1716 = vmul.f32 %v1696, %v1714
  %s1717 = scalar_lea.vmem %s5, 64
  %v1718 = vld [vmem:[%s1717] sm:$0xff]
  %v1719 = vld [vmem:[%s1717 + $0x8] sm:$0xff]
  %v1720 = vld [vmem:[%s1717 + $0x10] sm:$0xff]
  %v1721 = vld [vmem:[%s1717 + $0x18] sm:$0xff]
  %v1722 = vld [vmem:[%s7 + $0x5] sm:$0x1]
  %v1723 = vlaneseq
  %v1724 = vshrl.u32 %v1723, 7
  %v1725 = vsub.s32 0, %v1724
  %v1726 = vrot.slane %v1722, %v1725
  %vm1727 = vcmask 523264
  %v1729 = vsel %vm1727, %v1715, 0
  %v1732 = vsel %vm1727, %v1716, 0
  %v1735 = vsel %vm1727, %v1718, 0
  %v1738 = vsel %vm1727, %v1719, 0
  %v1741 = vsel %vm1727, %v1720, 0
  %v1744 = vsel %vm1727, %v1721, 0
  %1746 = vmatprep.subr.mxu0 0.0
  %1747 = vmatpush1.xpose.msra.mxu0 0.0
  %1748 = vmatprep.subr.mxu0 0.0
  %1749 = vmatpush1.xpose.msra.mxu0 0.0
  %1750 = vmatprep.subr.mxu0 0.0
  %1751 = vmatpush1.xpose.msra.mxu0 0.0
  %1752 = vmatprep.subr.mxu0 0.0
  %1753 = vmatpush1.xpose.msra.mxu0 0.0
  %1754 = vmatprep.subr.mxu0 0.0
  %1755 = vmatpush1.xpose.msra.mxu0 0.0
  %1756 = vmatprep.subr.mxu0 0.0
  %1757 = vmatpush1.xpose.msra.mxu0 0.0
  %1758 = vmatprep.subr.mxu0 0.0
  %1759 = vmatpush1.xpose.msra.mxu0 0.0
  %1760 = vmatprep.subr.mxu0 0.0
  %1761 = vmatpush1.xpose.msra.mxu0 0.0
  %1762 = vmatprep.subr.mxu0 0.0
  %1763 = vmatpush1.xpose.msra.mxu0 0.0
  %1764 = vmatprep.subr.mxu0 0.0
  %1765 = vmatpush1.xpose.msra.mxu0 0.0
  %1766 = vmatprep.subr.mxu0 0.0
  %1767 = vmatpush1.xpose.msra.mxu0 0.0
  %1768 = vmatprep.subr.mxu0 0.0
  %1769 = vmatpush1.xpose.msra.mxu0 0.0
  %1770 = vmatprep.subr.mxu0 0.0
  %1771 = vmatpush1.xpose.msra.mxu0 %v1744
  %1772 = vmatprep.subr.mxu0 0.0
  %1773 = vmatpush1.xpose.msra.mxu0 %v1741
  %1774 = vmatprep.subr.mxu0 0.0
  %1775 = vmatpush1.xpose.msra.mxu0 %v1738
  %1776 = vmatprep.subr.mxu0 0.0
  %1777 = vmatpush1.xpose.msra.mxu0 %v1735
  %1778 = vmatprep.subr.mxu0 0.0
  %1779 = vmatpush2.xpose.msra.mxu0 0.0
  %1780 = vmatprep.subr.mxu0 0.0
  %1781 = vmatpush2.xpose.msra.mxu0 0.0
  %1782 = vmatprep.subr.mxu0 0.0
  %1783 = vmatpush2.xpose.msra.mxu0 0.0
  %1784 = vmatprep.subr.mxu0 0.0
  %1785 = vmatpush2.xpose.msra.mxu0 0.0
  %1786 = vmatprep.subr.mxu0 0.0
  %1787 = vmatpush2.xpose.msra.mxu0 0.0
  %1788 = vmatprep.subr.mxu0 0.0
  %1789 = vmatpush2.xpose.msra.mxu0 0.0
  %1790 = vmatprep.subr.mxu0 0.0
  %1791 = vmatpush2.xpose.msra.mxu0 0.0
  %1792 = vmatprep.subr.mxu0 0.0
  %1793 = vmatpush2.xpose.msra.mxu0 0.0
  %1794 = vmatprep.subr.mxu0 0.0
  %1795 = vmatpush2.xpose.msra.mxu0 0.0
  %1796 = vmatprep.subr.mxu0 0.0
  %1797 = vmatpush2.xpose.msra.mxu0 0.0
  %1798 = vmatprep.subr.mxu0 0.0
  %1799 = vmatpush2.xpose.msra.mxu0 0.0
  %1800 = vmatprep.subr.mxu0 0.0
  %1801 = vmatpush2.xpose.msra.mxu0 0.0
  %1802 = vmatprep.subr.mxu0 0.0
  %1803 = vmatpush2.xpose.msra.mxu0 0.0
  %1804 = vmatprep.subr.mxu0 0.0
  %1805 = vmatpush2.xpose.msra.mxu0 0.0
  %1806 = vmatprep.subr.mxu0 0.0
  %1807 = vmatpush2.xpose.msra.mxu0 0.0
  %1808 = vmatprep.subr.mxu0 0.0
  %1809 = vmatpush2.xpose.msra.mxu0 0.0
  %1810 = vmatprep.mubr.f32.mxu0 0.0
  %1811 = vmatmul.mubr.f32.gmra.mxu0 %v1729
  %v1812 = vpop.f32.mrf.mxu0
  %v1813 = vadd.f32 %v1726, %v1812
  %v1814 = vpop.f32.mrf.mxu0
  %1815 = vmatprep.mubr.f32.mxu0 0.0
  %1816 = vmatmul.mubr.f32.gmra.mxu0 %v1732
  %v1817 = vpop.f32.mrf.mxu0
  %v1818 = vadd.f32 %v1726, %v1817
  %v1819 = vpop.f32.mrf.mxu0
  %1820 = vdwg.mxu0
  %v1821 = vadd.f32 %v1813, %v1607
  %v1822 = vadd.f32 %v1818, %v1608
  %v1823 = vld [vmem:[%s7 + $0x6] sm:$0x1]
  %v1824 = vld [vmem:[%s7 + $0x7] sm:$0x1]
  %v1825 = vsel %vm165, %v1821, 0.0
  %1826 = vadd.xlane.f32.xlu0 %v1825
  %v1827 = vpop.xlane.xlu0 %1826
  %v1828 = vsel %vm165, %v1822, 0.0
  %1829 = vadd.xlane.f32.xlu0 %v1828
  %v1830 = vpop.xlane.xlu0 %1829
  %v1831 = vmul.f32 %v1827, %v172
  %v1832 = vmul.f32 %v1830, %v172
  %v1833 = vsub.f32 %v1821, %v1831
  %v1834 = vsub.f32 %v1822, %v1832
  %v1835 = vmul.f32 %v1833, %v1833
  %v1836 = vmul.f32 %v1834, %v1834
  %v1837 = vsel %vm165, %v1835, 0.0
  %1838 = vadd.xlane.f32.xlu0 %v1837
  %v1839 = vpop.xlane.xlu0 %1838
  %v1840 = vsel %vm165, %v1836, 0.0
  %1841 = vadd.xlane.f32.xlu0 %v1840
  %v1842 = vpop.xlane.xlu0 %1841
  %v1843 = vmul.f32 %v1839, %v172
  %v1844 = vmul.f32 %v1842, %v172
  %v1845 = vadd.f32 %v1843, 1e-12
  %v1846 = vadd.f32 %v1844, 1e-12
  %v1847 = vrsqrt.pop %v1845
  %v1848 = vrsqrt.pop %v1846
  %v1849 = vmul.f32 %v1833, %v1847
  %v1850 = vmul.f32 %v1834, %v1848
  %v1851 = vlaneseq
  %v1852 = vshrl.u32 %v1851, 7
  %v1853 = vsub.s32 0, %v1852
  %v1854 = vrot.slane %v1823, %v1853
  %v1855 = vmul.f32 %v1849, %v1854
  %v1856 = vmul.f32 %v1850, %v1854
  %v1857 = vlaneseq
  %v1858 = vshrl.u32 %v1857, 7
  %v1859 = vsub.s32 0, %v1858
  %v1860 = vrot.slane %v1824, %v1859
  %v1861 = vadd.f32 %v1855, %v1860
  %v1862 = vadd.f32 %v1856, %v1860
  %s1863 = scalar_lea.vmem %s3, 64
  %v1864 = vld [vmem:[%s1863] sm:$0xff]
  %v1865 = vld [vmem:[%s1863 + $0x8] sm:$0xff]
  %v1866 = vld [vmem:[%s1863 + $0x10] sm:$0xff]
  %v1867 = vld [vmem:[%s1863 + $0x18] sm:$0xff]
  %v1868 = vld [vmem:[%s4 + $0x2] sm:$0x1]
  %v1869 = vlaneseq
  %v1870 = vshrl.u32 %v1869, 7
  %v1871 = vsub.s32 0, %v1870
  %v1872 = vrot.slane %v1868, %v1871
  %v1874 = vsel %vm165, %v1861, 0
  %v1877 = vsel %vm165, %v1862, 0
  %1879 = vmatprep.subr.mxu0 0.0
  %1880 = vmatpush1.msra.mxu0 0.0
  %1881 = vmatprep.subr.mxu0 0.0
  %1882 = vmatpush1.msra.mxu0 0.0
  %1883 = vmatprep.subr.mxu0 0.0
  %1884 = vmatpush1.msra.mxu0 0.0
  %1885 = vmatprep.subr.mxu0 0.0
  %1886 = vmatpush1.msra.mxu0 0.0
  %1887 = vmatprep.subr.mxu0 0.0
  %1888 = vmatpush1.msra.mxu0 0.0
  %1889 = vmatprep.subr.mxu0 0.0
  %1890 = vmatpush1.msra.mxu0 0.0
  %1891 = vmatprep.subr.mxu0 0.0
  %1892 = vmatpush1.msra.mxu0 0.0
  %1893 = vmatprep.subr.mxu0 0.0
  %1894 = vmatpush1.msra.mxu0 0.0
  %1895 = vmatprep.subr.mxu0 0.0
  %1896 = vmatpush1.msra.mxu0 0.0
  %1897 = vmatprep.subr.mxu0 0.0
  %1898 = vmatpush1.msra.mxu0 0.0
  %1899 = vmatprep.subr.mxu0 0.0
  %1900 = vmatpush1.msra.mxu0 0.0
  %1901 = vmatprep.subr.mxu0 0.0
  %1902 = vmatpush1.msra.mxu0 0.0
  %1903 = vmatprep.subr.mxu0 0.0
  %1904 = vmatpush1.msra.mxu0 %v1867
  %1905 = vmatprep.subr.mxu0 0.0
  %1906 = vmatpush1.msra.mxu0 %v1866
  %1907 = vmatprep.subr.mxu0 0.0
  %1908 = vmatpush1.msra.mxu0 %v1865
  %1909 = vmatprep.subr.mxu0 0.0
  %1910 = vmatpush1.msra.mxu0 %v1864
  %1911 = vmatprep.subr.mxu0 0.0
  %1912 = vmatpush2.msra.mxu0 0.0
  %1913 = vmatprep.subr.mxu0 0.0
  %1914 = vmatpush2.msra.mxu0 0.0
  %1915 = vmatprep.subr.mxu0 0.0
  %1916 = vmatpush2.msra.mxu0 0.0
  %1917 = vmatprep.subr.mxu0 0.0
  %1918 = vmatpush2.msra.mxu0 0.0
  %1919 = vmatprep.subr.mxu0 0.0
  %1920 = vmatpush2.msra.mxu0 0.0
  %1921 = vmatprep.subr.mxu0 0.0
  %1922 = vmatpush2.msra.mxu0 0.0
  %1923 = vmatprep.subr.mxu0 0.0
  %1924 = vmatpush2.msra.mxu0 0.0
  %1925 = vmatprep.subr.mxu0 0.0
  %1926 = vmatpush2.msra.mxu0 0.0
  %1927 = vmatprep.subr.mxu0 0.0
  %1928 = vmatpush2.msra.mxu0 0.0
  %1929 = vmatprep.subr.mxu0 0.0
  %1930 = vmatpush2.msra.mxu0 0.0
  %1931 = vmatprep.subr.mxu0 0.0
  %1932 = vmatpush2.msra.mxu0 0.0
  %1933 = vmatprep.subr.mxu0 0.0
  %1934 = vmatpush2.msra.mxu0 0.0
  %1935 = vmatprep.subr.mxu0 0.0
  %1936 = vmatpush2.msra.mxu0 0.0
  %1937 = vmatprep.subr.mxu0 0.0
  %1938 = vmatpush2.msra.mxu0 0.0
  %1939 = vmatprep.subr.mxu0 0.0
  %1940 = vmatpush2.msra.mxu0 0.0
  %1941 = vmatprep.subr.mxu0 0.0
  %1942 = vmatpush2.msra.mxu0 0.0
  %1943 = vmatprep.mubr.f32.mxu0 0.0
  %1944 = vmatmul.mubr.f32.gmra.mxu0 %v1874
  %v1945 = vpop.f32.mrf.mxu0
  %v1946 = vadd.f32 %v1872, %v1945
  %v1947 = vpop.f32.mrf.mxu0
  %1948 = vmatprep.mubr.f32.mxu0 0.0
  %1949 = vmatmul.mubr.f32.gmra.mxu0 %v1877
  %v1950 = vpop.f32.mrf.mxu0
  %v1951 = vadd.f32 %v1872, %v1950
  %v1952 = vpop.f32.mrf.mxu0
  %1953 = vdwg.mxu0
  %s1954 = scalar_lea.vmem %s3, 192
  %v1955 = vld [vmem:[%s1954] sm:$0xff]
  %v1956 = vld [vmem:[%s1954 + $0x8] sm:$0xff]
  %v1957 = vld [vmem:[%s1954 + $0x10] sm:$0xff]
  %v1958 = vld [vmem:[%s1954 + $0x18] sm:$0xff]
  %1959 = vmatprep.subr.mxu0 0.0
  %1960 = vmatpush1.msra.mxu0 0.0
  %1961 = vmatprep.subr.mxu0 0.0
  %1962 = vmatpush1.msra.mxu0 0.0
  %1963 = vmatprep.subr.mxu0 0.0
  %1964 = vmatpush1.msra.mxu0 0.0
  %1965 = vmatprep.subr.mxu0 0.0
  %1966 = vmatpush1.msra.mxu0 0.0
  %1967 = vmatprep.subr.mxu0 0.0
  %1968 = vmatpush1.msra.mxu0 0.0
  %1969 = vmatprep.subr.mxu0 0.0
  %1970 = vmatpush1.msra.mxu0 0.0
  %1971 = vmatprep.subr.mxu0 0.0
  %1972 = vmatpush1.msra.mxu0 0.0
  %1973 = vmatprep.subr.mxu0 0.0
  %1974 = vmatpush1.msra.mxu0 0.0
  %1975 = vmatprep.subr.mxu0 0.0
  %1976 = vmatpush1.msra.mxu0 0.0
  %1977 = vmatprep.subr.mxu0 0.0
  %1978 = vmatpush1.msra.mxu0 0.0
  %1979 = vmatprep.subr.mxu0 0.0
  %1980 = vmatpush1.msra.mxu0 0.0
  %1981 = vmatprep.subr.mxu0 0.0
  %1982 = vmatpush1.msra.mxu0 0.0
  %1983 = vmatprep.subr.mxu0 0.0
  %1984 = vmatpush1.msra.mxu0 %v1958
  %1985 = vmatprep.subr.mxu0 0.0
  %1986 = vmatpush1.msra.mxu0 %v1957
  %1987 = vmatprep.subr.mxu0 0.0
  %1988 = vmatpush1.msra.mxu0 %v1956
  %1989 = vmatprep.subr.mxu0 0.0
  %1990 = vmatpush1.msra.mxu0 %v1955
  %1991 = vmatprep.subr.mxu0 0.0
  %1992 = vmatpush2.msra.mxu0 0.0
  %1993 = vmatprep.subr.mxu0 0.0
  %1994 = vmatpush2.msra.mxu0 0.0
  %1995 = vmatprep.subr.mxu0 0.0
  %1996 = vmatpush2.msra.mxu0 0.0
  %1997 = vmatprep.subr.mxu0 0.0
  %1998 = vmatpush2.msra.mxu0 0.0
  %1999 = vmatprep.subr.mxu0 0.0
  %2000 = vmatpush2.msra.mxu0 0.0
  %2001 = vmatprep.subr.mxu0 0.0
  %2002 = vmatpush2.msra.mxu0 0.0
  %2003 = vmatprep.subr.mxu0 0.0
  %2004 = vmatpush2.msra.mxu0 0.0
  %2005 = vmatprep.subr.mxu0 0.0
  %2006 = vmatpush2.msra.mxu0 0.0
  %2007 = vmatprep.subr.mxu0 0.0
  %2008 = vmatpush2.msra.mxu0 0.0
  %2009 = vmatprep.subr.mxu0 0.0
  %2010 = vmatpush2.msra.mxu0 0.0
  %2011 = vmatprep.subr.mxu0 0.0
  %2012 = vmatpush2.msra.mxu0 0.0
  %2013 = vmatprep.subr.mxu0 0.0
  %2014 = vmatpush2.msra.mxu0 0.0
  %2015 = vmatprep.subr.mxu0 0.0
  %2016 = vmatpush2.msra.mxu0 0.0
  %2017 = vmatprep.subr.mxu0 0.0
  %2018 = vmatpush2.msra.mxu0 0.0
  %2019 = vmatprep.subr.mxu0 0.0
  %2020 = vmatpush2.msra.mxu0 0.0
  %2021 = vmatprep.subr.mxu0 0.0
  %2022 = vmatpush2.msra.mxu0 0.0
  %2023 = vmatprep.mubr.f32.mxu0 0.0
  %2024 = vmatmul.mubr.f32.gmra.mxu0 %v1874
  %v2025 = vpop.f32.mrf.mxu0
  %v2026 = vadd.f32 0.0, %v2025
  %v2027 = vpop.f32.mrf.mxu0
  %2028 = vmatprep.mubr.f32.mxu0 0.0
  %2029 = vmatmul.mubr.f32.gmra.mxu0 %v1877
  %v2030 = vpop.f32.mrf.mxu0
  %v2031 = vadd.f32 0.0, %v2030
  %v2032 = vpop.f32.mrf.mxu0
  %2033 = vdwg.mxu0
  %s2034 = scalar_lea.vmem %s3, 320
  %v2035 = vld [vmem:[%s2034] sm:$0xff]
  %v2036 = vld [vmem:[%s2034 + $0x8] sm:$0xff]
  %v2037 = vld [vmem:[%s2034 + $0x10] sm:$0xff]
  %v2038 = vld [vmem:[%s2034 + $0x18] sm:$0xff]
  %2039 = vmatprep.subr.mxu0 0.0
  %2040 = vmatpush1.msra.mxu0 0.0
  %2041 = vmatprep.subr.mxu0 0.0
  %2042 = vmatpush1.msra.mxu0 0.0
  %2043 = vmatprep.subr.mxu0 0.0
  %2044 = vmatpush1.msra.mxu0 0.0
  %2045 = vmatprep.subr.mxu0 0.0
  %2046 = vmatpush1.msra.mxu0 0.0
  %2047 = vmatprep.subr.mxu0 0.0
  %2048 = vmatpush1.msra.mxu0 0.0
  %2049 = vmatprep.subr.mxu0 0.0
  %2050 = vmatpush1.msra.mxu0 0.0
  %2051 = vmatprep.subr.mxu0 0.0
  %2052 = vmatpush1.msra.mxu0 0.0
  %2053 = vmatprep.subr.mxu0 0.0
  %2054 = vmatpush1.msra.mxu0 0.0
  %2055 = vmatprep.subr.mxu0 0.0
  %2056 = vmatpush1.msra.mxu0 0.0
  %2057 = vmatprep.subr.mxu0 0.0
  %2058 = vmatpush1.msra.mxu0 0.0
  %2059 = vmatprep.subr.mxu0 0.0
  %2060 = vmatpush1.msra.mxu0 0.0
  %2061 = vmatprep.subr.mxu0 0.0
  %2062 = vmatpush1.msra.mxu0 0.0
  %2063 = vmatprep.subr.mxu0 0.0
  %2064 = vmatpush1.msra.mxu0 %v2038
  %2065 = vmatprep.subr.mxu0 0.0
  %2066 = vmatpush1.msra.mxu0 %v2037
  %2067 = vmatprep.subr.mxu0 0.0
  %2068 = vmatpush1.msra.mxu0 %v2036
  %2069 = vmatprep.subr.mxu0 0.0
  %2070 = vmatpush1.msra.mxu0 %v2035
  %2071 = vmatprep.subr.mxu0 0.0
  %2072 = vmatpush2.msra.mxu0 0.0
  %2073 = vmatprep.subr.mxu0 0.0
  %2074 = vmatpush2.msra.mxu0 0.0
  %2075 = vmatprep.subr.mxu0 0.0
  %2076 = vmatpush2.msra.mxu0 0.0
  %2077 = vmatprep.subr.mxu0 0.0
  %2078 = vmatpush2.msra.mxu0 0.0
  %2079 = vmatprep.subr.mxu0 0.0
  %2080 = vmatpush2.msra.mxu0 0.0
  %2081 = vmatprep.subr.mxu0 0.0
  %2082 = vmatpush2.msra.mxu0 0.0
  %2083 = vmatprep.subr.mxu0 0.0
  %2084 = vmatpush2.msra.mxu0 0.0
  %2085 = vmatprep.subr.mxu0 0.0
  %2086 = vmatpush2.msra.mxu0 0.0
  %2087 = vmatprep.subr.mxu0 0.0
  %2088 = vmatpush2.msra.mxu0 0.0
  %2089 = vmatprep.subr.mxu0 0.0
  %2090 = vmatpush2.msra.mxu0 0.0
  %2091 = vmatprep.subr.mxu0 0.0
  %2092 = vmatpush2.msra.mxu0 0.0
  %2093 = vmatprep.subr.mxu0 0.0
  %2094 = vmatpush2.msra.mxu0 0.0
  %2095 = vmatprep.subr.mxu0 0.0
  %2096 = vmatpush2.msra.mxu0 0.0
  %2097 = vmatprep.subr.mxu0 0.0
  %2098 = vmatpush2.msra.mxu0 0.0
  %2099 = vmatprep.subr.mxu0 0.0
  %2100 = vmatpush2.msra.mxu0 0.0
  %2101 = vmatprep.subr.mxu0 0.0
  %2102 = vmatpush2.msra.mxu0 0.0
  %2103 = vmatprep.mubr.f32.mxu0 0.0
  %2104 = vmatmul.mubr.f32.gmra.mxu0 %v1874
  %v2105 = vpop.f32.mrf.mxu0
  %v2106 = vadd.f32 0.0, %v2105
  %v2107 = vpop.f32.mrf.mxu0
  %2108 = vmatprep.mubr.f32.mxu0 0.0
  %2109 = vmatmul.mubr.f32.gmra.mxu0 %v1877
  %v2110 = vpop.f32.mrf.mxu0
  %v2111 = vadd.f32 0.0, %v2110
  %v2112 = vpop.f32.mrf.mxu0
  %2113 = vdwg.mxu0
  %v2115 = vsel %vm465, %v1946, 0
  %v2118 = vsel %vm465, %v2026, 0
  %2120 = vmatprep.subr.mxu0 0.0
  %2121 = vmatpush1.xpose.msra.mxu0 0.0
  %2122 = vmatprep.subr.mxu0 0.0
  %2123 = vmatpush1.xpose.msra.mxu0 0.0
  %2124 = vmatprep.subr.mxu0 0.0
  %2125 = vmatpush1.xpose.msra.mxu0 0.0
  %2126 = vmatprep.subr.mxu0 0.0
  %2127 = vmatpush1.xpose.msra.mxu0 0.0
  %2128 = vmatprep.subr.mxu0 0.0
  %2129 = vmatpush1.xpose.msra.mxu0 0.0
  %2130 = vmatprep.subr.mxu0 0.0
  %2131 = vmatpush1.xpose.msra.mxu0 0.0
  %2132 = vmatprep.subr.mxu0 0.0
  %2133 = vmatpush1.xpose.msra.mxu0 0.0
  %2134 = vmatprep.subr.mxu0 0.0
  %2135 = vmatpush1.xpose.msra.mxu0 0.0
  %2136 = vmatprep.subr.mxu0 0.0
  %2137 = vmatpush1.xpose.msra.mxu0 0.0
  %2138 = vmatprep.subr.mxu0 0.0
  %2139 = vmatpush1.xpose.msra.mxu0 0.0
  %2140 = vmatprep.subr.mxu0 0.0
  %2141 = vmatpush1.xpose.msra.mxu0 0.0
  %2142 = vmatprep.subr.mxu0 0.0
  %2143 = vmatpush1.xpose.msra.mxu0 0.0
  %2144 = vmatprep.subr.mxu0 0.0
  %2145 = vmatpush1.xpose.msra.mxu0 0.0
  %2146 = vmatprep.subr.mxu0 0.0
  %2147 = vmatpush1.xpose.msra.mxu0 0.0
  %2148 = vmatprep.subr.mxu0 0.0
  %2149 = vmatpush1.xpose.msra.mxu0 0.0
  %2150 = vmatprep.subr.mxu0 0.0
  %2151 = vmatpush1.xpose.msra.mxu0 %v2118
  %2152 = vmatprep.subr.mxu0 0.0
  %2153 = vmatpush2.xpose.msra.mxu0 0.0
  %2154 = vmatprep.subr.mxu0 0.0
  %2155 = vmatpush2.xpose.msra.mxu0 0.0
  %2156 = vmatprep.subr.mxu0 0.0
  %2157 = vmatpush2.xpose.msra.mxu0 0.0
  %2158 = vmatprep.subr.mxu0 0.0
  %2159 = vmatpush2.xpose.msra.mxu0 0.0
  %2160 = vmatprep.subr.mxu0 0.0
  %2161 = vmatpush2.xpose.msra.mxu0 0.0
  %2162 = vmatprep.subr.mxu0 0.0
  %2163 = vmatpush2.xpose.msra.mxu0 0.0
  %2164 = vmatprep.subr.mxu0 0.0
  %2165 = vmatpush2.xpose.msra.mxu0 0.0
  %2166 = vmatprep.subr.mxu0 0.0
  %2167 = vmatpush2.xpose.msra.mxu0 0.0
  %2168 = vmatprep.subr.mxu0 0.0
  %2169 = vmatpush2.xpose.msra.mxu0 0.0
  %2170 = vmatprep.subr.mxu0 0.0
  %2171 = vmatpush2.xpose.msra.mxu0 0.0
  %2172 = vmatprep.subr.mxu0 0.0
  %2173 = vmatpush2.xpose.msra.mxu0 0.0
  %2174 = vmatprep.subr.mxu0 0.0
  %2175 = vmatpush2.xpose.msra.mxu0 0.0
  %2176 = vmatprep.subr.mxu0 0.0
  %2177 = vmatpush2.xpose.msra.mxu0 0.0
  %2178 = vmatprep.subr.mxu0 0.0
  %2179 = vmatpush2.xpose.msra.mxu0 0.0
  %2180 = vmatprep.subr.mxu0 0.0
  %2181 = vmatpush2.xpose.msra.mxu0 0.0
  %2182 = vmatprep.subr.mxu0 0.0
  %2183 = vmatpush2.xpose.msra.mxu0 0.0
  %2184 = vmatprep.mubr.f32.mxu0 0.0
  %2185 = vmatmul.mubr.f32.gmra.mxu0 %v2115
  %v2186 = vpop.f32.mrf.mxu0
  %v2187 = vadd.f32 %v464, %v2186
  %v2188 = vpop.f32.mrf.mxu0
  %2189 = vdwg.mxu0
  %v2190 = vsel %vm542, %v2187, -inf
  %2191 = vmax.xlane.f32.xlu0 %v2190
  %v2192 = vpop.xlane.xlu0 %2191
  %v2193 = vsub.f32 %v2187, %v2192
  %v2194 = vmul.f32 %v2193, 1.442695
  %v2195 = vpow.pop %v2194
  %v2196 = vsel %vm542, %v2195, 0.0
  %2197 = vadd.xlane.f32.xlu0 %v2196
  %v2198 = vpop.xlane.xlu0 %2197
  %v2199 = vrcp.pop %v2198
  %v2200 = vmul.f32 %v2195, %v2199
  %v2202 = vsel %vm542, %v2200, 0
  %2204 = vmatprep.subr.mxu0 0.0
  %2205 = vmatpush1.msra.mxu0 0.0
  %2206 = vmatprep.subr.mxu0 0.0
  %2207 = vmatpush1.msra.mxu0 0.0
  %2208 = vmatprep.subr.mxu0 0.0
  %2209 = vmatpush1.msra.mxu0 0.0
  %2210 = vmatprep.subr.mxu0 0.0
  %2211 = vmatpush1.msra.mxu0 0.0
  %2212 = vmatprep.subr.mxu0 0.0
  %2213 = vmatpush1.msra.mxu0 0.0
  %2214 = vmatprep.subr.mxu0 0.0
  %2215 = vmatpush1.msra.mxu0 0.0
  %2216 = vmatprep.subr.mxu0 0.0
  %2217 = vmatpush1.msra.mxu0 0.0
  %2218 = vmatprep.subr.mxu0 0.0
  %2219 = vmatpush1.msra.mxu0 0.0
  %2220 = vmatprep.subr.mxu0 0.0
  %2221 = vmatpush1.msra.mxu0 0.0
  %2222 = vmatprep.subr.mxu0 0.0
  %2223 = vmatpush1.msra.mxu0 0.0
  %2224 = vmatprep.subr.mxu0 0.0
  %2225 = vmatpush1.msra.mxu0 0.0
  %2226 = vmatprep.subr.mxu0 0.0
  %2227 = vmatpush1.msra.mxu0 0.0
  %2228 = vmatprep.subr.mxu0 0.0
  %2229 = vmatpush1.msra.mxu0 0.0
  %2230 = vmatprep.subr.mxu0 0.0
  %2231 = vmatpush1.msra.mxu0 0.0
  %2232 = vmatprep.subr.mxu0 0.0
  %2233 = vmatpush1.msra.mxu0 0.0
  %2234 = vmatprep.subr.mxu0 0.0
  %2235 = vmatpush1.msra.mxu0 %v2106
  %2236 = vmatprep.subr.mxu0 0.0
  %2237 = vmatpush2.msra.mxu0 0.0
  %2238 = vmatprep.subr.mxu0 0.0
  %2239 = vmatpush2.msra.mxu0 0.0
  %2240 = vmatprep.subr.mxu0 0.0
  %2241 = vmatpush2.msra.mxu0 0.0
  %2242 = vmatprep.subr.mxu0 0.0
  %2243 = vmatpush2.msra.mxu0 0.0
  %2244 = vmatprep.subr.mxu0 0.0
  %2245 = vmatpush2.msra.mxu0 0.0
  %2246 = vmatprep.subr.mxu0 0.0
  %2247 = vmatpush2.msra.mxu0 0.0
  %2248 = vmatprep.subr.mxu0 0.0
  %2249 = vmatpush2.msra.mxu0 0.0
  %2250 = vmatprep.subr.mxu0 0.0
  %2251 = vmatpush2.msra.mxu0 0.0
  %2252 = vmatprep.subr.mxu0 0.0
  %2253 = vmatpush2.msra.mxu0 0.0
  %2254 = vmatprep.subr.mxu0 0.0
  %2255 = vmatpush2.msra.mxu0 0.0
  %2256 = vmatprep.subr.mxu0 0.0
  %2257 = vmatpush2.msra.mxu0 0.0
  %2258 = vmatprep.subr.mxu0 0.0
  %2259 = vmatpush2.msra.mxu0 0.0
  %2260 = vmatprep.subr.mxu0 0.0
  %2261 = vmatpush2.msra.mxu0 0.0
  %2262 = vmatprep.subr.mxu0 0.0
  %2263 = vmatpush2.msra.mxu0 0.0
  %2264 = vmatprep.subr.mxu0 0.0
  %2265 = vmatpush2.msra.mxu0 0.0
  %2266 = vmatprep.subr.mxu0 0.0
  %2267 = vmatpush2.msra.mxu0 0.0
  %2268 = vmatprep.mubr.f32.mxu0 0.0
  %2269 = vmatmul.mubr.f32.gmra.mxu0 %v2202
  %v2270 = vpop.f32.mrf.mxu0
  %v2271 = vadd.f32 0.0, %v2270
  %v2272 = vpop.f32.mrf.mxu0
  %2273 = vdwg.mxu0
  %2274 = vst.msk [vmem:[#allocation2] sm:$0xff] %vm465, %v2271
  %v2276 = vsel %vm465, %v1951, 0
  %v2279 = vsel %vm465, %v2031, 0
  %2281 = vmatprep.subr.mxu0 0.0
  %2282 = vmatpush1.xpose.msra.mxu0 0.0
  %2283 = vmatprep.subr.mxu0 0.0
  %2284 = vmatpush1.xpose.msra.mxu0 0.0
  %2285 = vmatprep.subr.mxu0 0.0
  %2286 = vmatpush1.xpose.msra.mxu0 0.0
  %2287 = vmatprep.subr.mxu0 0.0
  %2288 = vmatpush1.xpose.msra.mxu0 0.0
  %2289 = vmatprep.subr.mxu0 0.0
  %2290 = vmatpush1.xpose.msra.mxu0 0.0
  %2291 = vmatprep.subr.mxu0 0.0
  %2292 = vmatpush1.xpose.msra.mxu0 0.0
  %2293 = vmatprep.subr.mxu0 0.0
  %2294 = vmatpush1.xpose.msra.mxu0 0.0
  %2295 = vmatprep.subr.mxu0 0.0
  %2296 = vmatpush1.xpose.msra.mxu0 0.0
  %2297 = vmatprep.subr.mxu0 0.0
  %2298 = vmatpush1.xpose.msra.mxu0 0.0
  %2299 = vmatprep.subr.mxu0 0.0
  %2300 = vmatpush1.xpose.msra.mxu0 0.0
  %2301 = vmatprep.subr.mxu0 0.0
  %2302 = vmatpush1.xpose.msra.mxu0 0.0
  %2303 = vmatprep.subr.mxu0 0.0
  %2304 = vmatpush1.xpose.msra.mxu0 0.0
  %2305 = vmatprep.subr.mxu0 0.0
  %2306 = vmatpush1.xpose.msra.mxu0 0.0
  %2307 = vmatprep.subr.mxu0 0.0
  %2308 = vmatpush1.xpose.msra.mxu0 0.0
  %2309 = vmatprep.subr.mxu0 0.0
  %2310 = vmatpush1.xpose.msra.mxu0 0.0
  %2311 = vmatprep.subr.mxu0 0.0
  %2312 = vmatpush1.xpose.msra.mxu0 %v2279
  %2313 = vmatprep.subr.mxu0 0.0
  %2314 = vmatpush2.xpose.msra.mxu0 0.0
  %2315 = vmatprep.subr.mxu0 0.0
  %2316 = vmatpush2.xpose.msra.mxu0 0.0
  %2317 = vmatprep.subr.mxu0 0.0
  %2318 = vmatpush2.xpose.msra.mxu0 0.0
  %2319 = vmatprep.subr.mxu0 0.0
  %2320 = vmatpush2.xpose.msra.mxu0 0.0
  %2321 = vmatprep.subr.mxu0 0.0
  %2322 = vmatpush2.xpose.msra.mxu0 0.0
  %2323 = vmatprep.subr.mxu0 0.0
  %2324 = vmatpush2.xpose.msra.mxu0 0.0
  %2325 = vmatprep.subr.mxu0 0.0
  %2326 = vmatpush2.xpose.msra.mxu0 0.0
  %2327 = vmatprep.subr.mxu0 0.0
  %2328 = vmatpush2.xpose.msra.mxu0 0.0
  %2329 = vmatprep.subr.mxu0 0.0
  %2330 = vmatpush2.xpose.msra.mxu0 0.0
  %2331 = vmatprep.subr.mxu0 0.0
  %2332 = vmatpush2.xpose.msra.mxu0 0.0
  %2333 = vmatprep.subr.mxu0 0.0
  %2334 = vmatpush2.xpose.msra.mxu0 0.0
  %2335 = vmatprep.subr.mxu0 0.0
  %2336 = vmatpush2.xpose.msra.mxu0 0.0
  %2337 = vmatprep.subr.mxu0 0.0
  %2338 = vmatpush2.xpose.msra.mxu0 0.0
  %2339 = vmatprep.subr.mxu0 0.0
  %2340 = vmatpush2.xpose.msra.mxu0 0.0
  %2341 = vmatprep.subr.mxu0 0.0
  %2342 = vmatpush2.xpose.msra.mxu0 0.0
  %2343 = vmatprep.subr.mxu0 0.0
  %2344 = vmatpush2.xpose.msra.mxu0 0.0
  %2345 = vmatprep.mubr.f32.mxu0 0.0
  %2346 = vmatmul.mubr.f32.gmra.mxu0 %v2276
  %v2347 = vpop.f32.mrf.mxu0
  %v2348 = vadd.f32 %v631, %v2347
  %v2349 = vpop.f32.mrf.mxu0
  %2350 = vdwg.mxu0
  %v2351 = vsel %vm542, %v2348, -inf
  %2352 = vmax.xlane.f32.xlu0 %v2351
  %v2353 = vpop.xlane.xlu0 %2352
  %v2354 = vsub.f32 %v2348, %v2353
  %v2355 = vmul.f32 %v2354, 1.442695
  %v2356 = vpow.pop %v2355
  %v2357 = vsel %vm542, %v2356, 0.0
  %2358 = vadd.xlane.f32.xlu0 %v2357
  %v2359 = vpop.xlane.xlu0 %2358
  %v2360 = vrcp.pop %v2359
  %v2361 = vmul.f32 %v2356, %v2360
  %v2363 = vsel %vm542, %v2361, 0
  %2365 = vmatprep.subr.mxu0 0.0
  %2366 = vmatpush1.msra.mxu0 0.0
  %2367 = vmatprep.subr.mxu0 0.0
  %2368 = vmatpush1.msra.mxu0 0.0
  %2369 = vmatprep.subr.mxu0 0.0
  %2370 = vmatpush1.msra.mxu0 0.0
  %2371 = vmatprep.subr.mxu0 0.0
  %2372 = vmatpush1.msra.mxu0 0.0
  %2373 = vmatprep.subr.mxu0 0.0
  %2374 = vmatpush1.msra.mxu0 0.0
  %2375 = vmatprep.subr.mxu0 0.0
  %2376 = vmatpush1.msra.mxu0 0.0
  %2377 = vmatprep.subr.mxu0 0.0
  %2378 = vmatpush1.msra.mxu0 0.0
  %2379 = vmatprep.subr.mxu0 0.0
  %2380 = vmatpush1.msra.mxu0 0.0
  %2381 = vmatprep.subr.mxu0 0.0
  %2382 = vmatpush1.msra.mxu0 0.0
  %2383 = vmatprep.subr.mxu0 0.0
  %2384 = vmatpush1.msra.mxu0 0.0
  %2385 = vmatprep.subr.mxu0 0.0
  %2386 = vmatpush1.msra.mxu0 0.0
  %2387 = vmatprep.subr.mxu0 0.0
  %2388 = vmatpush1.msra.mxu0 0.0
  %2389 = vmatprep.subr.mxu0 0.0
  %2390 = vmatpush1.msra.mxu0 0.0
  %2391 = vmatprep.subr.mxu0 0.0
  %2392 = vmatpush1.msra.mxu0 0.0
  %2393 = vmatprep.subr.mxu0 0.0
  %2394 = vmatpush1.msra.mxu0 0.0
  %2395 = vmatprep.subr.mxu0 0.0
  %2396 = vmatpush1.msra.mxu0 %v2111
  %2397 = vmatprep.subr.mxu0 0.0
  %2398 = vmatpush2.msra.mxu0 0.0
  %2399 = vmatprep.subr.mxu0 0.0
  %2400 = vmatpush2.msra.mxu0 0.0
  %2401 = vmatprep.subr.mxu0 0.0
  %2402 = vmatpush2.msra.mxu0 0.0
  %2403 = vmatprep.subr.mxu0 0.0
  %2404 = vmatpush2.msra.mxu0 0.0
  %2405 = vmatprep.subr.mxu0 0.0
  %2406 = vmatpush2.msra.mxu0 0.0
  %2407 = vmatprep.subr.mxu0 0.0
  %2408 = vmatpush2.msra.mxu0 0.0
  %2409 = vmatprep.subr.mxu0 0.0
  %2410 = vmatpush2.msra.mxu0 0.0
  %2411 = vmatprep.subr.mxu0 0.0
  %2412 = vmatpush2.msra.mxu0 0.0
  %2413 = vmatprep.subr.mxu0 0.0
  %2414 = vmatpush2.msra.mxu0 0.0
  %2415 = vmatprep.subr.mxu0 0.0
  %2416 = vmatpush2.msra.mxu0 0.0
  %2417 = vmatprep.subr.mxu0 0.0
  %2418 = vmatpush2.msra.mxu0 0.0
  %2419 = vmatprep.subr.mxu0 0.0
  %2420 = vmatpush2.msra.mxu0 0.0
  %2421 = vmatprep.subr.mxu0 0.0
  %2422 = vmatpush2.msra.mxu0 0.0
  %2423 = vmatprep.subr.mxu0 0.0
  %2424 = vmatpush2.msra.mxu0 0.0
  %2425 = vmatprep.subr.mxu0 0.0
  %2426 = vmatpush2.msra.mxu0 0.0
  %2427 = vmatprep.subr.mxu0 0.0
  %2428 = vmatpush2.msra.mxu0 0.0
  %2429 = vmatprep.mubr.f32.mxu0 0.0
  %2430 = vmatmul.mubr.f32.gmra.mxu0 %v2363
  %v2431 = vpop.f32.mrf.mxu0
  %v2432 = vadd.f32 0.0, %v2431
  %v2433 = vpop.f32.mrf.mxu0
  %2434 = vdwg.mxu0
  %2435 = vst.msk [vmem:[#allocation2 + $0x8] sm:$0xff] %vm465, %v2432
  %v2436 = vld [vmem:[#allocation2] sm:$0xff]
  %v2437 = vld [vmem:[#allocation2 + $0x8] sm:$0xff]
  %s2438 = scalar_lea.vmem %s3, 448
  %v2439 = vld [vmem:[%s2438] sm:$0xff]
  %v2440 = vld [vmem:[%s2438 + $0x8] sm:$0xff]
  %v2441 = vld [vmem:[%s2438 + $0x10] sm:$0xff]
  %v2442 = vld [vmem:[%s2438 + $0x18] sm:$0xff]
  %s2443 = scalar_lea.vmem %s3, 96
  %v2444 = vld [vmem:[%s2443] sm:$0xff]
  %v2445 = vld [vmem:[%s2443 + $0x8] sm:$0xff]
  %v2446 = vld [vmem:[%s2443 + $0x10] sm:$0xff]
  %v2447 = vld [vmem:[%s2443 + $0x18] sm:$0xff]
  %v2448 = vld [vmem:[%s4 + $0x3] sm:$0x1]
  %v2449 = vlaneseq
  %v2450 = vshrl.u32 %v2449, 7
  %v2451 = vsub.s32 0, %v2450
  %v2452 = vrot.slane %v2448, %v2451
  %2453 = vmatprep.subr.mxu0 0.0
  %2454 = vmatpush1.msra.mxu0 0.0
  %2455 = vmatprep.subr.mxu0 0.0
  %2456 = vmatpush1.msra.mxu0 0.0
  %2457 = vmatprep.subr.mxu0 0.0
  %2458 = vmatpush1.msra.mxu0 0.0
  %2459 = vmatprep.subr.mxu0 0.0
  %2460 = vmatpush1.msra.mxu0 0.0
  %2461 = vmatprep.subr.mxu0 0.0
  %2462 = vmatpush1.msra.mxu0 0.0
  %2463 = vmatprep.subr.mxu0 0.0
  %2464 = vmatpush1.msra.mxu0 0.0
  %2465 = vmatprep.subr.mxu0 0.0
  %2466 = vmatpush1.msra.mxu0 0.0
  %2467 = vmatprep.subr.mxu0 0.0
  %2468 = vmatpush1.msra.mxu0 0.0
  %2469 = vmatprep.subr.mxu0 0.0
  %2470 = vmatpush1.msra.mxu0 0.0
  %2471 = vmatprep.subr.mxu0 0.0
  %2472 = vmatpush1.msra.mxu0 0.0
  %2473 = vmatprep.subr.mxu0 0.0
  %2474 = vmatpush1.msra.mxu0 0.0
  %2475 = vmatprep.subr.mxu0 0.0
  %2476 = vmatpush1.msra.mxu0 0.0
  %2477 = vmatprep.subr.mxu0 0.0
  %2478 = vmatpush1.msra.mxu0 %v2447
  %2479 = vmatprep.subr.mxu0 0.0
  %2480 = vmatpush1.msra.mxu0 %v2446
  %2481 = vmatprep.subr.mxu0 0.0
  %2482 = vmatpush1.msra.mxu0 %v2445
  %2483 = vmatprep.subr.mxu0 0.0
  %2484 = vmatpush1.msra.mxu0 %v2444
  %2485 = vmatprep.subr.mxu0 0.0
  %2486 = vmatpush2.msra.mxu0 0.0
  %2487 = vmatprep.subr.mxu0 0.0
  %2488 = vmatpush2.msra.mxu0 0.0
  %2489 = vmatprep.subr.mxu0 0.0
  %2490 = vmatpush2.msra.mxu0 0.0
  %2491 = vmatprep.subr.mxu0 0.0
  %2492 = vmatpush2.msra.mxu0 0.0
  %2493 = vmatprep.subr.mxu0 0.0
  %2494 = vmatpush2.msra.mxu0 0.0
  %2495 = vmatprep.subr.mxu0 0.0
  %2496 = vmatpush2.msra.mxu0 0.0
  %2497 = vmatprep.subr.mxu0 0.0
  %2498 = vmatpush2.msra.mxu0 0.0
  %2499 = vmatprep.subr.mxu0 0.0
  %2500 = vmatpush2.msra.mxu0 0.0
  %2501 = vmatprep.subr.mxu0 0.0
  %2502 = vmatpush2.msra.mxu0 0.0
  %2503 = vmatprep.subr.mxu0 0.0
  %2504 = vmatpush2.msra.mxu0 0.0
  %2505 = vmatprep.subr.mxu0 0.0
  %2506 = vmatpush2.msra.mxu0 0.0
  %2507 = vmatprep.subr.mxu0 0.0
  %2508 = vmatpush2.msra.mxu0 0.0
  %2509 = vmatprep.subr.mxu0 0.0
  %2510 = vmatpush2.msra.mxu0 0.0
  %2511 = vmatprep.subr.mxu0 0.0
  %2512 = vmatpush2.msra.mxu0 0.0
  %2513 = vmatprep.subr.mxu0 0.0
  %2514 = vmatpush2.msra.mxu0 0.0
  %2515 = vmatprep.subr.mxu0 0.0
  %2516 = vmatpush2.msra.mxu0 0.0
  %2517 = vmatprep.mubr.f32.mxu0 0.0
  %2518 = vmatmul.mubr.f32.gmra.mxu0 %v1874
  %v2519 = vpop.f32.mrf.mxu0
  %v2520 = vadd.f32 %v2452, %v2519
  %v2521 = vpop.f32.mrf.mxu0
  %2522 = vmatprep.mubr.f32.mxu0 0.0
  %2523 = vmatmul.mubr.f32.gmra.mxu0 %v1877
  %v2524 = vpop.f32.mrf.mxu0
  %v2525 = vadd.f32 %v2452, %v2524
  %v2526 = vpop.f32.mrf.mxu0
  %2527 = vdwg.mxu0
  %s2528 = scalar_lea.vmem %s3, 224
  %v2529 = vld [vmem:[%s2528] sm:$0xff]
  %v2530 = vld [vmem:[%s2528 + $0x8] sm:$0xff]
  %v2531 = vld [vmem:[%s2528 + $0x10] sm:$0xff]
  %v2532 = vld [vmem:[%s2528 + $0x18] sm:$0xff]
  %2533 = vmatprep.subr.mxu0 0.0
  %2534 = vmatpush1.msra.mxu0 0.0
  %2535 = vmatprep.subr.mxu0 0.0
  %2536 = vmatpush1.msra.mxu0 0.0
  %2537 = vmatprep.subr.mxu0 0.0
  %2538 = vmatpush1.msra.mxu0 0.0
  %2539 = vmatprep.subr.mxu0 0.0
  %2540 = vmatpush1.msra.mxu0 0.0
  %2541 = vmatprep.subr.mxu0 0.0
  %2542 = vmatpush1.msra.mxu0 0.0
  %2543 = vmatprep.subr.mxu0 0.0
  %2544 = vmatpush1.msra.mxu0 0.0
  %2545 = vmatprep.subr.mxu0 0.0
  %2546 = vmatpush1.msra.mxu0 0.0
  %2547 = vmatprep.subr.mxu0 0.0
  %2548 = vmatpush1.msra.mxu0 0.0
  %2549 = vmatprep.subr.mxu0 0.0
  %2550 = vmatpush1.msra.mxu0 0.0
  %2551 = vmatprep.subr.mxu0 0.0
  %2552 = vmatpush1.msra.mxu0 0.0
  %2553 = vmatprep.subr.mxu0 0.0
  %2554 = vmatpush1.msra.mxu0 0.0
  %2555 = vmatprep.subr.mxu0 0.0
  %2556 = vmatpush1.msra.mxu0 0.0
  %2557 = vmatprep.subr.mxu0 0.0
  %2558 = vmatpush1.msra.mxu0 %v2532
  %2559 = vmatprep.subr.mxu0 0.0
  %2560 = vmatpush1.msra.mxu0 %v2531
  %2561 = vmatprep.subr.mxu0 0.0
  %2562 = vmatpush1.msra.mxu0 %v2530
  %2563 = vmatprep.subr.mxu0 0.0
  %2564 = vmatpush1.msra.mxu0 %v2529
  %2565 = vmatprep.subr.mxu0 0.0
  %2566 = vmatpush2.msra.mxu0 0.0
  %2567 = vmatprep.subr.mxu0 0.0
  %2568 = vmatpush2.msra.mxu0 0.0
  %2569 = vmatprep.subr.mxu0 0.0
  %2570 = vmatpush2.msra.mxu0 0.0
  %2571 = vmatprep.subr.mxu0 0.0
  %2572 = vmatpush2.msra.mxu0 0.0
  %2573 = vmatprep.subr.mxu0 0.0
  %2574 = vmatpush2.msra.mxu0 0.0
  %2575 = vmatprep.subr.mxu0 0.0
  %2576 = vmatpush2.msra.mxu0 0.0
  %2577 = vmatprep.subr.mxu0 0.0
  %2578 = vmatpush2.msra.mxu0 0.0
  %2579 = vmatprep.subr.mxu0 0.0
  %2580 = vmatpush2.msra.mxu0 0.0
  %2581 = vmatprep.subr.mxu0 0.0
  %2582 = vmatpush2.msra.mxu0 0.0
  %2583 = vmatprep.subr.mxu0 0.0
  %2584 = vmatpush2.msra.mxu0 0.0
  %2585 = vmatprep.subr.mxu0 0.0
  %2586 = vmatpush2.msra.mxu0 0.0
  %2587 = vmatprep.subr.mxu0 0.0
  %2588 = vmatpush2.msra.mxu0 0.0
  %2589 = vmatprep.subr.mxu0 0.0
  %2590 = vmatpush2.msra.mxu0 0.0
  %2591 = vmatprep.subr.mxu0 0.0
  %2592 = vmatpush2.msra.mxu0 0.0
  %2593 = vmatprep.subr.mxu0 0.0
  %2594 = vmatpush2.msra.mxu0 0.0
  %2595 = vmatprep.subr.mxu0 0.0
  %2596 = vmatpush2.msra.mxu0 0.0
  %2597 = vmatprep.mubr.f32.mxu0 0.0
  %2598 = vmatmul.mubr.f32.gmra.mxu0 %v1874
  %v2599 = vpop.f32.mrf.mxu0
  %v2600 = vadd.f32 0.0, %v2599
  %v2601 = vpop.f32.mrf.mxu0
  %2602 = vmatprep.mubr.f32.mxu0 0.0
  %2603 = vmatmul.mubr.f32.gmra.mxu0 %v1877
  %v2604 = vpop.f32.mrf.mxu0
  %v2605 = vadd.f32 0.0, %v2604
  %v2606 = vpop.f32.mrf.mxu0
  %2607 = vdwg.mxu0
  %s2608 = scalar_lea.vmem %s3, 352
  %v2609 = vld [vmem:[%s2608] sm:$0xff]
  %v2610 = vld [vmem:[%s2608 + $0x8] sm:$0xff]
  %v2611 = vld [vmem:[%s2608 + $0x10] sm:$0xff]
  %v2612 = vld [vmem:[%s2608 + $0x18] sm:$0xff]
  %2613 = vmatprep.subr.mxu0 0.0
  %2614 = vmatpush1.msra.mxu0 0.0
  %2615 = vmatprep.subr.mxu0 0.0
  %2616 = vmatpush1.msra.mxu0 0.0
  %2617 = vmatprep.subr.mxu0 0.0
  %2618 = vmatpush1.msra.mxu0 0.0
  %2619 = vmatprep.subr.mxu0 0.0
  %2620 = vmatpush1.msra.mxu0 0.0
  %2621 = vmatprep.subr.mxu0 0.0
  %2622 = vmatpush1.msra.mxu0 0.0
  %2623 = vmatprep.subr.mxu0 0.0
  %2624 = vmatpush1.msra.mxu0 0.0
  %2625 = vmatprep.subr.mxu0 0.0
  %2626 = vmatpush1.msra.mxu0 0.0
  %2627 = vmatprep.subr.mxu0 0.0
  %2628 = vmatpush1.msra.mxu0 0.0
  %2629 = vmatprep.subr.mxu0 0.0
  %2630 = vmatpush1.msra.mxu0 0.0
  %2631 = vmatprep.subr.mxu0 0.0
  %2632 = vmatpush1.msra.mxu0 0.0
  %2633 = vmatprep.subr.mxu0 0.0
  %2634 = vmatpush1.msra.mxu0 0.0
  %2635 = vmatprep.subr.mxu0 0.0
  %2636 = vmatpush1.msra.mxu0 0.0
  %2637 = vmatprep.subr.mxu0 0.0
  %2638 = vmatpush1.msra.mxu0 %v2612
  %2639 = vmatprep.subr.mxu0 0.0
  %2640 = vmatpush1.msra.mxu0 %v2611
  %2641 = vmatprep.subr.mxu0 0.0
  %2642 = vmatpush1.msra.mxu0 %v2610
  %2643 = vmatprep.subr.mxu0 0.0
  %2644 = vmatpush1.msra.mxu0 %v2609
  %2645 = vmatprep.subr.mxu0 0.0
  %2646 = vmatpush2.msra.mxu0 0.0
  %2647 = vmatprep.subr.mxu0 0.0
  %2648 = vmatpush2.msra.mxu0 0.0
  %2649 = vmatprep.subr.mxu0 0.0
  %2650 = vmatpush2.msra.mxu0 0.0
  %2651 = vmatprep.subr.mxu0 0.0
  %2652 = vmatpush2.msra.mxu0 0.0
  %2653 = vmatprep.subr.mxu0 0.0
  %2654 = vmatpush2.msra.mxu0 0.0
  %2655 = vmatprep.subr.mxu0 0.0
  %2656 = vmatpush2.msra.mxu0 0.0
  %2657 = vmatprep.subr.mxu0 0.0
  %2658 = vmatpush2.msra.mxu0 0.0
  %2659 = vmatprep.subr.mxu0 0.0
  %2660 = vmatpush2.msra.mxu0 0.0
  %2661 = vmatprep.subr.mxu0 0.0
  %2662 = vmatpush2.msra.mxu0 0.0
  %2663 = vmatprep.subr.mxu0 0.0
  %2664 = vmatpush2.msra.mxu0 0.0
  %2665 = vmatprep.subr.mxu0 0.0
  %2666 = vmatpush2.msra.mxu0 0.0
  %2667 = vmatprep.subr.mxu0 0.0
  %2668 = vmatpush2.msra.mxu0 0.0
  %2669 = vmatprep.subr.mxu0 0.0
  %2670 = vmatpush2.msra.mxu0 0.0
  %2671 = vmatprep.subr.mxu0 0.0
  %2672 = vmatpush2.msra.mxu0 0.0
  %2673 = vmatprep.subr.mxu0 0.0
  %2674 = vmatpush2.msra.mxu0 0.0
  %2675 = vmatprep.subr.mxu0 0.0
  %2676 = vmatpush2.msra.mxu0 0.0
  %2677 = vmatprep.mubr.f32.mxu0 0.0
  %2678 = vmatmul.mubr.f32.gmra.mxu0 %v1874
  %v2679 = vpop.f32.mrf.mxu0
  %v2680 = vadd.f32 0.0, %v2679
  %v2681 = vpop.f32.mrf.mxu0
  %2682 = vmatprep.mubr.f32.mxu0 0.0
  %2683 = vmatmul.mubr.f32.gmra.mxu0 %v1877
  %v2684 = vpop.f32.mrf.mxu0
  %v2685 = vadd.f32 0.0, %v2684
  %v2686 = vpop.f32.mrf.mxu0
  %2687 = vdwg.mxu0
  %v2689 = vsel %vm465, %v2520, 0
  %v2692 = vsel %vm465, %v2600, 0
  %2694 = vmatprep.subr.mxu0 0.0
  %2695 = vmatpush1.xpose.msra.mxu0 0.0
  %2696 = vmatprep.subr.mxu0 0.0
  %2697 = vmatpush1.xpose.msra.mxu0 0.0
  %2698 = vmatprep.subr.mxu0 0.0
  %2699 = vmatpush1.xpose.msra.mxu0 0.0
  %2700 = vmatprep.subr.mxu0 0.0
  %2701 = vmatpush1.xpose.msra.mxu0 0.0
  %2702 = vmatprep.subr.mxu0 0.0
  %2703 = vmatpush1.xpose.msra.mxu0 0.0
  %2704 = vmatprep.subr.mxu0 0.0
  %2705 = vmatpush1.xpose.msra.mxu0 0.0
  %2706 = vmatprep.subr.mxu0 0.0
  %2707 = vmatpush1.xpose.msra.mxu0 0.0
  %2708 = vmatprep.subr.mxu0 0.0
  %2709 = vmatpush1.xpose.msra.mxu0 0.0
  %2710 = vmatprep.subr.mxu0 0.0
  %2711 = vmatpush1.xpose.msra.mxu0 0.0
  %2712 = vmatprep.subr.mxu0 0.0
  %2713 = vmatpush1.xpose.msra.mxu0 0.0
  %2714 = vmatprep.subr.mxu0 0.0
  %2715 = vmatpush1.xpose.msra.mxu0 0.0
  %2716 = vmatprep.subr.mxu0 0.0
  %2717 = vmatpush1.xpose.msra.mxu0 0.0
  %2718 = vmatprep.subr.mxu0 0.0
  %2719 = vmatpush1.xpose.msra.mxu0 0.0
  %2720 = vmatprep.subr.mxu0 0.0
  %2721 = vmatpush1.xpose.msra.mxu0 0.0
  %2722 = vmatprep.subr.mxu0 0.0
  %2723 = vmatpush1.xpose.msra.mxu0 0.0
  %2724 = vmatprep.subr.mxu0 0.0
  %2725 = vmatpush1.xpose.msra.mxu0 %v2692
  %2726 = vmatprep.subr.mxu0 0.0
  %2727 = vmatpush2.xpose.msra.mxu0 0.0
  %2728 = vmatprep.subr.mxu0 0.0
  %2729 = vmatpush2.xpose.msra.mxu0 0.0
  %2730 = vmatprep.subr.mxu0 0.0
  %2731 = vmatpush2.xpose.msra.mxu0 0.0
  %2732 = vmatprep.subr.mxu0 0.0
  %2733 = vmatpush2.xpose.msra.mxu0 0.0
  %2734 = vmatprep.subr.mxu0 0.0
  %2735 = vmatpush2.xpose.msra.mxu0 0.0
  %2736 = vmatprep.subr.mxu0 0.0
  %2737 = vmatpush2.xpose.msra.mxu0 0.0
  %2738 = vmatprep.subr.mxu0 0.0
  %2739 = vmatpush2.xpose.msra.mxu0 0.0
  %2740 = vmatprep.subr.mxu0 0.0
  %2741 = vmatpush2.xpose.msra.mxu0 0.0
  %2742 = vmatprep.subr.mxu0 0.0
  %2743 = vmatpush2.xpose.msra.mxu0 0.0
  %2744 = vmatprep.subr.mxu0 0.0
  %2745 = vmatpush2.xpose.msra.mxu0 0.0
  %2746 = vmatprep.subr.mxu0 0.0
  %2747 = vmatpush2.xpose.msra.mxu0 0.0
  %2748 = vmatprep.subr.mxu0 0.0
  %2749 = vmatpush2.xpose.msra.mxu0 0.0
  %2750 = vmatprep.subr.mxu0 0.0
  %2751 = vmatpush2.xpose.msra.mxu0 0.0
  %2752 = vmatprep.subr.mxu0 0.0
  %2753 = vmatpush2.xpose.msra.mxu0 0.0
  %2754 = vmatprep.subr.mxu0 0.0
  %2755 = vmatpush2.xpose.msra.mxu0 0.0
  %2756 = vmatprep.subr.mxu0 0.0
  %2757 = vmatpush2.xpose.msra.mxu0 0.0
  %2758 = vmatprep.mubr.f32.mxu0 0.0
  %2759 = vmatmul.mubr.f32.gmra.mxu0 %v2689
  %v2760 = vpop.f32.mrf.mxu0
  %v2761 = vadd.f32 %v464, %v2760
  %v2762 = vpop.f32.mrf.mxu0
  %2763 = vdwg.mxu0
  %v2764 = vsel %vm542, %v2761, -inf
  %2765 = vmax.xlane.f32.xlu0 %v2764
  %v2766 = vpop.xlane.xlu0 %2765
  %v2767 = vsub.f32 %v2761, %v2766
  %v2768 = vmul.f32 %v2767, 1.442695
  %v2769 = vpow.pop %v2768
  %v2770 = vsel %vm542, %v2769, 0.0
  %2771 = vadd.xlane.f32.xlu0 %v2770
  %v2772 = vpop.xlane.xlu0 %2771
  %v2773 = vrcp.pop %v2772
  %v2774 = vmul.f32 %v2769, %v2773
  %v2776 = vsel %vm542, %v2774, 0
  %2778 = vmatprep.subr.mxu0 0.0
  %2779 = vmatpush1.msra.mxu0 0.0
  %2780 = vmatprep.subr.mxu0 0.0
  %2781 = vmatpush1.msra.mxu0 0.0
  %2782 = vmatprep.subr.mxu0 0.0
  %2783 = vmatpush1.msra.mxu0 0.0
  %2784 = vmatprep.subr.mxu0 0.0
  %2785 = vmatpush1.msra.mxu0 0.0
  %2786 = vmatprep.subr.mxu0 0.0
  %2787 = vmatpush1.msra.mxu0 0.0
  %2788 = vmatprep.subr.mxu0 0.0
  %2789 = vmatpush1.msra.mxu0 0.0
  %2790 = vmatprep.subr.mxu0 0.0
  %2791 = vmatpush1.msra.mxu0 0.0
  %2792 = vmatprep.subr.mxu0 0.0
  %2793 = vmatpush1.msra.mxu0 0.0
  %2794 = vmatprep.subr.mxu0 0.0
  %2795 = vmatpush1.msra.mxu0 0.0
  %2796 = vmatprep.subr.mxu0 0.0
  %2797 = vmatpush1.msra.mxu0 0.0
  %2798 = vmatprep.subr.mxu0 0.0
  %2799 = vmatpush1.msra.mxu0 0.0
  %2800 = vmatprep.subr.mxu0 0.0
  %2801 = vmatpush1.msra.mxu0 0.0
  %2802 = vmatprep.subr.mxu0 0.0
  %2803 = vmatpush1.msra.mxu0 0.0
  %2804 = vmatprep.subr.mxu0 0.0
  %2805 = vmatpush1.msra.mxu0 0.0
  %2806 = vmatprep.subr.mxu0 0.0
  %2807 = vmatpush1.msra.mxu0 0.0
  %2808 = vmatprep.subr.mxu0 0.0
  %2809 = vmatpush1.msra.mxu0 %v2680
  %2810 = vmatprep.subr.mxu0 0.0
  %2811 = vmatpush2.msra.mxu0 0.0
  %2812 = vmatprep.subr.mxu0 0.0
  %2813 = vmatpush2.msra.mxu0 0.0
  %2814 = vmatprep.subr.mxu0 0.0
  %2815 = vmatpush2.msra.mxu0 0.0
  %2816 = vmatprep.subr.mxu0 0.0
  %2817 = vmatpush2.msra.mxu0 0.0
  %2818 = vmatprep.subr.mxu0 0.0
  %2819 = vmatpush2.msra.mxu0 0.0
  %2820 = vmatprep.subr.mxu0 0.0
  %2821 = vmatpush2.msra.mxu0 0.0
  %2822 = vmatprep.subr.mxu0 0.0
  %2823 = vmatpush2.msra.mxu0 0.0
  %2824 = vmatprep.subr.mxu0 0.0
  %2825 = vmatpush2.msra.mxu0 0.0
  %2826 = vmatprep.subr.mxu0 0.0
  %2827 = vmatpush2.msra.mxu0 0.0
  %2828 = vmatprep.subr.mxu0 0.0
  %2829 = vmatpush2.msra.mxu0 0.0
  %2830 = vmatprep.subr.mxu0 0.0
  %2831 = vmatpush2.msra.mxu0 0.0
  %2832 = vmatprep.subr.mxu0 0.0
  %2833 = vmatpush2.msra.mxu0 0.0
  %2834 = vmatprep.subr.mxu0 0.0
  %2835 = vmatpush2.msra.mxu0 0.0
  %2836 = vmatprep.subr.mxu0 0.0
  %2837 = vmatpush2.msra.mxu0 0.0
  %2838 = vmatprep.subr.mxu0 0.0
  %2839 = vmatpush2.msra.mxu0 0.0
  %2840 = vmatprep.subr.mxu0 0.0
  %2841 = vmatpush2.msra.mxu0 0.0
  %2842 = vmatprep.mubr.f32.mxu0 0.0
  %2843 = vmatmul.mubr.f32.gmra.mxu0 %v2776
  %v2844 = vpop.f32.mrf.mxu0
  %v2845 = vadd.f32 0.0, %v2844
  %v2846 = vpop.f32.mrf.mxu0
  %2847 = vdwg.mxu0
  %2848 = vst.msk [vmem:[#allocation2] sm:$0xff] %vm465, %v2845
  %v2850 = vsel %vm465, %v2525, 0
  %v2853 = vsel %vm465, %v2605, 0
  %2855 = vmatprep.subr.mxu0 0.0
  %2856 = vmatpush1.xpose.msra.mxu0 0.0
  %2857 = vmatprep.subr.mxu0 0.0
  %2858 = vmatpush1.xpose.msra.mxu0 0.0
  %2859 = vmatprep.subr.mxu0 0.0
  %2860 = vmatpush1.xpose.msra.mxu0 0.0
  %2861 = vmatprep.subr.mxu0 0.0
  %2862 = vmatpush1.xpose.msra.mxu0 0.0
  %2863 = vmatprep.subr.mxu0 0.0
  %2864 = vmatpush1.xpose.msra.mxu0 0.0
  %2865 = vmatprep.subr.mxu0 0.0
  %2866 = vmatpush1.xpose.msra.mxu0 0.0
  %2867 = vmatprep.subr.mxu0 0.0
  %2868 = vmatpush1.xpose.msra.mxu0 0.0
  %2869 = vmatprep.subr.mxu0 0.0
  %2870 = vmatpush1.xpose.msra.mxu0 0.0
  %2871 = vmatprep.subr.mxu0 0.0
  %2872 = vmatpush1.xpose.msra.mxu0 0.0
  %2873 = vmatprep.subr.mxu0 0.0
  %2874 = vmatpush1.xpose.msra.mxu0 0.0
  %2875 = vmatprep.subr.mxu0 0.0
  %2876 = vmatpush1.xpose.msra.mxu0 0.0
  %2877 = vmatprep.subr.mxu0 0.0
  %2878 = vmatpush1.xpose.msra.mxu0 0.0
  %2879 = vmatprep.subr.mxu0 0.0
  %2880 = vmatpush1.xpose.msra.mxu0 0.0
  %2881 = vmatprep.subr.mxu0 0.0
  %2882 = vmatpush1.xpose.msra.mxu0 0.0
  %2883 = vmatprep.subr.mxu0 0.0
  %2884 = vmatpush1.xpose.msra.mxu0 0.0
  %2885 = vmatprep.subr.mxu0 0.0
  %2886 = vmatpush1.xpose.msra.mxu0 %v2853
  %2887 = vmatprep.subr.mxu0 0.0
  %2888 = vmatpush2.xpose.msra.mxu0 0.0
  %2889 = vmatprep.subr.mxu0 0.0
  %2890 = vmatpush2.xpose.msra.mxu0 0.0
  %2891 = vmatprep.subr.mxu0 0.0
  %2892 = vmatpush2.xpose.msra.mxu0 0.0
  %2893 = vmatprep.subr.mxu0 0.0
  %2894 = vmatpush2.xpose.msra.mxu0 0.0
  %2895 = vmatprep.subr.mxu0 0.0
  %2896 = vmatpush2.xpose.msra.mxu0 0.0
  %2897 = vmatprep.subr.mxu0 0.0
  %2898 = vmatpush2.xpose.msra.mxu0 0.0
  %2899 = vmatprep.subr.mxu0 0.0
  %2900 = vmatpush2.xpose.msra.mxu0 0.0
  %2901 = vmatprep.subr.mxu0 0.0
  %2902 = vmatpush2.xpose.msra.mxu0 0.0
  %2903 = vmatprep.subr.mxu0 0.0
  %2904 = vmatpush2.xpose.msra.mxu0 0.0
  %2905 = vmatprep.subr.mxu0 0.0
  %2906 = vmatpush2.xpose.msra.mxu0 0.0
  %2907 = vmatprep.subr.mxu0 0.0
  %2908 = vmatpush2.xpose.msra.mxu0 0.0
  %2909 = vmatprep.subr.mxu0 0.0
  %2910 = vmatpush2.xpose.msra.mxu0 0.0
  %2911 = vmatprep.subr.mxu0 0.0
  %2912 = vmatpush2.xpose.msra.mxu0 0.0
  %2913 = vmatprep.subr.mxu0 0.0
  %2914 = vmatpush2.xpose.msra.mxu0 0.0
  %2915 = vmatprep.subr.mxu0 0.0
  %2916 = vmatpush2.xpose.msra.mxu0 0.0
  %2917 = vmatprep.subr.mxu0 0.0
  %2918 = vmatpush2.xpose.msra.mxu0 0.0
  %2919 = vmatprep.mubr.f32.mxu0 0.0
  %2920 = vmatmul.mubr.f32.gmra.mxu0 %v2850
  %v2921 = vpop.f32.mrf.mxu0
  %v2922 = vadd.f32 %v631, %v2921
  %v2923 = vpop.f32.mrf.mxu0
  %2924 = vdwg.mxu0
  %v2925 = vsel %vm542, %v2922, -inf
  %2926 = vmax.xlane.f32.xlu0 %v2925
  %v2927 = vpop.xlane.xlu0 %2926
  %v2928 = vsub.f32 %v2922, %v2927
  %v2929 = vmul.f32 %v2928, 1.442695
  %v2930 = vpow.pop %v2929
  %v2931 = vsel %vm542, %v2930, 0.0
  %2932 = vadd.xlane.f32.xlu0 %v2931
  %v2933 = vpop.xlane.xlu0 %2932
  %v2934 = vrcp.pop %v2933
  %v2935 = vmul.f32 %v2930, %v2934
  %v2937 = vsel %vm542, %v2935, 0
  %2939 = vmatprep.subr.mxu0 0.0
  %2940 = vmatpush1.msra.mxu0 0.0
  %2941 = vmatprep.subr.mxu0 0.0
  %2942 = vmatpush1.msra.mxu0 0.0
  %2943 = vmatprep.subr.mxu0 0.0
  %2944 = vmatpush1.msra.mxu0 0.0
  %2945 = vmatprep.subr.mxu0 0.0
  %2946 = vmatpush1.msra.mxu0 0.0
  %2947 = vmatprep.subr.mxu0 0.0
  %2948 = vmatpush1.msra.mxu0 0.0
  %2949 = vmatprep.subr.mxu0 0.0
  %2950 = vmatpush1.msra.mxu0 0.0
  %2951 = vmatprep.subr.mxu0 0.0
  %2952 = vmatpush1.msra.mxu0 0.0
  %2953 = vmatprep.subr.mxu0 0.0
  %2954 = vmatpush1.msra.mxu0 0.0
  %2955 = vmatprep.subr.mxu0 0.0
  %2956 = vmatpush1.msra.mxu0 0.0
  %2957 = vmatprep.subr.mxu0 0.0
  %2958 = vmatpush1.msra.mxu0 0.0
  %2959 = vmatprep.subr.mxu0 0.0
  %2960 = vmatpush1.msra.mxu0 0.0
  %2961 = vmatprep.subr.mxu0 0.0
  %2962 = vmatpush1.msra.mxu0 0.0
  %2963 = vmatprep.subr.mxu0 0.0
  %2964 = vmatpush1.msra.mxu0 0.0
  %2965 = vmatprep.subr.mxu0 0.0
  %2966 = vmatpush1.msra.mxu0 0.0
  %2967 = vmatprep.subr.mxu0 0.0
  %2968 = vmatpush1.msra.mxu0 0.0
  %2969 = vmatprep.subr.mxu0 0.0
  %2970 = vmatpush1.msra.mxu0 %v2685
  %2971 = vmatprep.subr.mxu0 0.0
  %2972 = vmatpush2.msra.mxu0 0.0
  %2973 = vmatprep.subr.mxu0 0.0
  %2974 = vmatpush2.msra.mxu0 0.0
  %2975 = vmatprep.subr.mxu0 0.0
  %2976 = vmatpush2.msra.mxu0 0.0
  %2977 = vmatprep.subr.mxu0 0.0
  %2978 = vmatpush2.msra.mxu0 0.0
  %2979 = vmatprep.subr.mxu0 0.0
  %2980 = vmatpush2.msra.mxu0 0.0
  %2981 = vmatprep.subr.mxu0 0.0
  %2982 = vmatpush2.msra.mxu0 0.0
  %2983 = vmatprep.subr.mxu0 0.0
  %2984 = vmatpush2.msra.mxu0 0.0
  %2985 = vmatprep.subr.mxu0 0.0
  %2986 = vmatpush2.msra.mxu0 0.0
  %2987 = vmatprep.subr.mxu0 0.0
  %2988 = vmatpush2.msra.mxu0 0.0
  %2989 = vmatprep.subr.mxu0 0.0
  %2990 = vmatpush2.msra.mxu0 0.0
  %2991 = vmatprep.subr.mxu0 0.0
  %2992 = vmatpush2.msra.mxu0 0.0
  %2993 = vmatprep.subr.mxu0 0.0
  %2994 = vmatpush2.msra.mxu0 0.0
  %2995 = vmatprep.subr.mxu0 0.0
  %2996 = vmatpush2.msra.mxu0 0.0
  %2997 = vmatprep.subr.mxu0 0.0
  %2998 = vmatpush2.msra.mxu0 0.0
  %2999 = vmatprep.subr.mxu0 0.0
  %3000 = vmatpush2.msra.mxu0 0.0
  %3001 = vmatprep.subr.mxu0 0.0
  %3002 = vmatpush2.msra.mxu0 0.0
  %3003 = vmatprep.mubr.f32.mxu0 0.0
  %3004 = vmatmul.mubr.f32.gmra.mxu0 %v2937
  %v3005 = vpop.f32.mrf.mxu0
  %v3006 = vadd.f32 0.0, %v3005
  %v3007 = vpop.f32.mrf.mxu0
  %3008 = vdwg.mxu0
  %3009 = vst.msk [vmem:[#allocation2 + $0x8] sm:$0xff] %vm465, %v3006
  %v3010 = vld [vmem:[#allocation2] sm:$0xff]
  %v3011 = vld [vmem:[#allocation2 + $0x8] sm:$0xff]
  %s3012 = scalar_lea.vmem %s3, 480
  %v3013 = vld [vmem:[%s3012] sm:$0xff]
  %v3014 = vld [vmem:[%s3012 + $0x8] sm:$0xff]
  %v3015 = vld [vmem:[%s3012 + $0x10] sm:$0xff]
  %v3016 = vld [vmem:[%s3012 + $0x18] sm:$0xff]
  %v3018 = vsel %vm465, %v3010, 0
  %v3021 = vsel %vm465, %v3011, 0
  %v3024 = vsel %vm465, %v3013, 0
  %v3027 = vsel %vm465, %v3014, 0
  %v3030 = vsel %vm465, %v3015, 0
  %v3033 = vsel %vm465, %v3016, 0
  %3035 = vmatprep.subr.mxu0 0.0
  %3036 = vmatpush1.xpose.msra.mxu0 0.0
  %3037 = vmatprep.subr.mxu0 0.0
  %3038 = vmatpush1.xpose.msra.mxu0 0.0
  %3039 = vmatprep.subr.mxu0 0.0
  %3040 = vmatpush1.xpose.msra.mxu0 0.0
  %3041 = vmatprep.subr.mxu0 0.0
  %3042 = vmatpush1.xpose.msra.mxu0 0.0
  %3043 = vmatprep.subr.mxu0 0.0
  %3044 = vmatpush1.xpose.msra.mxu0 0.0
  %3045 = vmatprep.subr.mxu0 0.0
  %3046 = vmatpush1.xpose.msra.mxu0 0.0
  %3047 = vmatprep.subr.mxu0 0.0
  %3048 = vmatpush1.xpose.msra.mxu0 0.0
  %3049 = vmatprep.subr.mxu0 0.0
  %3050 = vmatpush1.xpose.msra.mxu0 0.0
  %3051 = vmatprep.subr.mxu0 0.0
  %3052 = vmatpush1.xpose.msra.mxu0 0.0
  %3053 = vmatprep.subr.mxu0 0.0
  %3054 = vmatpush1.xpose.msra.mxu0 0.0
  %3055 = vmatprep.subr.mxu0 0.0
  %3056 = vmatpush1.xpose.msra.mxu0 0.0
  %3057 = vmatprep.subr.mxu0 0.0
  %3058 = vmatpush1.xpose.msra.mxu0 0.0
  %3059 = vmatprep.subr.mxu0 0.0
  %3060 = vmatpush1.xpose.msra.mxu0 %v3033
  %3061 = vmatprep.subr.mxu0 0.0
  %3062 = vmatpush1.xpose.msra.mxu0 %v3030
  %3063 = vmatprep.subr.mxu0 0.0
  %3064 = vmatpush1.xpose.msra.mxu0 %v3027
  %3065 = vmatprep.subr.mxu0 0.0
  %3066 = vmatpush1.xpose.msra.mxu0 %v3024
  %3067 = vmatprep.subr.mxu0 0.0
  %3068 = vmatpush2.xpose.msra.mxu0 0.0
  %3069 = vmatprep.subr.mxu0 0.0
  %3070 = vmatpush2.xpose.msra.mxu0 0.0
  %3071 = vmatprep.subr.mxu0 0.0
  %3072 = vmatpush2.xpose.msra.mxu0 0.0
  %3073 = vmatprep.subr.mxu0 0.0
  %3074 = vmatpush2.xpose.msra.mxu0 0.0
  %3075 = vmatprep.subr.mxu0 0.0
  %3076 = vmatpush2.xpose.msra.mxu0 0.0
  %3077 = vmatprep.subr.mxu0 0.0
  %3078 = vmatpush2.xpose.msra.mxu0 0.0
  %3079 = vmatprep.subr.mxu0 0.0
  %3080 = vmatpush2.xpose.msra.mxu0 0.0
  %3081 = vmatprep.subr.mxu0 0.0
  %3082 = vmatpush2.xpose.msra.mxu0 0.0
  %3083 = vmatprep.subr.mxu0 0.0
  %3084 = vmatpush2.xpose.msra.mxu0 0.0
  %3085 = vmatprep.subr.mxu0 0.0
  %3086 = vmatpush2.xpose.msra.mxu0 0.0
  %3087 = vmatprep.subr.mxu0 0.0
  %3088 = vmatpush2.xpose.msra.mxu0 0.0
  %3089 = vmatprep.subr.mxu0 0.0
  %3090 = vmatpush2.xpose.msra.mxu0 0.0
  %3091 = vmatprep.subr.mxu0 0.0
  %3092 = vmatpush2.xpose.msra.mxu0 0.0
  %3093 = vmatprep.subr.mxu0 0.0
  %3094 = vmatpush2.xpose.msra.mxu0 0.0
  %3095 = vmatprep.subr.mxu0 0.0
  %3096 = vmatpush2.xpose.msra.mxu0 0.0
  %3097 = vmatprep.subr.mxu0 0.0
  %3098 = vmatpush2.xpose.msra.mxu0 0.0
  %3099 = vmatprep.mubr.f32.mxu0 0.0
  %3100 = vmatmul.mubr.f32.gmra.mxu0 %v3018
  %v3101 = vpop.f32.mrf.mxu0
  %v3102 = vadd.f32 0.0, %v3101
  %v3103 = vpop.f32.mrf.mxu0
  %3104 = vmatprep.mubr.f32.mxu0 0.0
  %3105 = vmatmul.mubr.f32.gmra.mxu0 %v3021
  %v3106 = vpop.f32.mrf.mxu0
  %v3107 = vadd.f32 0.0, %v3106
  %v3108 = vpop.f32.mrf.mxu0
  %3109 = vdwg.mxu0
  %v3111 = vsel %vm465, %v2436, 0
  %v3114 = vsel %vm465, %v2437, 0
  %v3117 = vsel %vm465, %v2439, 0
  %v3120 = vsel %vm465, %v2440, 0
  %v3123 = vsel %vm465, %v2441, 0
  %v3126 = vsel %vm465, %v2442, 0
  %3128 = vmatprep.subr.mxu0 0.0
  %3129 = vmatpush1.xpose.msra.mxu0 0.0
  %3130 = vmatprep.subr.mxu0 0.0
  %3131 = vmatpush1.xpose.msra.mxu0 0.0
  %3132 = vmatprep.subr.mxu0 0.0
  %3133 = vmatpush1.xpose.msra.mxu0 0.0
  %3134 = vmatprep.subr.mxu0 0.0
  %3135 = vmatpush1.xpose.msra.mxu0 0.0
  %3136 = vmatprep.subr.mxu0 0.0
  %3137 = vmatpush1.xpose.msra.mxu0 0.0
  %3138 = vmatprep.subr.mxu0 0.0
  %3139 = vmatpush1.xpose.msra.mxu0 0.0
  %3140 = vmatprep.subr.mxu0 0.0
  %3141 = vmatpush1.xpose.msra.mxu0 0.0
  %3142 = vmatprep.subr.mxu0 0.0
  %3143 = vmatpush1.xpose.msra.mxu0 0.0
  %3144 = vmatprep.subr.mxu0 0.0
  %3145 = vmatpush1.xpose.msra.mxu0 0.0
  %3146 = vmatprep.subr.mxu0 0.0
  %3147 = vmatpush1.xpose.msra.mxu0 0.0
  %3148 = vmatprep.subr.mxu0 0.0
  %3149 = vmatpush1.xpose.msra.mxu0 0.0
  %3150 = vmatprep.subr.mxu0 0.0
  %3151 = vmatpush1.xpose.msra.mxu0 0.0
  %3152 = vmatprep.subr.mxu0 0.0
  %3153 = vmatpush1.xpose.msra.mxu0 %v3126
  %3154 = vmatprep.subr.mxu0 0.0
  %3155 = vmatpush1.xpose.msra.mxu0 %v3123
  %3156 = vmatprep.subr.mxu0 0.0
  %3157 = vmatpush1.xpose.msra.mxu0 %v3120
  %3158 = vmatprep.subr.mxu0 0.0
  %3159 = vmatpush1.xpose.msra.mxu0 %v3117
  %3160 = vmatprep.subr.mxu0 0.0
  %3161 = vmatpush2.xpose.msra.mxu0 0.0
  %3162 = vmatprep.subr.mxu0 0.0
  %3163 = vmatpush2.xpose.msra.mxu0 0.0
  %3164 = vmatprep.subr.mxu0 0.0
  %3165 = vmatpush2.xpose.msra.mxu0 0.0
  %3166 = vmatprep.subr.mxu0 0.0
  %3167 = vmatpush2.xpose.msra.mxu0 0.0
  %3168 = vmatprep.subr.mxu0 0.0
  %3169 = vmatpush2.xpose.msra.mxu0 0.0
  %3170 = vmatprep.subr.mxu0 0.0
  %3171 = vmatpush2.xpose.msra.mxu0 0.0
  %3172 = vmatprep.subr.mxu0 0.0
  %3173 = vmatpush2.xpose.msra.mxu0 0.0
  %3174 = vmatprep.subr.mxu0 0.0
  %3175 = vmatpush2.xpose.msra.mxu0 0.0
  %3176 = vmatprep.subr.mxu0 0.0
  %3177 = vmatpush2.xpose.msra.mxu0 0.0
  %3178 = vmatprep.subr.mxu0 0.0
  %3179 = vmatpush2.xpose.msra.mxu0 0.0
  %3180 = vmatprep.subr.mxu0 0.0
  %3181 = vmatpush2.xpose.msra.mxu0 0.0
  %3182 = vmatprep.subr.mxu0 0.0
  %3183 = vmatpush2.xpose.msra.mxu0 0.0
  %3184 = vmatprep.subr.mxu0 0.0
  %3185 = vmatpush2.xpose.msra.mxu0 0.0
  %3186 = vmatprep.subr.mxu0 0.0
  %3187 = vmatpush2.xpose.msra.mxu0 0.0
  %3188 = vmatprep.subr.mxu0 0.0
  %3189 = vmatpush2.xpose.msra.mxu0 0.0
  %3190 = vmatprep.subr.mxu0 0.0
  %3191 = vmatpush2.xpose.msra.mxu0 0.0
  %3192 = vmatprep.mubr.f32.mxu0 0.0
  %3193 = vmatmul.mubr.f32.gmra.mxu0 %v3111
  %v3194 = vpop.f32.mrf.mxu0
  %v3195 = vadd.f32 %v3102, %v3194
  %v3196 = vpop.f32.mrf.mxu0
  %3197 = vmatprep.mubr.f32.mxu0 0.0
  %3198 = vmatmul.mubr.f32.gmra.mxu0 %v3114
  %v3199 = vpop.f32.mrf.mxu0
  %v3200 = vadd.f32 %v3107, %v3199
  %v3201 = vpop.f32.mrf.mxu0
  %3202 = vdwg.mxu0
  %v3203 = vld [vmem:[%s7 + $0x8] sm:$0x1]
  %v3204 = vlaneseq
  %v3205 = vshrl.u32 %v3204, 7
  %v3206 = vsub.s32 0, %v3205
  %v3207 = vrot.slane %v3203, %v3206
  %v3208 = vadd.f32 %v3195, %v3207
  %v3209 = vadd.f32 %v3200, %v3207
  %v3210 = vadd.f32 %v3208, %v1861
  %v3211 = vadd.f32 %v3209, %v1862
  %v3212 = vld [vmem:[%s7 + $0x9] sm:$0x1]
  %v3213 = vld [vmem:[%s7 + $0xa] sm:$0x1]
  %v3214 = vsel %vm165, %v3210, 0.0
  %3215 = vadd.xlane.f32.xlu0 %v3214
  %v3216 = vpop.xlane.xlu0 %3215
  %v3217 = vsel %vm165, %v3211, 0.0
  %3218 = vadd.xlane.f32.xlu0 %v3217
  %v3219 = vpop.xlane.xlu0 %3218
  %v3220 = vmul.f32 %v3216, %v172
  %v3221 = vmul.f32 %v3219, %v172
  %v3222 = vsub.f32 %v3210, %v3220
  %v3223 = vsub.f32 %v3211, %v3221
  %v3224 = vmul.f32 %v3222, %v3222
  %v3225 = vmul.f32 %v3223, %v3223
  %v3226 = vsel %vm165, %v3224, 0.0
  %3227 = vadd.xlane.f32.xlu0 %v3226
  %v3228 = vpop.xlane.xlu0 %3227
  %v3229 = vsel %vm165, %v3225, 0.0
  %3230 = vadd.xlane.f32.xlu0 %v3229
  %v3231 = vpop.xlane.xlu0 %3230
  %v3232 = vmul.f32 %v3228, %v172
  %v3233 = vmul.f32 %v3231, %v172
  %v3234 = vadd.f32 %v3232, 1e-12
  %v3235 = vadd.f32 %v3233, 1e-12
  %v3236 = vrsqrt.pop %v3234
  %v3237 = vrsqrt.pop %v3235
  %v3238 = vmul.f32 %v3222, %v3236
  %v3239 = vmul.f32 %v3223, %v3237
  %v3240 = vlaneseq
  %v3241 = vshrl.u32 %v3240, 7
  %v3242 = vsub.s32 0, %v3241
  %v3243 = vrot.slane %v3212, %v3242
  %v3244 = vmul.f32 %v3238, %v3243
  %v3245 = vmul.f32 %v3239, %v3243
  %v3246 = vlaneseq
  %v3247 = vshrl.u32 %v3246, 7
  %v3248 = vsub.s32 0, %v3247
  %v3249 = vrot.slane %v3213, %v3248
  %v3250 = vadd.f32 %v3244, %v3249
  %v3251 = vadd.f32 %v3245, %v3249
  %s3252 = scalar_lea.vmem %s5, 32
  %v3253 = vld [vmem:[%s3252] sm:$0xff]
  %v3254 = vld [vmem:[%s3252 + $0x8] sm:$0xff]
  %v3255 = vld [vmem:[%s3252 + $0x10] sm:$0xff]
  %v3256 = vld [vmem:[%s3252 + $0x18] sm:$0xff]
  %v3257 = vld [vmem:[%s6 + $0x1] sm:$0x1]
  %v3258 = vlaneseq
  %v3259 = vshrl.u32 %v3258, 7
  %v3260 = vsub.s32 0, %v3259
  %v3261 = vrot.slane %v3257, %v3260
  %v3263 = vsel %vm165, %v3250, 0
  %v3266 = vsel %vm165, %v3251, 0
  %3268 = vmatprep.subr.mxu0 0.0
  %3269 = vmatpush1.msra.mxu0 0.0
  %3270 = vmatprep.subr.mxu0 0.0
  %3271 = vmatpush1.msra.mxu0 0.0
  %3272 = vmatprep.subr.mxu0 0.0
  %3273 = vmatpush1.msra.mxu0 0.0
  %3274 = vmatprep.subr.mxu0 0.0
  %3275 = vmatpush1.msra.mxu0 0.0
  %3276 = vmatprep.subr.mxu0 0.0
  %3277 = vmatpush1.msra.mxu0 0.0
  %3278 = vmatprep.subr.mxu0 0.0
  %3279 = vmatpush1.msra.mxu0 0.0
  %3280 = vmatprep.subr.mxu0 0.0
  %3281 = vmatpush1.msra.mxu0 0.0
  %3282 = vmatprep.subr.mxu0 0.0
  %3283 = vmatpush1.msra.mxu0 0.0
  %3284 = vmatprep.subr.mxu0 0.0
  %3285 = vmatpush1.msra.mxu0 0.0
  %3286 = vmatprep.subr.mxu0 0.0
  %3287 = vmatpush1.msra.mxu0 0.0
  %3288 = vmatprep.subr.mxu0 0.0
  %3289 = vmatpush1.msra.mxu0 0.0
  %3290 = vmatprep.subr.mxu0 0.0
  %3291 = vmatpush1.msra.mxu0 0.0
  %3292 = vmatprep.subr.mxu0 0.0
  %3293 = vmatpush1.msra.mxu0 %v3256
  %3294 = vmatprep.subr.mxu0 0.0
  %3295 = vmatpush1.msra.mxu0 %v3255
  %3296 = vmatprep.subr.mxu0 0.0
  %3297 = vmatpush1.msra.mxu0 %v3254
  %3298 = vmatprep.subr.mxu0 0.0
  %3299 = vmatpush1.msra.mxu0 %v3253
  %3300 = vmatprep.subr.mxu0 0.0
  %3301 = vmatpush2.msra.mxu0 0.0
  %3302 = vmatprep.subr.mxu0 0.0
  %3303 = vmatpush2.msra.mxu0 0.0
  %3304 = vmatprep.subr.mxu0 0.0
  %3305 = vmatpush2.msra.mxu0 0.0
  %3306 = vmatprep.subr.mxu0 0.0
  %3307 = vmatpush2.msra.mxu0 0.0
  %3308 = vmatprep.subr.mxu0 0.0
  %3309 = vmatpush2.msra.mxu0 0.0
  %3310 = vmatprep.subr.mxu0 0.0
  %3311 = vmatpush2.msra.mxu0 0.0
  %3312 = vmatprep.subr.mxu0 0.0
  %3313 = vmatpush2.msra.mxu0 0.0
  %3314 = vmatprep.subr.mxu0 0.0
  %3315 = vmatpush2.msra.mxu0 0.0
  %3316 = vmatprep.subr.mxu0 0.0
  %3317 = vmatpush2.msra.mxu0 0.0
  %3318 = vmatprep.subr.mxu0 0.0
  %3319 = vmatpush2.msra.mxu0 0.0
  %3320 = vmatprep.subr.mxu0 0.0
  %3321 = vmatpush2.msra.mxu0 0.0
  %3322 = vmatprep.subr.mxu0 0.0
  %3323 = vmatpush2.msra.mxu0 0.0
  %3324 = vmatprep.subr.mxu0 0.0
  %3325 = vmatpush2.msra.mxu0 0.0
  %3326 = vmatprep.subr.mxu0 0.0
  %3327 = vmatpush2.msra.mxu0 0.0
  %3328 = vmatprep.subr.mxu0 0.0
  %3329 = vmatpush2.msra.mxu0 0.0
  %3330 = vmatprep.subr.mxu0 0.0
  %3331 = vmatpush2.msra.mxu0 0.0
  %3332 = vmatprep.mubr.f32.mxu0 0.0
  %3333 = vmatmul.mubr.f32.gmra.mxu0 %v3263
  %v3334 = vpop.f32.mrf.mxu0
  %v3335 = vadd.f32 %v3261, %v3334
  %v3336 = vpop.f32.mrf.mxu0
  %3337 = vmatprep.mubr.f32.mxu0 0.0
  %3338 = vmatmul.mubr.f32.gmra.mxu0 %v3266
  %v3339 = vpop.f32.mrf.mxu0
  %v3340 = vadd.f32 %v3261, %v3339
  %v3341 = vpop.f32.mrf.mxu0
  %3342 = vdwg.mxu0
  %v3343 = vmul.f32 %v3335, %v3335
  %v3344 = vmul.f32 %v3340, %v3340
  %v3345 = vmul.f32 %v3335, %v3343
  %v3346 = vmul.f32 %v3340, %v3344
  %v3347 = vmul.f32 %v3345, 0.044715
  %v3348 = vmul.f32 %v3346, 0.044715
  %v3349 = vadd.f32 %v3335, %v3347
  %v3350 = vadd.f32 %v3340, %v3348
  %v3351 = vmul.f32 %v3349, 0.7978846
  %v3352 = vmul.f32 %v3350, 0.7978846
  %v3353 = vtanh.pop %v3351
  %v3354 = vtanh.pop %v3352
  %v3355 = vadd.f32 %v3353, 1.0
  %v3356 = vadd.f32 %v3354, 1.0
  %v3357 = vmul.f32 %v3355, 0.5
  %v3358 = vmul.f32 %v3356, 0.5
  %v3359 = vmul.f32 %v3335, %v3357
  %v3360 = vmul.f32 %v3340, %v3358
  %s3361 = scalar_lea.vmem %s5, 96
  %v3362 = vld [vmem:[%s3361] sm:$0xff]
  %v3363 = vld [vmem:[%s3361 + $0x8] sm:$0xff]
  %v3364 = vld [vmem:[%s3361 + $0x10] sm:$0xff]
  %v3365 = vld [vmem:[%s3361 + $0x18] sm:$0xff]
  %v3366 = vld [vmem:[%s7 + $0xb] sm:$0x1]
  %v3367 = vlaneseq
  %v3368 = vshrl.u32 %v3367, 7
  %v3369 = vsub.s32 0, %v3368
  %v3370 = vrot.slane %v3366, %v3369
  %v3372 = vsel %vm1727, %v3359, 0
  %v3375 = vsel %vm1727, %v3360, 0
  %v3378 = vsel %vm1727, %v3362, 0
  %v3381 = vsel %vm1727, %v3363, 0
  %v3384 = vsel %vm1727, %v3364, 0
  %v3387 = vsel %vm1727, %v3365, 0
  %3389 = vmatprep.subr.mxu0 0.0
  %3390 = vmatpush1.xpose.msra.mxu0 0.0
  %3391 = vmatprep.subr.mxu0 0.0
  %3392 = vmatpush1.xpose.msra.mxu0 0.0
  %3393 = vmatprep.subr.mxu0 0.0
  %3394 = vmatpush1.xpose.msra.mxu0 0.0
  %3395 = vmatprep.subr.mxu0 0.0
  %3396 = vmatpush1.xpose.msra.mxu0 0.0
  %3397 = vmatprep.subr.mxu0 0.0
  %3398 = vmatpush1.xpose.msra.mxu0 0.0
  %3399 = vmatprep.subr.mxu0 0.0
  %3400 = vmatpush1.xpose.msra.mxu0 0.0
  %3401 = vmatprep.subr.mxu0 0.0
  %3402 = vmatpush1.xpose.msra.mxu0 0.0
  %3403 = vmatprep.subr.mxu0 0.0
  %3404 = vmatpush1.xpose.msra.mxu0 0.0
  %3405 = vmatprep.subr.mxu0 0.0
  %3406 = vmatpush1.xpose.msra.mxu0 0.0
  %3407 = vmatprep.subr.mxu0 0.0
  %3408 = vmatpush1.xpose.msra.mxu0 0.0
  %3409 = vmatprep.subr.mxu0 0.0
  %3410 = vmatpush1.xpose.msra.mxu0 0.0
  %3411 = vmatprep.subr.mxu0 0.0
  %3412 = vmatpush1.xpose.msra.mxu0 0.0
  %3413 = vmatprep.subr.mxu0 0.0
  %3414 = vmatpush1.xpose.msra.mxu0 %v3387
  %3415 = vmatprep.subr.mxu0 0.0
  %3416 = vmatpush1.xpose.msra.mxu0 %v3384
  %3417 = vmatprep.subr.mxu0 0.0
  %3418 = vmatpush1.xpose.msra.mxu0 %v3381
  %3419 = vmatprep.subr.mxu0 0.0
  %3420 = vmatpush1.xpose.msra.mxu0 %v3378
  %3421 = vmatprep.subr.mxu0 0.0
  %3422 = vmatpush2.xpose.msra.mxu0 0.0
  %3423 = vmatprep.subr.mxu0 0.0
  %3424 = vmatpush2.xpose.msra.mxu0 0.0
  %3425 = vmatprep.subr.mxu0 0.0
  %3426 = vmatpush2.xpose.msra.mxu0 0.0
  %3427 = vmatprep.subr.mxu0 0.0
  %3428 = vmatpush2.xpose.msra.mxu0 0.0
  %3429 = vmatprep.subr.mxu0 0.0
  %3430 = vmatpush2.xpose.msra.mxu0 0.0
  %3431 = vmatprep.subr.mxu0 0.0
  %3432 = vmatpush2.xpose.msra.mxu0 0.0
  %3433 = vmatprep.subr.mxu0 0.0
  %3434 = vmatpush2.xpose.msra.mxu0 0.0
  %3435 = vmatprep.subr.mxu0 0.0
  %3436 = vmatpush2.xpose.msra.mxu0 0.0
  %3437 = vmatprep.subr.mxu0 0.0
  %3438 = vmatpush2.xpose.msra.mxu0 0.0
  %3439 = vmatprep.subr.mxu0 0.0
  %3440 = vmatpush2.xpose.msra.mxu0 0.0
  %3441 = vmatprep.subr.mxu0 0.0
  %3442 = vmatpush2.xpose.msra.mxu0 0.0
  %3443 = vmatprep.subr.mxu0 0.0
  %3444 = vmatpush2.xpose.msra.mxu0 0.0
  %3445 = vmatprep.subr.mxu0 0.0
  %3446 = vmatpush2.xpose.msra.mxu0 0.0
  %3447 = vmatprep.subr.mxu0 0.0
  %3448 = vmatpush2.xpose.msra.mxu0 0.0
  %3449 = vmatprep.subr.mxu0 0.0
  %3450 = vmatpush2.xpose.msra.mxu0 0.0
  %3451 = vmatprep.subr.mxu0 0.0
  %3452 = vmatpush2.xpose.msra.mxu0 0.0
  %3453 = vmatprep.mubr.f32.mxu0 0.0
  %3454 = vmatmul.mubr.f32.gmra.mxu0 %v3372
  %v3455 = vpop.f32.mrf.mxu0
  %v3456 = vadd.f32 %v3370, %v3455
  %v3457 = vpop.f32.mrf.mxu0
  %3458 = vmatprep.mubr.f32.mxu0 0.0
  %3459 = vmatmul.mubr.f32.gmra.mxu0 %v3375
  %v3460 = vpop.f32.mrf.mxu0
  %v3461 = vadd.f32 %v3370, %v3460
  %v3462 = vpop.f32.mrf.mxu0
  %3463 = vdwg.mxu0
  %v3464 = vadd.f32 %v3456, %v3250
  %v3465 = vadd.f32 %v3461, %v3251
  %v3466 = vld [vmem:[%s7 + $0xc] sm:$0x1]
  %v3467 = vld [vmem:[%s7 + $0xd] sm:$0x1]
  %v3468 = vsel %vm165, %v3464, 0.0
  %3469 = vadd.xlane.f32.xlu0 %v3468
  %v3470 = vpop.xlane.xlu0 %3469
  %v3471 = vsel %vm165, %v3465, 0.0
  %3472 = vadd.xlane.f32.xlu0 %v3471
  %v3473 = vpop.xlane.xlu0 %3472
  %v3474 = vmul.f32 %v3470, %v172
  %v3475 = vmul.f32 %v3473, %v172
  %v3476 = vsub.f32 %v3464, %v3474
  %v3477 = vsub.f32 %v3465, %v3475
  %v3478 = vmul.f32 %v3476, %v3476
  %v3479 = vmul.f32 %v3477, %v3477
  %v3480 = vsel %vm165, %v3478, 0.0
  %3481 = vadd.xlane.f32.xlu0 %v3480
  %v3482 = vpop.xlane.xlu0 %3481
  %v3483 = vsel %vm165, %v3479, 0.0
  %3484 = vadd.xlane.f32.xlu0 %v3483
  %v3485 = vpop.xlane.xlu0 %3484
  %v3486 = vmul.f32 %v3482, %v172
  %v3487 = vmul.f32 %v3485, %v172
  %v3488 = vadd.f32 %v3486, 1e-12
  %v3489 = vadd.f32 %v3487, 1e-12
  %v3490 = vrsqrt.pop %v3488
  %v3491 = vrsqrt.pop %v3489
  %v3492 = vmul.f32 %v3476, %v3490
  %v3493 = vmul.f32 %v3477, %v3491
  %v3494 = vlaneseq
  %v3495 = vshrl.u32 %v3494, 7
  %v3496 = vsub.s32 0, %v3495
  %v3497 = vrot.slane %v3466, %v3496
  %v3498 = vmul.f32 %v3492, %v3497
  %v3499 = vmul.f32 %v3493, %v3497
  %v3500 = vlaneseq
  %v3501 = vshrl.u32 %v3500, 7
  %v3502 = vsub.s32 0, %v3501
  %v3503 = vrot.slane %v3467, %v3502
  %v3504 = vadd.f32 %v3498, %v3503
  %v3505 = vadd.f32 %v3499, %v3503
  %v3507 = vrot.slane %v3505, 7
  %vm3509 = vcmask 1040384
  %v3510 = vsel %vm3509, %v3504, %v3507
  %s3511 = scalar_lea.vmem %s5, 128
  %v3512 = vld [vmem:[%s3511] sm:$0xff]
  %v3513 = vld [vmem:[%s3511 + $0x8] sm:$0xff]
  %v3514 = vld [vmem:[%s3511 + $0x10] sm:$0xff]
  %v3515 = vld [vmem:[%s3511 + $0x18] sm:$0xff]
  %v3516 = vld [vmem:[%s6 + $0x2] sm:$0x1]
  %v3517 = vlaneseq
  %v3518 = vshrl.u32 %v3517, 7
  %v3519 = vsub.s32 0, %v3518
  %v3520 = vrot.slane %v3516, %v3519
  %v3522 = vsel %vm165, %v3510, 0
  %3524 = vmatprep.subr.mxu0 0.0
  %3525 = vmatpush1.msra.mxu0 0.0
  %3526 = vmatprep.subr.mxu0 0.0
  %3527 = vmatpush1.msra.mxu0 0.0
  %3528 = vmatprep.subr.mxu0 0.0
  %3529 = vmatpush1.msra.mxu0 0.0
  %3530 = vmatprep.subr.mxu0 0.0
  %3531 = vmatpush1.msra.mxu0 0.0
  %3532 = vmatprep.subr.mxu0 0.0
  %3533 = vmatpush1.msra.mxu0 0.0
  %3534 = vmatprep.subr.mxu0 0.0
  %3535 = vmatpush1.msra.mxu0 0.0
  %3536 = vmatprep.subr.mxu0 0.0
  %3537 = vmatpush1.msra.mxu0 0.0
  %3538 = vmatprep.subr.mxu0 0.0
  %3539 = vmatpush1.msra.mxu0 0.0
  %3540 = vmatprep.subr.mxu0 0.0
  %3541 = vmatpush1.msra.mxu0 0.0
  %3542 = vmatprep.subr.mxu0 0.0
  %3543 = vmatpush1.msra.mxu0 0.0
  %3544 = vmatprep.subr.mxu0 0.0
  %3545 = vmatpush1.msra.mxu0 0.0
  %3546 = vmatprep.subr.mxu0 0.0
  %3547 = vmatpush1.msra.mxu0 0.0
  %3548 = vmatprep.subr.mxu0 0.0
  %3549 = vmatpush1.msra.mxu0 %v3515
  %3550 = vmatprep.subr.mxu0 0.0
  %3551 = vmatpush1.msra.mxu0 %v3514
  %3552 = vmatprep.subr.mxu0 0.0
  %3553 = vmatpush1.msra.mxu0 %v3513
  %3554 = vmatprep.subr.mxu0 0.0
  %3555 = vmatpush1.msra.mxu0 %v3512
  %3556 = vmatprep.subr.mxu0 0.0
  %3557 = vmatpush2.msra.mxu0 0.0
  %3558 = vmatprep.subr.mxu0 0.0
  %3559 = vmatpush2.msra.mxu0 0.0
  %3560 = vmatprep.subr.mxu0 0.0
  %3561 = vmatpush2.msra.mxu0 0.0
  %3562 = vmatprep.subr.mxu0 0.0
  %3563 = vmatpush2.msra.mxu0 0.0
  %3564 = vmatprep.subr.mxu0 0.0
  %3565 = vmatpush2.msra.mxu0 0.0
  %3566 = vmatprep.subr.mxu0 0.0
  %3567 = vmatpush2.msra.mxu0 0.0
  %3568 = vmatprep.subr.mxu0 0.0
  %3569 = vmatpush2.msra.mxu0 0.0
  %3570 = vmatprep.subr.mxu0 0.0
  %3571 = vmatpush2.msra.mxu0 0.0
  %3572 = vmatprep.subr.mxu0 0.0
  %3573 = vmatpush2.msra.mxu0 0.0
  %3574 = vmatprep.subr.mxu0 0.0
  %3575 = vmatpush2.msra.mxu0 0.0
  %3576 = vmatprep.subr.mxu0 0.0
  %3577 = vmatpush2.msra.mxu0 0.0
  %3578 = vmatprep.subr.mxu0 0.0
  %3579 = vmatpush2.msra.mxu0 0.0
  %3580 = vmatprep.subr.mxu0 0.0
  %3581 = vmatpush2.msra.mxu0 0.0
  %3582 = vmatprep.subr.mxu0 0.0
  %3583 = vmatpush2.msra.mxu0 0.0
  %3584 = vmatprep.subr.mxu0 0.0
  %3585 = vmatpush2.msra.mxu0 0.0
  %3586 = vmatprep.subr.mxu0 0.0
  %3587 = vmatpush2.msra.mxu0 0.0
  %3588 = vmatprep.mubr.f32.mxu0 0.0
  %3589 = vmatmul.mubr.f32.gmra.mxu0 %v3522
  %v3590 = vpop.f32.mrf.mxu0
  %v3591 = vadd.f32 %v3520, %v3590
  %v3592 = vpop.f32.mrf.mxu0
  %3593 = vdwg.mxu0
  %v3594 = vmax.f32 %v3591, 0.0
  %v3595 = vld [vmem:[%s6 + $0x3] sm:$0x1]
  %v3596 = vlaneseq
  %v3597 = vshrl.u32 %v3596, 7
  %v3598 = vsub.s32 0, %v3597
  %v3599 = vrot.slane %v3595, %v3598
  %v3600 = vmul.f32 %v3594, %v3599
  %vm3601 = vcmask 517120
  %v3602 = vsel %vm3601, %v3600, 0.0
  %3603 = vadd.xlane.f32.xlu0 %v3602
  %v3604 = vpop.xlane.xlu0 %3603
  %s3605 = sld [smem:[#allocation3]]
  %v3606 = vstv %s3605
  %v3607 = vadd.f32 %v3604, %v3606
  %v3608 = vxor.u32 %v3607, 2147483648
  %v3609 = vmul.f32 %v3608, 1.442695
  %v3610 = vpow.pop %v3609
  %v3611 = vadd.f32 %v3610, 1.0
  %v3612 = vrcp.pop %v3611
  %v3613 = vmul.f32 1.0, %v3612
  %vm3614 = vcmask 1024
  %3615 = vst.msk [vmem:[%s9] sm:$0x3] %vm3614, %v3613
  // Predicated region
  $region38: #{finetuned_forward.1} parent=0 // pred_check
    _
  $region39: #{finetuned_forward.1} parent=0 // pred_check_branch
    %3617 = sbr.rel (0) target = $region41
  $region40: #{finetuned_forward.1} parent=0 // pred_region
    _
  $region41: #{finetuned_forward.1} parent=0 // pred_fallthru
    _
  // Predicated region
  $region42: #{finetuned_forward.1} parent=0 // pred_check
    _
  $region43: #{finetuned_forward.1} parent=0 // pred_check_branch
    %3619 = sbr.rel (0) target = $region45
  $region44: #{finetuned_forward.1} parent=0 // pred_region
    _
  $region45: #{finetuned_forward.1} parent=0 // pred_fallthru
    _

</llo_original>
